<compile_context>
chip_gen: v6e
topology: v6e:2x2x1
jax: 0.10.0
libtpu: 0.0.40
codegen_flags: <defaults>
</compile_context>

<pallas_src>
import numpy as np
import jax
import jax.numpy as jnp
from jax.experimental import pallas as pl
from jax.experimental.pallas import tpu as pltpu


# ----------------------------------------------------------------------------
# Pallas kernel
# ----------------------------------------------------------------------------
def _dot(a, b):
    return jnp.dot(a, b, preferred_element_type=jnp.float32)


def _lstm_from_gates(gates, c):
    # PyTorch LSTMCell gate order: i, f, g, o.  Apply sigmoid/tanh once over the
    # full (B, 4H) slab and slice afterwards (2 full-width EUP passes).
    H = gates.shape[1] // 4
    sig = jax.nn.sigmoid(gates)
    tah = jnp.tanh(gates)
    i_g = sig[:, 0 * H:1 * H]
    f_g = sig[:, 1 * H:2 * H]
    g_g = tah[:, 2 * H:3 * H]
    o_g = sig[:, 3 * H:4 * H]
    c_new = f_g * c + i_g * g_g
    h_new = o_g * jnp.tanh(c_new)
    return h_new, c_new


def darnn_kernel(feat_ref, target_ref,
                 e_a1_xblk_ref, e_a1_whc_ref, e_a1_b_ref,
                 e_a2_w_ref, e_a2_b_ref,
                 e_w_ref, e_b_ref,
                 d_a1_whc_ref, d_a1_hblk_ref, d_a1_b_ref,
                 d_a2_w_ref, d_a2_b_ref,
                 expand_ref,
                 w_sg_ref, w_tg_ref, b_g_ref, d_whh_ref,
                 d_fc_wh_ref, w_so_ref, d_fc_b_ref,
                 out_ref):
    B = feat_ref.shape[0]
    Tp1 = target_ref.shape[1]
    F = feat_ref.shape[1] // Tp1
    He = e_a1_whc_ref.shape[0] // 2
    Hd = d_whh_ref.shape[0]
    T = Tp1 - 1

    # ---- hoist every operand load out of the unrolled time loops ----
    Xp = feat_ref[...]                                   # (B, (T+1)*F) lane-packed
    tgt = target_ref[...]                                # (B, T+1)
    e_a1_xblk = e_a1_xblk_ref[...]                       # ((T+1)F, (T+1)(T+1))
    e_a1_whc, e_a1_b = e_a1_whc_ref[...], e_a1_b_ref[...]
    e_a2_w, e_a2_b = e_a2_w_ref[...], e_a2_b_ref[...]
    e_w, e_b = e_w_ref[...], e_b_ref[...]
    d_a1_whc, d_a1_hblk, d_a1_b = d_a1_whc_ref[...], d_a1_hblk_ref[...], d_a1_b_ref[...]
    d_a2_w, d_a2_b = d_a2_w_ref[...], d_a2_b_ref[...]
    expand_m = expand_ref[...]
    w_sg, w_tg, b_g = w_sg_ref[...], w_tg_ref[...], b_g_ref[...]
    d_whh = d_whh_ref[...]
    d_fc_wh, w_so, d_fc_b = d_fc_wh_ref[...], w_so_ref[...], d_fc_b_ref[...]

    # ------------------ input-attention encoder ------------------
    # All T+1 time-invariant x-projections in ONE block-diagonal MXU dot.
    xw_all = _dot(Xp, e_a1_xblk)                         # (B, (T+1)*(T+1))

    h = jnp.zeros((B, He), jnp.float32)
    c = jnp.zeros((B, He), jnp.float32)
    hs = []
    for i in range(Tp1):
        xi = Xp[:, i * F:(i + 1) * F]                    # static lane slice
        # Fused [h,c] concat + single dot (v5e/v6e-friendly; on v7x splitting
        # into h@Wh + c@Wc may be preferable — MRB accumulates in place).
        hc = jnp.concatenate([h, c], axis=1)             # (B, 2He)
        a1 = jnp.tanh(xw_all[:, i * Tp1:(i + 1) * Tp1]
                      + _dot(hc, e_a1_whc) + e_a1_b)     # (B, T+1)
        a2 = _dot(a1, e_a2_w) + e_a2_b                   # (B, F)
        xw = a2 * xi
        gates = _dot(jnp.concatenate([xw, h], axis=1), e_w) + e_b   # (B, 4He)
        h, c = _lstm_from_gates(gates, c)
        hs.append(h)

    # ------------------ temporal-attention decoder ------------------
    hs_cat = jnp.concatenate(hs, axis=1)                 # (B, (T+1)*He)
    # All per-step hs-projections in ONE block-diagonal MXU dot.
    hs_proj = _dot(hs_cat, d_a1_hblk)                    # (B, (T+1)*He)

    hd = jnp.zeros((B, Hd), jnp.float32)
    cd = jnp.zeros((B, Hd), jnp.float32)
    spread = jnp.zeros_like(hs_cat)
    for i in range(T):
        hc = jnp.concatenate([hd, cd], axis=1)           # (B, 2Hd)
        a1 = jnp.tanh(_dot(hc, d_a1_whc)
                      + hs_proj[:, i * He:(i + 1) * He] + d_a1_b)   # (B, E)
        logits = _dot(a1, d_a2_w) + d_a2_b               # (B, T+1)
        m = jnp.max(logits, axis=1, keepdims=True)
        ex = jnp.exp(logits - m)
        inv = pl.reciprocal(jnp.sum(ex, axis=1, keepdims=True), approx=True)
        attn = ex * inv                                  # (B, T+1)
        # Spread attention across the lane-packed encoder states; the temporal
        # reduction + comb_fc + LSTM input weight are pre-folded into w_sg.
        spread = _dot(attn, expand_m) * hs_cat           # (B, (T+1)*He)
        gates = (_dot(spread, w_sg) + tgt[:, i:i + 1] * w_tg
                 + _dot(hd, d_whh) + b_g)                # (B, 4Hd)
        hd, cd = _lstm_from_gates(gates, cd)

    # feat_i only materialized here, through the pre-folded W_so = reduce @ fc_wf.
    out = _dot(hd, d_fc_wh) + _dot(spread, w_so) + d_fc_b  # (B, n_tgt)
    out_ref[...] = out.astype(out_ref.dtype)


# ----------------------------------------------------------------------------
# Wrapper: weight re-layout / algebraic folds (glue) + pallas_call
# ----------------------------------------------------------------------------
def darnn_pallas(params, feat, target):
    B, Tp1, F = feat.shape
    He = params["enc_lstm_whh"].shape[1]
    Hd = params["dec_lstm_whh"].shape[1]
    n_tgt = params["dec_fc_w"].shape[0]
    # The original module's comb_fc wiring only works for n_target == 1.
    assert n_tgt == 1, "DARNN comb_fc wiring requires n_target == 1"

    # Pad batch to a multiple of 8 (f32 sublane count); rows are independent.
    B_pad = ((B + 7) // 8) * 8
    if B_pad != B:
        feat = jnp.pad(feat, ((0, B_pad - B), (0, 0), (0, 0)))
        target = jnp.pad(target, ((0, B_pad - B), (0, 0)))

    # Lane-pack feat: (B_pad, T+1, F) -> (B_pad, (T+1)*F); per-step slices in
    # the kernel become free static lane selects (no sublane gather/relayout).
    feat_packed = feat.reshape(B_pad, Tp1 * F)

    eye_t = jnp.eye(Tp1, dtype=jnp.float32)

    # Encoder attn1 input is cat([x, h, c]): split x-part, fuse [h,c]-part.
    e_a1_w = params["enc_attn1_w"]                 # (T+1, F + 2He)
    e_a1_wx = e_a1_w[:, :F].T                      # (F, T+1)
    e_a1_whc = e_a1_w[:, F:].T                     # (2He, T+1)
    e_a1_b = params["enc_attn1_b"][None, :]
    # Block-diagonal hoist: all T+1 x-projections in one dot (K=(T+1)F, N=(T+1)^2).
    e_a1_xblk = jnp.kron(eye_t, e_a1_wx)           # ((T+1)F, (T+1)(T+1))
    e_a2_w = params["enc_attn2_w"].T               # (T+1, F)
    e_a2_b = params["enc_attn2_b"][None, :]
    # Encoder LSTM: fuse [x, h] weights into one (F+He, 4He) matrix.
    e_w = jnp.concatenate([params["enc_lstm_wih"].T, params["enc_lstm_whh"].T], axis=0)
    e_b = (params["enc_lstm_bih"] + params["enc_lstm_bhh"])[None, :]

    # Decoder attn1 input is cat([h, c, feat_t]): fuse [h,c]-part, split feat-part.
    d_a1_w = params["dec_attn1_w"]                 # (E, 2Hd + E), E == He
    d_a1_whc = d_a1_w[:, :2 * Hd].T                # (2Hd, E)
    d_a1_wf = d_a1_w[:, 2 * Hd:].T                 # (E, E)
    d_a1_b = params["dec_attn1_b"][None, :]
    d_a1_hblk = jnp.kron(eye_t, d_a1_wf)           # ((T+1)He, (T+1)He)
    d_a2_w = params["dec_attn2_w"].T               # (E, T+1)
    d_a2_b = params["dec_attn2_b"][None, :]

    # comb_fc input is cat([target_scalar, feat_i]); decoder LSTM / final fc.
    d_comb_w = params["dec_comb_w"]                # (1, 1 + E)
    d_comb_wt = d_comb_w[:, :n_tgt].T              # (1, 1)
    d_comb_wf = d_comb_w[:, n_tgt:].T              # (E, 1)
    d_comb_b = params["dec_comb_b"][None, :]       # (1, 1)
    d_wih = params["dec_lstm_wih"].T               # (1, 4Hd)
    d_whh = params["dec_lstm_whh"].T               # (Hd, 4Hd)
    d_b = (params["dec_lstm_bih"] + params["dec_lstm_bhh"])[None, :]
    d_fc_w = params["dec_fc_w"]                    # (1, Hd + E)
    d_fc_wh = d_fc_w[:, :Hd].T                     # (Hd, 1)
    d_fc_wf = d_fc_w[:, Hd:].T                     # (E, 1)
    d_fc_b = params["dec_fc_b"][None, :]           # (1, 1)

    # Constant matrices for the temporal context contraction on lane-packed states:
    #   expand_m[t, t*He+e] = 1  (spread attn weight across each state's lanes)
    #   reduce_m[t*He+e, e] = 1  (sum over time back to He lanes)
    expand_m = jnp.asarray(np.kron(np.eye(Tp1, dtype=np.float32),
                                   np.ones((1, He), np.float32)))    # (T+1, (T+1)He)
    reduce_m = jnp.asarray(np.kron(np.ones((Tp1, 1), np.float32),
                                   np.eye(He, dtype=np.float32)))    # ((T+1)He, He)

    # Algebraic fold of context -> comb_fc -> LSTM input (and -> final fc):
    # removes two serial MXU dots from every decoder step's critical path.
    w_sg = reduce_m @ (d_comb_wf @ d_wih)          # ((T+1)He, 4Hd)
    w_tg = d_comb_wt @ d_wih                       # (1, 4Hd)
    b_g = d_comb_b @ d_wih + d_b                   # (1, 4Hd)
    w_so = reduce_m @ d_fc_wf                      # ((T+1)He, 1)

    args = (feat_packed, target,
            e_a1_xblk, e_a1_whc, e_a1_b, e_a2_w, e_a2_b, e_w, e_b,
            d_a1_whc, d_a1_hblk, d_a1_b, d_a2_w, d_a2_b,
            expand_m, w_sg, w_tg, b_g, d_whh,
            d_fc_wh, w_so, d_fc_b)

    # No grid: everything is VMEM-resident after one one-shot DMA, nothing to
    # pipeline (saves the per-grid-step bookkeeping).
    out = pl.pallas_call(
        darnn_kernel,
        out_shape=jax.ShapeDtypeStruct((B_pad, n_tgt), jnp.float32),
        in_specs=[pl.BlockSpec(memory_space=pltpu.MemorySpace.VMEM) for _ in args],
        out_specs=pl.BlockSpec(memory_space=pltpu.MemorySpace.VMEM),
    )(*args)
    return out[:B]


# ----------------------------------------------------------------------------
# Pure-JAX reference (mirrors the PyTorch forward literally, concat & all)
# ----------------------------------------------------------------------------
def darnn_reference(params, feat, target):
    B, Tp1, F = feat.shape
    T = Tp1 - 1
    He = params["enc_lstm_whh"].shape[1]
    Hd = params["dec_lstm_whh"].shape[1]

    def linear(x, w, b):
        return x @ w.T + b

    def lstm_cell(x, h, c, wih, whh, bih, bhh, H):
        gates = x @ wih.T + bih + h @ whh.T + bhh
        i = jax.nn.sigmoid(gates[:, :H])
        f = jax.nn.sigmoid(gates[:, H:2 * H])
        g = jnp.tanh(gates[:, 2 * H:3 * H])
        o = jax.nn.sigmoid(gates[:, 3 * H:4 * H])
        c = f * c + i * g
        h = o * jnp.tanh(c)
        return h, c

    # encoder
    h = jnp.zeros((B, He)); c = jnp.zeros((B, He))
    hs = []
    for i in range(Tp1):
        xi = jnp.concatenate([feat[:, i, :], h, c], axis=1)
        xi = jnp.tanh(linear(xi, params["enc_attn1_w"], params["enc_attn1_b"]))
        xi = linear(xi, params["enc_attn2_w"], params["enc_attn2_b"])
        xi = xi * feat[:, i, :]
        h, c = lstm_cell(xi, h, c, params["enc_lstm_wih"], params["enc_lstm_whh"],
                         params["enc_lstm_bih"], params["enc_lstm_bhh"], He)
        hs.append(h)
    enc = jnp.stack(hs, axis=1)                     # (B, T+1, He)

    # decoder
    h = jnp.zeros((B, Hd)); c = jnp.zeros((B, Hd))
    feat_i = None
    for i in range(T):
        xi = jnp.concatenate([h, c, enc[:, i, :]], axis=1)
        xi = jnp.tanh(linear(xi, params["dec_attn1_w"], params["dec_attn1_b"]))
        xi = jax.nn.softmax(linear(xi, params["dec_attn2_w"], params["dec_attn2_b"]), axis=1)
        feat_i = (xi[:, :, None] * enc).sum(axis=1)
        xi = jnp.concatenate([target[:, i][:, None], feat_i], axis=1)
        xi = linear(xi, params["dec_comb_w"], params["dec_comb_b"])
        h, c = lstm_cell(xi, h, c, params["dec_lstm_wih"], params["dec_lstm_whh"],
                         params["dec_lstm_bih"], params["dec_lstm_bhh"], Hd)
    xt = jnp.concatenate([h, feat_i], axis=1)
    return linear(xt, params["dec_fc_w"], params["dec_fc_b"])


# ----------------------------------------------------------------------------
# Deterministic parameter init (PyTorch-shaped weights)
# ----------------------------------------------------------------------------
def init_params(key, n_feat, n_target, He, Hd, T):
    E = He
    shapes = {
        "enc_attn1_w": (T + 1, 2 * He + n_feat), "enc_attn1_b": (T + 1,),
        "enc_attn2_w": (n_feat, T + 1),          "enc_attn2_b": (n_feat,),
        "enc_lstm_wih": (4 * He, n_feat),        "enc_lstm_whh": (4 * He, He),
        "enc_lstm_bih": (4 * He,),               "enc_lstm_bhh": (4 * He,),
        "dec_attn1_w": (E, 2 * Hd + E),          "dec_attn1_b": (E,),
        "dec_attn2_w": (T + 1, E),               "dec_attn2_b": (T + 1,),
        "dec_comb_w": (n_target, E + n_target),  "dec_comb_b": (n_target,),
        "dec_lstm_wih": (4 * Hd, n_target),      "dec_lstm_whh": (4 * Hd, Hd),
        "dec_lstm_bih": (4 * Hd,),               "dec_lstm_bhh": (4 * Hd,),
        "dec_fc_w": (n_target, Hd + E),          "dec_fc_b": (n_target,),
    }
    params = {}
    names = sorted(shapes)
    keys = jax.random.split(key, len(names))
    for k, name in zip(keys, names):
        shape = shapes[name]
        fan_in = shape[-1] if len(shape) > 1 else shape[0]
        bound = float(1.0 / (fan_in ** 0.5))
        params[name] = jax.random.uniform(k, shape, jnp.float32, -bound, bound)
    return params


if __name__ == "__main__":
    # Original code requires n_target == 1 (comb_fc input width is 1 + n_encoder_hidden).
    n_feat, n_target = 8, 1
    n_encoder_hidden, n_decoder_hidden = 16, 16
    T = 6
    B = 4

    key = jax.random.PRNGKey(0)
    k_feat, k_tgt, k_par = jax.random.split(key, 3)
    feat = jax.random.normal(k_feat, (B, T + 1, n_feat), jnp.float32)
    target = jax.random.normal(k_tgt, (B, T + 1), jnp.float32)
    params = init_params(k_par, n_feat, n_target, n_encoder_hidden, n_decoder_hidden, T)

    out = jax.block_until_ready(darnn_pallas(params, feat, target))
    ref = jax.block_until_ready(darnn_reference(params, feat, target))

    assert out.shape == (B, n_target)
    # Tolerance 1e-3: the softmax denominator uses the EUP approximate
    # reciprocal (~2^-12 relative error in the attention weights).
    np.testing.assert_allclose(np.asarray(out), np.asarray(ref), rtol=1e-3, atol=1e-3)
    print("KERNEL_OK")
</pallas_src>

<mosaic_0001>
module attributes {stable_mosaic.version = 11 : i64} {
  func.func @darnn_kernel(%arg0: memref<8x56xf32, #tpu.memory_space<vmem>>, %arg1: memref<8x7xf32, #tpu.memory_space<vmem>>, %arg2: memref<56x49xf32, #tpu.memory_space<vmem>>, %arg3: memref<32x7xf32, #tpu.memory_space<vmem>>, %arg4: memref<1x7xf32, #tpu.memory_space<vmem>>, %arg5: memref<7x8xf32, #tpu.memory_space<vmem>>, %arg6: memref<1x8xf32, #tpu.memory_space<vmem>>, %arg7: memref<24x64xf32, #tpu.memory_space<vmem>>, %arg8: memref<1x64xf32, #tpu.memory_space<vmem>>, %arg9: memref<32x16xf32, #tpu.memory_space<vmem>>, %arg10: memref<112x112xf32, #tpu.memory_space<vmem>>, %arg11: memref<1x16xf32, #tpu.memory_space<vmem>>, %arg12: memref<16x7xf32, #tpu.memory_space<vmem>>, %arg13: memref<1x7xf32, #tpu.memory_space<vmem>>, %arg14: memref<7x112xf32, #tpu.memory_space<vmem>>, %arg15: memref<112x64xf32, #tpu.memory_space<vmem>>, %arg16: memref<1x64xf32, #tpu.memory_space<vmem>>, %arg17: memref<1x64xf32, #tpu.memory_space<vmem>>, %arg18: memref<16x64xf32, #tpu.memory_space<vmem>>, %arg19: memref<16x1xf32, #tpu.memory_space<vmem>>, %arg20: memref<112x1xf32, #tpu.memory_space<vmem>>, %arg21: memref<1x1xf32, #tpu.memory_space<vmem>>, %arg22: memref<8x1xf32, #tpu.memory_space<vmem>>) attributes {dimension_semantics = [], scalar_prefetch = 0 : i64, scratch_operands = 0 : i64, tpu.core_type = #tpu.core_type<tc>} {
    %c0 = arith.constant 0 : index
    %c0_0 = arith.constant 0 : index
    %0 = vector.load %arg0[%c0, %c0_0] : memref<8x56xf32, #tpu.memory_space<vmem>>, vector<8x56xf32>
    %c0_1 = arith.constant 0 : index
    %c0_2 = arith.constant 0 : index
    %1 = vector.load %arg1[%c0_1, %c0_2] : memref<8x7xf32, #tpu.memory_space<vmem>>, vector<8x7xf32>
    %c0_3 = arith.constant 0 : index
    %c0_4 = arith.constant 0 : index
    %2 = vector.load %arg2[%c0_3, %c0_4] : memref<56x49xf32, #tpu.memory_space<vmem>>, vector<56x49xf32>
    %c0_5 = arith.constant 0 : index
    %c0_6 = arith.constant 0 : index
    %3 = vector.load %arg3[%c0_5, %c0_6] : memref<32x7xf32, #tpu.memory_space<vmem>>, vector<32x7xf32>
    %c0_7 = arith.constant 0 : index
    %c0_8 = arith.constant 0 : index
    %4 = vector.load %arg4[%c0_7, %c0_8] : memref<1x7xf32, #tpu.memory_space<vmem>>, vector<1x7xf32>
    %c0_9 = arith.constant 0 : index
    %c0_10 = arith.constant 0 : index
    %5 = vector.load %arg5[%c0_9, %c0_10] : memref<7x8xf32, #tpu.memory_space<vmem>>, vector<7x8xf32>
    %c0_11 = arith.constant 0 : index
    %c0_12 = arith.constant 0 : index
    %6 = vector.load %arg6[%c0_11, %c0_12] : memref<1x8xf32, #tpu.memory_space<vmem>>, vector<1x8xf32>
    %c0_13 = arith.constant 0 : index
    %c0_14 = arith.constant 0 : index
    %7 = vector.load %arg7[%c0_13, %c0_14] : memref<24x64xf32, #tpu.memory_space<vmem>>, vector<24x64xf32>
    %c0_15 = arith.constant 0 : index
    %c0_16 = arith.constant 0 : index
    %8 = vector.load %arg8[%c0_15, %c0_16] : memref<1x64xf32, #tpu.memory_space<vmem>>, vector<1x64xf32>
    %c0_17 = arith.constant 0 : index
    %c0_18 = arith.constant 0 : index
    %9 = vector.load %arg9[%c0_17, %c0_18] : memref<32x16xf32, #tpu.memory_space<vmem>>, vector<32x16xf32>
    %c0_19 = arith.constant 0 : index
    %c0_20 = arith.constant 0 : index
    %10 = vector.load %arg10[%c0_19, %c0_20] : memref<112x112xf32, #tpu.memory_space<vmem>>, vector<112x112xf32>
    %c0_21 = arith.constant 0 : index
    %c0_22 = arith.constant 0 : index
    %11 = vector.load %arg11[%c0_21, %c0_22] : memref<1x16xf32, #tpu.memory_space<vmem>>, vector<1x16xf32>
    %c0_23 = arith.constant 0 : index
    %c0_24 = arith.constant 0 : index
    %12 = vector.load %arg12[%c0_23, %c0_24] : memref<16x7xf32, #tpu.memory_space<vmem>>, vector<16x7xf32>
    %c0_25 = arith.constant 0 : index
    %c0_26 = arith.constant 0 : index
    %13 = vector.load %arg13[%c0_25, %c0_26] : memref<1x7xf32, #tpu.memory_space<vmem>>, vector<1x7xf32>
    %c0_27 = arith.constant 0 : index
    %c0_28 = arith.constant 0 : index
    %14 = vector.load %arg14[%c0_27, %c0_28] : memref<7x112xf32, #tpu.memory_space<vmem>>, vector<7x112xf32>
    %c0_29 = arith.constant 0 : index
    %c0_30 = arith.constant 0 : index
    %15 = vector.load %arg15[%c0_29, %c0_30] : memref<112x64xf32, #tpu.memory_space<vmem>>, vector<112x64xf32>
    %c0_31 = arith.constant 0 : index
    %c0_32 = arith.constant 0 : index
    %16 = vector.load %arg16[%c0_31, %c0_32] : memref<1x64xf32, #tpu.memory_space<vmem>>, vector<1x64xf32>
    %c0_33 = arith.constant 0 : index
    %c0_34 = arith.constant 0 : index
    %17 = vector.load %arg17[%c0_33, %c0_34] : memref<1x64xf32, #tpu.memory_space<vmem>>, vector<1x64xf32>
    %c0_35 = arith.constant 0 : index
    %c0_36 = arith.constant 0 : index
    %18 = vector.load %arg18[%c0_35, %c0_36] : memref<16x64xf32, #tpu.memory_space<vmem>>, vector<16x64xf32>
    %c0_37 = arith.constant 0 : index
    %c0_38 = arith.constant 0 : index
    %19 = vector.load %arg19[%c0_37, %c0_38] : memref<16x1xf32, #tpu.memory_space<vmem>>, vector<16x1xf32>
    %c0_39 = arith.constant 0 : index
    %c0_40 = arith.constant 0 : index
    %20 = vector.load %arg20[%c0_39, %c0_40] : memref<112x1xf32, #tpu.memory_space<vmem>>, vector<112x1xf32>
    %c0_41 = arith.constant 0 : index
    %c0_42 = arith.constant 0 : index
    %21 = vector.load %arg21[%c0_41, %c0_42] : memref<1x1xf32, #tpu.memory_space<vmem>>, vector<1x1xf32>
    %cst = arith.constant dense<0.000000e+00> : vector<8x49xf32>
    %22 = tpu.matmul %0, %2, %cst {dimension_numbers = #tpu.dot_dimension_numbers<[1], [0], [0], [1], [0, 0, 1, 1], [], []>} : vector<8x56xf32>, vector<56x49xf32>, vector<8x49xf32> -> vector<8x49xf32>
    %cst_43 = arith.constant 0.000000e+00 : f32
    %23 = vector.broadcast %cst_43 : f32 to vector<8x16xf32>
    %cst_44 = arith.constant 0.000000e+00 : f32
    %24 = vector.broadcast %cst_44 : f32 to vector<8x16xf32>
    %25 = vector.extract_strided_slice %0 {offsets = [0, 0], sizes = [8, 8], strides = [1, 1]} : vector<8x56xf32> to vector<8x8xf32>
    %26 = tpu.concatenate %23, %24 in 1 : vector<8x16xf32>, vector<8x16xf32> -> vector<8x32xf32>
    %27 = vector.extract_strided_slice %22 {offsets = [0, 0], sizes = [8, 7], strides = [1, 1]} : vector<8x49xf32> to vector<8x7xf32>
    %cst_45 = arith.constant dense<0.000000e+00> : vector<8x7xf32>
    %28 = tpu.matmul %26, %3, %cst_45 {dimension_numbers = #tpu.dot_dimension_numbers<[1], [0], [0], [1], [0, 0, 1, 1], [], []>} : vector<8x32xf32>, vector<32x7xf32>, vector<8x7xf32> -> vector<8x7xf32>
    %29 = arith.addf %27, %28 : vector<8x7xf32>
    %30 = vector.broadcast %4 : vector<1x7xf32> to vector<8x7xf32>
    %31 = arith.addf %29, %30 : vector<8x7xf32>
    %32 = math.tanh %31 : vector<8x7xf32>
    %cst_46 = arith.constant dense<0.000000e+00> : vector<8x8xf32>
    %33 = tpu.matmul %32, %5, %cst_46 {dimension_numbers = #tpu.dot_dimension_numbers<[1], [0], [0], [1], [0, 0, 1, 1], [], []>} : vector<8x7xf32>, vector<7x8xf32>, vector<8x8xf32> -> vector<8x8xf32>
    %34 = vector.broadcast %6 : vector<1x8xf32> to vector<8x8xf32>
    %35 = arith.addf %33, %34 : vector<8x8xf32>
    %36 = arith.mulf %35, %25 : vector<8x8xf32>
    %37 = tpu.concatenate %36, %23 in 1 : vector<8x8xf32>, vector<8x16xf32> -> vector<8x24xf32>
    %cst_47 = arith.constant dense<0.000000e+00> : vector<8x64xf32>
    %38 = tpu.matmul %37, %7, %cst_47 {dimension_numbers = #tpu.dot_dimension_numbers<[1], [0], [0], [1], [0, 0, 1, 1], [], []>} : vector<8x24xf32>, vector<24x64xf32>, vector<8x64xf32> -> vector<8x64xf32>
    %39 = vector.broadcast %8 : vector<1x64xf32> to vector<8x64xf32>
    %40 = arith.addf %38, %39 : vector<8x64xf32>
    %41 = arith.negf %40 : vector<8x64xf32>
    %42 = math.exp %41 : vector<8x64xf32>
    %cst_48 = arith.constant 1.000000e+00 : f32
    %43 = vector.broadcast %cst_48 : f32 to vector<8x64xf32>
    %44 = arith.addf %43, %42 : vector<8x64xf32>
    %45 = arith.divf %43, %44 : vector<8x64xf32>
    %46 = math.tanh %40 : vector<8x64xf32>
    %47 = vector.extract_strided_slice %45 {offsets = [0, 0], sizes = [8, 16], strides = [1, 1]} : vector<8x64xf32> to vector<8x16xf32>
    %48 = vector.extract_strided_slice %45 {offsets = [0, 16], sizes = [8, 16], strides = [1, 1]} : vector<8x64xf32> to vector<8x16xf32>
    %49 = vector.extract_strided_slice %46 {offsets = [0, 32], sizes = [8, 16], strides = [1, 1]} : vector<8x64xf32> to vector<8x16xf32>
    %50 = vector.extract_strided_slice %45 {offsets = [0, 48], sizes = [8, 16], strides = [1, 1]} : vector<8x64xf32> to vector<8x16xf32>
    %51 = arith.mulf %48, %24 : vector<8x16xf32>
    %52 = arith.mulf %47, %49 : vector<8x16xf32>
    %53 = arith.addf %51, %52 : vector<8x16xf32>
    %54 = math.tanh %53 : vector<8x16xf32>
    %55 = arith.mulf %50, %54 : vector<8x16xf32>
    %56 = vector.extract_strided_slice %0 {offsets = [0, 8], sizes = [8, 8], strides = [1, 1]} : vector<8x56xf32> to vector<8x8xf32>
    %57 = tpu.concatenate %55, %53 in 1 : vector<8x16xf32>, vector<8x16xf32> -> vector<8x32xf32>
    %58 = vector.extract_strided_slice %22 {offsets = [0, 7], sizes = [8, 7], strides = [1, 1]} : vector<8x49xf32> to vector<8x7xf32>
    %cst_49 = arith.constant dense<0.000000e+00> : vector<8x7xf32>
    %59 = tpu.matmul %57, %3, %cst_49 {dimension_numbers = #tpu.dot_dimension_numbers<[1], [0], [0], [1], [0, 0, 1, 1], [], []>} : vector<8x32xf32>, vector<32x7xf32>, vector<8x7xf32> -> vector<8x7xf32>
    %60 = arith.addf %58, %59 : vector<8x7xf32>
    %61 = vector.broadcast %4 : vector<1x7xf32> to vector<8x7xf32>
    %62 = arith.addf %60, %61 : vector<8x7xf32>
    %63 = math.tanh %62 : vector<8x7xf32>
    %cst_50 = arith.constant dense<0.000000e+00> : vector<8x8xf32>
    %64 = tpu.matmul %63, %5, %cst_50 {dimension_numbers = #tpu.dot_dimension_numbers<[1], [0], [0], [1], [0, 0, 1, 1], [], []>} : vector<8x7xf32>, vector<7x8xf32>, vector<8x8xf32> -> vector<8x8xf32>
    %65 = vector.broadcast %6 : vector<1x8xf32> to vector<8x8xf32>
    %66 = arith.addf %64, %65 : vector<8x8xf32>
    %67 = arith.mulf %66, %56 : vector<8x8xf32>
    %68 = tpu.concatenate %67, %55 in 1 : vector<8x8xf32>, vector<8x16xf32> -> vector<8x24xf32>
    %cst_51 = arith.constant dense<0.000000e+00> : vector<8x64xf32>
    %69 = tpu.matmul %68, %7, %cst_51 {dimension_numbers = #tpu.dot_dimension_numbers<[1], [0], [0], [1], [0, 0, 1, 1], [], []>} : vector<8x24xf32>, vector<24x64xf32>, vector<8x64xf32> -> vector<8x64xf32>
    %70 = vector.broadcast %8 : vector<1x64xf32> to vector<8x64xf32>
    %71 = arith.addf %69, %70 : vector<8x64xf32>
    %72 = arith.negf %71 : vector<8x64xf32>
    %73 = math.exp %72 : vector<8x64xf32>
    %cst_52 = arith.constant 1.000000e+00 : f32
    %74 = vector.broadcast %cst_52 : f32 to vector<8x64xf32>
    %75 = arith.addf %74, %73 : vector<8x64xf32>
    %76 = arith.divf %74, %75 : vector<8x64xf32>
    %77 = math.tanh %71 : vector<8x64xf32>
    %78 = vector.extract_strided_slice %76 {offsets = [0, 0], sizes = [8, 16], strides = [1, 1]} : vector<8x64xf32> to vector<8x16xf32>
    %79 = vector.extract_strided_slice %76 {offsets = [0, 16], sizes = [8, 16], strides = [1, 1]} : vector<8x64xf32> to vector<8x16xf32>
    %80 = vector.extract_strided_slice %77 {offsets = [0, 32], sizes = [8, 16], strides = [1, 1]} : vector<8x64xf32> to vector<8x16xf32>
    %81 = vector.extract_strided_slice %76 {offsets = [0, 48], sizes = [8, 16], strides = [1, 1]} : vector<8x64xf32> to vector<8x16xf32>
    %82 = arith.mulf %79, %53 : vector<8x16xf32>
    %83 = arith.mulf %78, %80 : vector<8x16xf32>
    %84 = arith.addf %82, %83 : vector<8x16xf32>
    %85 = math.tanh %84 : vector<8x16xf32>
    %86 = arith.mulf %81, %85 : vector<8x16xf32>
    %87 = vector.extract_strided_slice %0 {offsets = [0, 16], sizes = [8, 8], strides = [1, 1]} : vector<8x56xf32> to vector<8x8xf32>
    %88 = tpu.concatenate %86, %84 in 1 : vector<8x16xf32>, vector<8x16xf32> -> vector<8x32xf32>
    %89 = vector.extract_strided_slice %22 {offsets = [0, 14], sizes = [8, 7], strides = [1, 1]} : vector<8x49xf32> to vector<8x7xf32>
    %cst_53 = arith.constant dense<0.000000e+00> : vector<8x7xf32>
    %90 = tpu.matmul %88, %3, %cst_53 {dimension_numbers = #tpu.dot_dimension_numbers<[1], [0], [0], [1], [0, 0, 1, 1], [], []>} : vector<8x32xf32>, vector<32x7xf32>, vector<8x7xf32> -> vector<8x7xf32>
    %91 = arith.addf %89, %90 : vector<8x7xf32>
    %92 = vector.broadcast %4 : vector<1x7xf32> to vector<8x7xf32>
    %93 = arith.addf %91, %92 : vector<8x7xf32>
    %94 = math.tanh %93 : vector<8x7xf32>
    %cst_54 = arith.constant dense<0.000000e+00> : vector<8x8xf32>
    %95 = tpu.matmul %94, %5, %cst_54 {dimension_numbers = #tpu.dot_dimension_numbers<[1], [0], [0], [1], [0, 0, 1, 1], [], []>} : vector<8x7xf32>, vector<7x8xf32>, vector<8x8xf32> -> vector<8x8xf32>
    %96 = vector.broadcast %6 : vector<1x8xf32> to vector<8x8xf32>
    %97 = arith.addf %95, %96 : vector<8x8xf32>
    %98 = arith.mulf %97, %87 : vector<8x8xf32>
    %99 = tpu.concatenate %98, %86 in 1 : vector<8x8xf32>, vector<8x16xf32> -> vector<8x24xf32>
    %cst_55 = arith.constant dense<0.000000e+00> : vector<8x64xf32>
    %100 = tpu.matmul %99, %7, %cst_55 {dimension_numbers = #tpu.dot_dimension_numbers<[1], [0], [0], [1], [0, 0, 1, 1], [], []>} : vector<8x24xf32>, vector<24x64xf32>, vector<8x64xf32> -> vector<8x64xf32>
    %101 = vector.broadcast %8 : vector<1x64xf32> to vector<8x64xf32>
    %102 = arith.addf %100, %101 : vector<8x64xf32>
    %103 = arith.negf %102 : vector<8x64xf32>
    %104 = math.exp %103 : vector<8x64xf32>
    %cst_56 = arith.constant 1.000000e+00 : f32
    %105 = vector.broadcast %cst_56 : f32 to vector<8x64xf32>
    %106 = arith.addf %105, %104 : vector<8x64xf32>
    %107 = arith.divf %105, %106 : vector<8x64xf32>
    %108 = math.tanh %102 : vector<8x64xf32>
    %109 = vector.extract_strided_slice %107 {offsets = [0, 0], sizes = [8, 16], strides = [1, 1]} : vector<8x64xf32> to vector<8x16xf32>
    %110 = vector.extract_strided_slice %107 {offsets = [0, 16], sizes = [8, 16], strides = [1, 1]} : vector<8x64xf32> to vector<8x16xf32>
    %111 = vector.extract_strided_slice %108 {offsets = [0, 32], sizes = [8, 16], strides = [1, 1]} : vector<8x64xf32> to vector<8x16xf32>
    %112 = vector.extract_strided_slice %107 {offsets = [0, 48], sizes = [8, 16], strides = [1, 1]} : vector<8x64xf32> to vector<8x16xf32>
    %113 = arith.mulf %110, %84 : vector<8x16xf32>
    %114 = arith.mulf %109, %111 : vector<8x16xf32>
    %115 = arith.addf %113, %114 : vector<8x16xf32>
    %116 = math.tanh %115 : vector<8x16xf32>
    %117 = arith.mulf %112, %116 : vector<8x16xf32>
    %118 = vector.extract_strided_slice %0 {offsets = [0, 24], sizes = [8, 8], strides = [1, 1]} : vector<8x56xf32> to vector<8x8xf32>
    %119 = tpu.concatenate %117, %115 in 1 : vector<8x16xf32>, vector<8x16xf32> -> vector<8x32xf32>
    %120 = vector.extract_strided_slice %22 {offsets = [0, 21], sizes = [8, 7], strides = [1, 1]} : vector<8x49xf32> to vector<8x7xf32>
    %cst_57 = arith.constant dense<0.000000e+00> : vector<8x7xf32>
    %121 = tpu.matmul %119, %3, %cst_57 {dimension_numbers = #tpu.dot_dimension_numbers<[1], [0], [0], [1], [0, 0, 1, 1], [], []>} : vector<8x32xf32>, vector<32x7xf32>, vector<8x7xf32> -> vector<8x7xf32>
    %122 = arith.addf %120, %121 : vector<8x7xf32>
    %123 = vector.broadcast %4 : vector<1x7xf32> to vector<8x7xf32>
    %124 = arith.addf %122, %123 : vector<8x7xf32>
    %125 = math.tanh %124 : vector<8x7xf32>
    %cst_58 = arith.constant dense<0.000000e+00> : vector<8x8xf32>
    %126 = tpu.matmul %125, %5, %cst_58 {dimension_numbers = #tpu.dot_dimension_numbers<[1], [0], [0], [1], [0, 0, 1, 1], [], []>} : vector<8x7xf32>, vector<7x8xf32>, vector<8x8xf32> -> vector<8x8xf32>
    %127 = vector.broadcast %6 : vector<1x8xf32> to vector<8x8xf32>
    %128 = arith.addf %126, %127 : vector<8x8xf32>
    %129 = arith.mulf %128, %118 : vector<8x8xf32>
    %130 = tpu.concatenate %129, %117 in 1 : vector<8x8xf32>, vector<8x16xf32> -> vector<8x24xf32>
    %cst_59 = arith.constant dense<0.000000e+00> : vector<8x64xf32>
    %131 = tpu.matmul %130, %7, %cst_59 {dimension_numbers = #tpu.dot_dimension_numbers<[1], [0], [0], [1], [0, 0, 1, 1], [], []>} : vector<8x24xf32>, vector<24x64xf32>, vector<8x64xf32> -> vector<8x64xf32>
    %132 = vector.broadcast %8 : vector<1x64xf32> to vector<8x64xf32>
    %133 = arith.addf %131, %132 : vector<8x64xf32>
    %134 = arith.negf %133 : vector<8x64xf32>
    %135 = math.exp %134 : vector<8x64xf32>
    %cst_60 = arith.constant 1.000000e+00 : f32
    %136 = vector.broadcast %cst_60 : f32 to vector<8x64xf32>
    %137 = arith.addf %136, %135 : vector<8x64xf32>
    %138 = arith.divf %136, %137 : vector<8x64xf32>
    %139 = math.tanh %133 : vector<8x64xf32>
    %140 = vector.extract_strided_slice %138 {offsets = [0, 0], sizes = [8, 16], strides = [1, 1]} : vector<8x64xf32> to vector<8x16xf32>
    %141 = vector.extract_strided_slice %138 {offsets = [0, 16], sizes = [8, 16], strides = [1, 1]} : vector<8x64xf32> to vector<8x16xf32>
    %142 = vector.extract_strided_slice %139 {offsets = [0, 32], sizes = [8, 16], strides = [1, 1]} : vector<8x64xf32> to vector<8x16xf32>
    %143 = vector.extract_strided_slice %138 {offsets = [0, 48], sizes = [8, 16], strides = [1, 1]} : vector<8x64xf32> to vector<8x16xf32>
    %144 = arith.mulf %141, %115 : vector<8x16xf32>
    %145 = arith.mulf %140, %142 : vector<8x16xf32>
    %146 = arith.addf %144, %145 : vector<8x16xf32>
    %147 = math.tanh %146 : vector<8x16xf32>
    %148 = arith.mulf %143, %147 : vector<8x16xf32>
    %149 = vector.extract_strided_slice %0 {offsets = [0, 32], sizes = [8, 8], strides = [1, 1]} : vector<8x56xf32> to vector<8x8xf32>
    %150 = tpu.concatenate %148, %146 in 1 : vector<8x16xf32>, vector<8x16xf32> -> vector<8x32xf32>
    %151 = vector.extract_strided_slice %22 {offsets = [0, 28], sizes = [8, 7], strides = [1, 1]} : vector<8x49xf32> to vector<8x7xf32>
    %cst_61 = arith.constant dense<0.000000e+00> : vector<8x7xf32>
    %152 = tpu.matmul %150, %3, %cst_61 {dimension_numbers = #tpu.dot_dimension_numbers<[1], [0], [0], [1], [0, 0, 1, 1], [], []>} : vector<8x32xf32>, vector<32x7xf32>, vector<8x7xf32> -> vector<8x7xf32>
    %153 = arith.addf %151, %152 : vector<8x7xf32>
    %154 = vector.broadcast %4 : vector<1x7xf32> to vector<8x7xf32>
    %155 = arith.addf %153, %154 : vector<8x7xf32>
    %156 = math.tanh %155 : vector<8x7xf32>
    %cst_62 = arith.constant dense<0.000000e+00> : vector<8x8xf32>
    %157 = tpu.matmul %156, %5, %cst_62 {dimension_numbers = #tpu.dot_dimension_numbers<[1], [0], [0], [1], [0, 0, 1, 1], [], []>} : vector<8x7xf32>, vector<7x8xf32>, vector<8x8xf32> -> vector<8x8xf32>
    %158 = vector.broadcast %6 : vector<1x8xf32> to vector<8x8xf32>
    %159 = arith.addf %157, %158 : vector<8x8xf32>
    %160 = arith.mulf %159, %149 : vector<8x8xf32>
    %161 = tpu.concatenate %160, %148 in 1 : vector<8x8xf32>, vector<8x16xf32> -> vector<8x24xf32>
    %cst_63 = arith.constant dense<0.000000e+00> : vector<8x64xf32>
    %162 = tpu.matmul %161, %7, %cst_63 {dimension_numbers = #tpu.dot_dimension_numbers<[1], [0], [0], [1], [0, 0, 1, 1], [], []>} : vector<8x24xf32>, vector<24x64xf32>, vector<8x64xf32> -> vector<8x64xf32>
    %163 = vector.broadcast %8 : vector<1x64xf32> to vector<8x64xf32>
    %164 = arith.addf %162, %163 : vector<8x64xf32>
    %165 = arith.negf %164 : vector<8x64xf32>
    %166 = math.exp %165 : vector<8x64xf32>
    %cst_64 = arith.constant 1.000000e+00 : f32
    %167 = vector.broadcast %cst_64 : f32 to vector<8x64xf32>
    %168 = arith.addf %167, %166 : vector<8x64xf32>
    %169 = arith.divf %167, %168 : vector<8x64xf32>
    %170 = math.tanh %164 : vector<8x64xf32>
    %171 = vector.extract_strided_slice %169 {offsets = [0, 0], sizes = [8, 16], strides = [1, 1]} : vector<8x64xf32> to vector<8x16xf32>
    %172 = vector.extract_strided_slice %169 {offsets = [0, 16], sizes = [8, 16], strides = [1, 1]} : vector<8x64xf32> to vector<8x16xf32>
    %173 = vector.extract_strided_slice %170 {offsets = [0, 32], sizes = [8, 16], strides = [1, 1]} : vector<8x64xf32> to vector<8x16xf32>
    %174 = vector.extract_strided_slice %169 {offsets = [0, 48], sizes = [8, 16], strides = [1, 1]} : vector<8x64xf32> to vector<8x16xf32>
    %175 = arith.mulf %172, %146 : vector<8x16xf32>
    %176 = arith.mulf %171, %173 : vector<8x16xf32>
    %177 = arith.addf %175, %176 : vector<8x16xf32>
    %178 = math.tanh %177 : vector<8x16xf32>
    %179 = arith.mulf %174, %178 : vector<8x16xf32>
    %180 = vector.extract_strided_slice %0 {offsets = [0, 40], sizes = [8, 8], strides = [1, 1]} : vector<8x56xf32> to vector<8x8xf32>
    %181 = tpu.concatenate %179, %177 in 1 : vector<8x16xf32>, vector<8x16xf32> -> vector<8x32xf32>
    %182 = vector.extract_strided_slice %22 {offsets = [0, 35], sizes = [8, 7], strides = [1, 1]} : vector<8x49xf32> to vector<8x7xf32>
    %cst_65 = arith.constant dense<0.000000e+00> : vector<8x7xf32>
    %183 = tpu.matmul %181, %3, %cst_65 {dimension_numbers = #tpu.dot_dimension_numbers<[1], [0], [0], [1], [0, 0, 1, 1], [], []>} : vector<8x32xf32>, vector<32x7xf32>, vector<8x7xf32> -> vector<8x7xf32>
    %184 = arith.addf %182, %183 : vector<8x7xf32>
    %185 = vector.broadcast %4 : vector<1x7xf32> to vector<8x7xf32>
    %186 = arith.addf %184, %185 : vector<8x7xf32>
    %187 = math.tanh %186 : vector<8x7xf32>
    %cst_66 = arith.constant dense<0.000000e+00> : vector<8x8xf32>
    %188 = tpu.matmul %187, %5, %cst_66 {dimension_numbers = #tpu.dot_dimension_numbers<[1], [0], [0], [1], [0, 0, 1, 1], [], []>} : vector<8x7xf32>, vector<7x8xf32>, vector<8x8xf32> -> vector<8x8xf32>
    %189 = vector.broadcast %6 : vector<1x8xf32> to vector<8x8xf32>
    %190 = arith.addf %188, %189 : vector<8x8xf32>
    %191 = arith.mulf %190, %180 : vector<8x8xf32>
    %192 = tpu.concatenate %191, %179 in 1 : vector<8x8xf32>, vector<8x16xf32> -> vector<8x24xf32>
    %cst_67 = arith.constant dense<0.000000e+00> : vector<8x64xf32>
    %193 = tpu.matmul %192, %7, %cst_67 {dimension_numbers = #tpu.dot_dimension_numbers<[1], [0], [0], [1], [0, 0, 1, 1], [], []>} : vector<8x24xf32>, vector<24x64xf32>, vector<8x64xf32> -> vector<8x64xf32>
    %194 = vector.broadcast %8 : vector<1x64xf32> to vector<8x64xf32>
    %195 = arith.addf %193, %194 : vector<8x64xf32>
    %196 = arith.negf %195 : vector<8x64xf32>
    %197 = math.exp %196 : vector<8x64xf32>
    %cst_68 = arith.constant 1.000000e+00 : f32
    %198 = vector.broadcast %cst_68 : f32 to vector<8x64xf32>
    %199 = arith.addf %198, %197 : vector<8x64xf32>
    %200 = arith.divf %198, %199 : vector<8x64xf32>
    %201 = math.tanh %195 : vector<8x64xf32>
    %202 = vector.extract_strided_slice %200 {offsets = [0, 0], sizes = [8, 16], strides = [1, 1]} : vector<8x64xf32> to vector<8x16xf32>
    %203 = vector.extract_strided_slice %200 {offsets = [0, 16], sizes = [8, 16], strides = [1, 1]} : vector<8x64xf32> to vector<8x16xf32>
    %204 = vector.extract_strided_slice %201 {offsets = [0, 32], sizes = [8, 16], strides = [1, 1]} : vector<8x64xf32> to vector<8x16xf32>
    %205 = vector.extract_strided_slice %200 {offsets = [0, 48], sizes = [8, 16], strides = [1, 1]} : vector<8x64xf32> to vector<8x16xf32>
    %206 = arith.mulf %203, %177 : vector<8x16xf32>
    %207 = arith.mulf %202, %204 : vector<8x16xf32>
    %208 = arith.addf %206, %207 : vector<8x16xf32>
    %209 = math.tanh %208 : vector<8x16xf32>
    %210 = arith.mulf %205, %209 : vector<8x16xf32>
    %211 = vector.extract_strided_slice %0 {offsets = [0, 48], sizes = [8, 8], strides = [1, 1]} : vector<8x56xf32> to vector<8x8xf32>
    %212 = tpu.concatenate %210, %208 in 1 : vector<8x16xf32>, vector<8x16xf32> -> vector<8x32xf32>
    %213 = vector.extract_strided_slice %22 {offsets = [0, 42], sizes = [8, 7], strides = [1, 1]} : vector<8x49xf32> to vector<8x7xf32>
    %cst_69 = arith.constant dense<0.000000e+00> : vector<8x7xf32>
    %214 = tpu.matmul %212, %3, %cst_69 {dimension_numbers = #tpu.dot_dimension_numbers<[1], [0], [0], [1], [0, 0, 1, 1], [], []>} : vector<8x32xf32>, vector<32x7xf32>, vector<8x7xf32> -> vector<8x7xf32>
    %215 = arith.addf %213, %214 : vector<8x7xf32>
    %216 = vector.broadcast %4 : vector<1x7xf32> to vector<8x7xf32>
    %217 = arith.addf %215, %216 : vector<8x7xf32>
    %218 = math.tanh %217 : vector<8x7xf32>
    %cst_70 = arith.constant dense<0.000000e+00> : vector<8x8xf32>
    %219 = tpu.matmul %218, %5, %cst_70 {dimension_numbers = #tpu.dot_dimension_numbers<[1], [0], [0], [1], [0, 0, 1, 1], [], []>} : vector<8x7xf32>, vector<7x8xf32>, vector<8x8xf32> -> vector<8x8xf32>
    %220 = vector.broadcast %6 : vector<1x8xf32> to vector<8x8xf32>
    %221 = arith.addf %219, %220 : vector<8x8xf32>
    %222 = arith.mulf %221, %211 : vector<8x8xf32>
    %223 = tpu.concatenate %222, %210 in 1 : vector<8x8xf32>, vector<8x16xf32> -> vector<8x24xf32>
    %cst_71 = arith.constant dense<0.000000e+00> : vector<8x64xf32>
    %224 = tpu.matmul %223, %7, %cst_71 {dimension_numbers = #tpu.dot_dimension_numbers<[1], [0], [0], [1], [0, 0, 1, 1], [], []>} : vector<8x24xf32>, vector<24x64xf32>, vector<8x64xf32> -> vector<8x64xf32>
    %225 = vector.broadcast %8 : vector<1x64xf32> to vector<8x64xf32>
    %226 = arith.addf %224, %225 : vector<8x64xf32>
    %227 = arith.negf %226 : vector<8x64xf32>
    %228 = math.exp %227 : vector<8x64xf32>
    %cst_72 = arith.constant 1.000000e+00 : f32
    %229 = vector.broadcast %cst_72 : f32 to vector<8x64xf32>
    %230 = arith.addf %229, %228 : vector<8x64xf32>
    %231 = arith.divf %229, %230 : vector<8x64xf32>
    %232 = math.tanh %226 : vector<8x64xf32>
    %233 = vector.extract_strided_slice %231 {offsets = [0, 0], sizes = [8, 16], strides = [1, 1]} : vector<8x64xf32> to vector<8x16xf32>
    %234 = vector.extract_strided_slice %231 {offsets = [0, 16], sizes = [8, 16], strides = [1, 1]} : vector<8x64xf32> to vector<8x16xf32>
    %235 = vector.extract_strided_slice %232 {offsets = [0, 32], sizes = [8, 16], strides = [1, 1]} : vector<8x64xf32> to vector<8x16xf32>
    %236 = vector.extract_strided_slice %231 {offsets = [0, 48], sizes = [8, 16], strides = [1, 1]} : vector<8x64xf32> to vector<8x16xf32>
    %237 = arith.mulf %234, %208 : vector<8x16xf32>
    %238 = arith.mulf %233, %235 : vector<8x16xf32>
    %239 = arith.addf %237, %238 : vector<8x16xf32>
    %240 = math.tanh %239 : vector<8x16xf32>
    %241 = arith.mulf %236, %240 : vector<8x16xf32>
    %242 = tpu.concatenate %55, %86, %117, %148, %179, %210, %241 in 1 : vector<8x16xf32>, vector<8x16xf32>, vector<8x16xf32>, vector<8x16xf32>, vector<8x16xf32>, vector<8x16xf32>, vector<8x16xf32> -> vector<8x112xf32>
    %cst_73 = arith.constant dense<0.000000e+00> : vector<8x112xf32>
    %243 = tpu.matmul %242, %10, %cst_73 {dimension_numbers = #tpu.dot_dimension_numbers<[1], [0], [0], [1], [0, 0, 1, 1], [], []>} : vector<8x112xf32>, vector<112x112xf32>, vector<8x112xf32> -> vector<8x112xf32>
    %cst_74 = arith.constant 0.000000e+00 : f32
    %244 = vector.broadcast %cst_74 : f32 to vector<8x16xf32>
    %cst_75 = arith.constant 0.000000e+00 : f32
    %245 = vector.broadcast %cst_75 : f32 to vector<8x16xf32>
    %246 = tpu.concatenate %244, %245 in 1 : vector<8x16xf32>, vector<8x16xf32> -> vector<8x32xf32>
    %cst_76 = arith.constant dense<0.000000e+00> : vector<8x16xf32>
    %247 = tpu.matmul %246, %9, %cst_76 {dimension_numbers = #tpu.dot_dimension_numbers<[1], [0], [0], [1], [0, 0, 1, 1], [], []>} : vector<8x32xf32>, vector<32x16xf32>, vector<8x16xf32> -> vector<8x16xf32>
    %248 = vector.extract_strided_slice %243 {offsets = [0, 0], sizes = [8, 16], strides = [1, 1]} : vector<8x112xf32> to vector<8x16xf32>
    %249 = arith.addf %247, %248 : vector<8x16xf32>
    %250 = vector.broadcast %11 : vector<1x16xf32> to vector<8x16xf32>
    %251 = arith.addf %249, %250 : vector<8x16xf32>
    %252 = math.tanh %251 : vector<8x16xf32>
    %cst_77 = arith.constant dense<0.000000e+00> : vector<8x7xf32>
    %253 = tpu.matmul %252, %12, %cst_77 {dimension_numbers = #tpu.dot_dimension_numbers<[1], [0], [0], [1], [0, 0, 1, 1], [], []>} : vector<8x16xf32>, vector<16x7xf32>, vector<8x7xf32> -> vector<8x7xf32>
    %254 = vector.broadcast %13 : vector<1x7xf32> to vector<8x7xf32>
    %255 = arith.addf %253, %254 : vector<8x7xf32>
    %cst_78 = arith.constant dense<0xFF800000> : vector<8xf32>
    %256 = vector.multi_reduction <maximumf>, %255, %cst_78 [1] : vector<8x7xf32> to vector<8xf32>
    %257 = vector.shape_cast %256 : vector<8xf32> to vector<8x1xf32>
    %258 = vector.broadcast %257 : vector<8x1xf32> to vector<8x7xf32>
    %259 = arith.subf %255, %258 : vector<8x7xf32>
    %260 = math.exp %259 : vector<8x7xf32>
    %cst_79 = arith.constant dense<0.000000e+00> : vector<8xf32>
    %261 = vector.multi_reduction <add>, %260, %cst_79 [1] : vector<8x7xf32> to vector<8xf32>
    %262 = vector.shape_cast %261 : vector<8xf32> to vector<8x1xf32>
    %263 = tpu.reciprocal %262 {approx = true} : vector<8x1xf32> -> vector<8x1xf32>
    %264 = vector.broadcast %263 : vector<8x1xf32> to vector<8x7xf32>
    %265 = arith.mulf %260, %264 : vector<8x7xf32>
    %cst_80 = arith.constant dense<0.000000e+00> : vector<8x112xf32>
    %266 = tpu.matmul %265, %14, %cst_80 {dimension_numbers = #tpu.dot_dimension_numbers<[1], [0], [0], [1], [0, 0, 1, 1], [], []>} : vector<8x7xf32>, vector<7x112xf32>, vector<8x112xf32> -> vector<8x112xf32>
    %267 = arith.mulf %266, %242 : vector<8x112xf32>
    %cst_81 = arith.constant dense<0.000000e+00> : vector<8x64xf32>
    %268 = tpu.matmul %267, %15, %cst_81 {dimension_numbers = #tpu.dot_dimension_numbers<[1], [0], [0], [1], [0, 0, 1, 1], [], []>} : vector<8x112xf32>, vector<112x64xf32>, vector<8x64xf32> -> vector<8x64xf32>
    %269 = vector.extract_strided_slice %1 {offsets = [0, 0], sizes = [8, 1], strides = [1, 1]} : vector<8x7xf32> to vector<8x1xf32>
    %270 = vector.broadcast %269 : vector<8x1xf32> to vector<8x64xf32>
    %271 = vector.broadcast %16 : vector<1x64xf32> to vector<8x64xf32>
    %272 = arith.mulf %270, %271 : vector<8x64xf32>
    %273 = arith.addf %268, %272 : vector<8x64xf32>
    %cst_82 = arith.constant dense<0.000000e+00> : vector<8x64xf32>
    %274 = tpu.matmul %244, %18, %cst_82 {dimension_numbers = #tpu.dot_dimension_numbers<[1], [0], [0], [1], [0, 0, 1, 1], [], []>} : vector<8x16xf32>, vector<16x64xf32>, vector<8x64xf32> -> vector<8x64xf32>
    %275 = arith.addf %273, %274 : vector<8x64xf32>
    %276 = vector.broadcast %17 : vector<1x64xf32> to vector<8x64xf32>
    %277 = arith.addf %275, %276 : vector<8x64xf32>
    %278 = arith.negf %277 : vector<8x64xf32>
    %279 = math.exp %278 : vector<8x64xf32>
    %cst_83 = arith.constant 1.000000e+00 : f32
    %280 = vector.broadcast %cst_83 : f32 to vector<8x64xf32>
    %281 = arith.addf %280, %279 : vector<8x64xf32>
    %282 = arith.divf %280, %281 : vector<8x64xf32>
    %283 = math.tanh %277 : vector<8x64xf32>
    %284 = vector.extract_strided_slice %282 {offsets = [0, 0], sizes = [8, 16], strides = [1, 1]} : vector<8x64xf32> to vector<8x16xf32>
    %285 = vector.extract_strided_slice %282 {offsets = [0, 16], sizes = [8, 16], strides = [1, 1]} : vector<8x64xf32> to vector<8x16xf32>
    %286 = vector.extract_strided_slice %283 {offsets = [0, 32], sizes = [8, 16], strides = [1, 1]} : vector<8x64xf32> to vector<8x16xf32>
    %287 = vector.extract_strided_slice %282 {offsets = [0, 48], sizes = [8, 16], strides = [1, 1]} : vector<8x64xf32> to vector<8x16xf32>
    %288 = arith.mulf %285, %245 : vector<8x16xf32>
    %289 = arith.mulf %284, %286 : vector<8x16xf32>
    %290 = arith.addf %288, %289 : vector<8x16xf32>
    %291 = math.tanh %290 : vector<8x16xf32>
    %292 = arith.mulf %287, %291 : vector<8x16xf32>
    %293 = tpu.concatenate %292, %290 in 1 : vector<8x16xf32>, vector<8x16xf32> -> vector<8x32xf32>
    %cst_84 = arith.constant dense<0.000000e+00> : vector<8x16xf32>
    %294 = tpu.matmul %293, %9, %cst_84 {dimension_numbers = #tpu.dot_dimension_numbers<[1], [0], [0], [1], [0, 0, 1, 1], [], []>} : vector<8x32xf32>, vector<32x16xf32>, vector<8x16xf32> -> vector<8x16xf32>
    %295 = vector.extract_strided_slice %243 {offsets = [0, 16], sizes = [8, 16], strides = [1, 1]} : vector<8x112xf32> to vector<8x16xf32>
    %296 = arith.addf %294, %295 : vector<8x16xf32>
    %297 = vector.broadcast %11 : vector<1x16xf32> to vector<8x16xf32>
    %298 = arith.addf %296, %297 : vector<8x16xf32>
    %299 = math.tanh %298 : vector<8x16xf32>
    %cst_85 = arith.constant dense<0.000000e+00> : vector<8x7xf32>
    %300 = tpu.matmul %299, %12, %cst_85 {dimension_numbers = #tpu.dot_dimension_numbers<[1], [0], [0], [1], [0, 0, 1, 1], [], []>} : vector<8x16xf32>, vector<16x7xf32>, vector<8x7xf32> -> vector<8x7xf32>
    %301 = vector.broadcast %13 : vector<1x7xf32> to vector<8x7xf32>
    %302 = arith.addf %300, %301 : vector<8x7xf32>
    %cst_86 = arith.constant dense<0xFF800000> : vector<8xf32>
    %303 = vector.multi_reduction <maximumf>, %302, %cst_86 [1] : vector<8x7xf32> to vector<8xf32>
    %304 = vector.shape_cast %303 : vector<8xf32> to vector<8x1xf32>
    %305 = vector.broadcast %304 : vector<8x1xf32> to vector<8x7xf32>
    %306 = arith.subf %302, %305 : vector<8x7xf32>
    %307 = math.exp %306 : vector<8x7xf32>
    %cst_87 = arith.constant dense<0.000000e+00> : vector<8xf32>
    %308 = vector.multi_reduction <add>, %307, %cst_87 [1] : vector<8x7xf32> to vector<8xf32>
    %309 = vector.shape_cast %308 : vector<8xf32> to vector<8x1xf32>
    %310 = tpu.reciprocal %309 {approx = true} : vector<8x1xf32> -> vector<8x1xf32>
    %311 = vector.broadcast %310 : vector<8x1xf32> to vector<8x7xf32>
    %312 = arith.mulf %307, %311 : vector<8x7xf32>
    %cst_88 = arith.constant dense<0.000000e+00> : vector<8x112xf32>
    %313 = tpu.matmul %312, %14, %cst_88 {dimension_numbers = #tpu.dot_dimension_numbers<[1], [0], [0], [1], [0, 0, 1, 1], [], []>} : vector<8x7xf32>, vector<7x112xf32>, vector<8x112xf32> -> vector<8x112xf32>
    %314 = arith.mulf %313, %242 : vector<8x112xf32>
    %cst_89 = arith.constant dense<0.000000e+00> : vector<8x64xf32>
    %315 = tpu.matmul %314, %15, %cst_89 {dimension_numbers = #tpu.dot_dimension_numbers<[1], [0], [0], [1], [0, 0, 1, 1], [], []>} : vector<8x112xf32>, vector<112x64xf32>, vector<8x64xf32> -> vector<8x64xf32>
    %316 = vector.extract_strided_slice %1 {offsets = [0, 1], sizes = [8, 1], strides = [1, 1]} : vector<8x7xf32> to vector<8x1xf32>
    %317 = vector.broadcast %316 : vector<8x1xf32> to vector<8x64xf32>
    %318 = vector.broadcast %16 : vector<1x64xf32> to vector<8x64xf32>
    %319 = arith.mulf %317, %318 : vector<8x64xf32>
    %320 = arith.addf %315, %319 : vector<8x64xf32>
    %cst_90 = arith.constant dense<0.000000e+00> : vector<8x64xf32>
    %321 = tpu.matmul %292, %18, %cst_90 {dimension_numbers = #tpu.dot_dimension_numbers<[1], [0], [0], [1], [0, 0, 1, 1], [], []>} : vector<8x16xf32>, vector<16x64xf32>, vector<8x64xf32> -> vector<8x64xf32>
    %322 = arith.addf %320, %321 : vector<8x64xf32>
    %323 = vector.broadcast %17 : vector<1x64xf32> to vector<8x64xf32>
    %324 = arith.addf %322, %323 : vector<8x64xf32>
    %325 = arith.negf %324 : vector<8x64xf32>
    %326 = math.exp %325 : vector<8x64xf32>
    %cst_91 = arith.constant 1.000000e+00 : f32
    %327 = vector.broadcast %cst_91 : f32 to vector<8x64xf32>
    %328 = arith.addf %327, %326 : vector<8x64xf32>
    %329 = arith.divf %327, %328 : vector<8x64xf32>
    %330 = math.tanh %324 : vector<8x64xf32>
    %331 = vector.extract_strided_slice %329 {offsets = [0, 0], sizes = [8, 16], strides = [1, 1]} : vector<8x64xf32> to vector<8x16xf32>
    %332 = vector.extract_strided_slice %329 {offsets = [0, 16], sizes = [8, 16], strides = [1, 1]} : vector<8x64xf32> to vector<8x16xf32>
    %333 = vector.extract_strided_slice %330 {offsets = [0, 32], sizes = [8, 16], strides = [1, 1]} : vector<8x64xf32> to vector<8x16xf32>
    %334 = vector.extract_strided_slice %329 {offsets = [0, 48], sizes = [8, 16], strides = [1, 1]} : vector<8x64xf32> to vector<8x16xf32>
    %335 = arith.mulf %332, %290 : vector<8x16xf32>
    %336 = arith.mulf %331, %333 : vector<8x16xf32>
    %337 = arith.addf %335, %336 : vector<8x16xf32>
    %338 = math.tanh %337 : vector<8x16xf32>
    %339 = arith.mulf %334, %338 : vector<8x16xf32>
    %340 = tpu.concatenate %339, %337 in 1 : vector<8x16xf32>, vector<8x16xf32> -> vector<8x32xf32>
    %cst_92 = arith.constant dense<0.000000e+00> : vector<8x16xf32>
    %341 = tpu.matmul %340, %9, %cst_92 {dimension_numbers = #tpu.dot_dimension_numbers<[1], [0], [0], [1], [0, 0, 1, 1], [], []>} : vector<8x32xf32>, vector<32x16xf32>, vector<8x16xf32> -> vector<8x16xf32>
    %342 = vector.extract_strided_slice %243 {offsets = [0, 32], sizes = [8, 16], strides = [1, 1]} : vector<8x112xf32> to vector<8x16xf32>
    %343 = arith.addf %341, %342 : vector<8x16xf32>
    %344 = vector.broadcast %11 : vector<1x16xf32> to vector<8x16xf32>
    %345 = arith.addf %343, %344 : vector<8x16xf32>
    %346 = math.tanh %345 : vector<8x16xf32>
    %cst_93 = arith.constant dense<0.000000e+00> : vector<8x7xf32>
    %347 = tpu.matmul %346, %12, %cst_93 {dimension_numbers = #tpu.dot_dimension_numbers<[1], [0], [0], [1], [0, 0, 1, 1], [], []>} : vector<8x16xf32>, vector<16x7xf32>, vector<8x7xf32> -> vector<8x7xf32>
    %348 = vector.broadcast %13 : vector<1x7xf32> to vector<8x7xf32>
    %349 = arith.addf %347, %348 : vector<8x7xf32>
    %cst_94 = arith.constant dense<0xFF800000> : vector<8xf32>
    %350 = vector.multi_reduction <maximumf>, %349, %cst_94 [1] : vector<8x7xf32> to vector<8xf32>
    %351 = vector.shape_cast %350 : vector<8xf32> to vector<8x1xf32>
    %352 = vector.broadcast %351 : vector<8x1xf32> to vector<8x7xf32>
    %353 = arith.subf %349, %352 : vector<8x7xf32>
    %354 = math.exp %353 : vector<8x7xf32>
    %cst_95 = arith.constant dense<0.000000e+00> : vector<8xf32>
    %355 = vector.multi_reduction <add>, %354, %cst_95 [1] : vector<8x7xf32> to vector<8xf32>
    %356 = vector.shape_cast %355 : vector<8xf32> to vector<8x1xf32>
    %357 = tpu.reciprocal %356 {approx = true} : vector<8x1xf32> -> vector<8x1xf32>
    %358 = vector.broadcast %357 : vector<8x1xf32> to vector<8x7xf32>
    %359 = arith.mulf %354, %358 : vector<8x7xf32>
    %cst_96 = arith.constant dense<0.000000e+00> : vector<8x112xf32>
    %360 = tpu.matmul %359, %14, %cst_96 {dimension_numbers = #tpu.dot_dimension_numbers<[1], [0], [0], [1], [0, 0, 1, 1], [], []>} : vector<8x7xf32>, vector<7x112xf32>, vector<8x112xf32> -> vector<8x112xf32>
    %361 = arith.mulf %360, %242 : vector<8x112xf32>
    %cst_97 = arith.constant dense<0.000000e+00> : vector<8x64xf32>
    %362 = tpu.matmul %361, %15, %cst_97 {dimension_numbers = #tpu.dot_dimension_numbers<[1], [0], [0], [1], [0, 0, 1, 1], [], []>} : vector<8x112xf32>, vector<112x64xf32>, vector<8x64xf32> -> vector<8x64xf32>
    %363 = vector.extract_strided_slice %1 {offsets = [0, 2], sizes = [8, 1], strides = [1, 1]} : vector<8x7xf32> to vector<8x1xf32>
    %364 = vector.broadcast %363 : vector<8x1xf32> to vector<8x64xf32>
    %365 = vector.broadcast %16 : vector<1x64xf32> to vector<8x64xf32>
    %366 = arith.mulf %364, %365 : vector<8x64xf32>
    %367 = arith.addf %362, %366 : vector<8x64xf32>
    %cst_98 = arith.constant dense<0.000000e+00> : vector<8x64xf32>
    %368 = tpu.matmul %339, %18, %cst_98 {dimension_numbers = #tpu.dot_dimension_numbers<[1], [0], [0], [1], [0, 0, 1, 1], [], []>} : vector<8x16xf32>, vector<16x64xf32>, vector<8x64xf32> -> vector<8x64xf32>
    %369 = arith.addf %367, %368 : vector<8x64xf32>
    %370 = vector.broadcast %17 : vector<1x64xf32> to vector<8x64xf32>
    %371 = arith.addf %369, %370 : vector<8x64xf32>
    %372 = arith.negf %371 : vector<8x64xf32>
    %373 = math.exp %372 : vector<8x64xf32>
    %cst_99 = arith.constant 1.000000e+00 : f32
    %374 = vector.broadcast %cst_99 : f32 to vector<8x64xf32>
    %375 = arith.addf %374, %373 : vector<8x64xf32>
    %376 = arith.divf %374, %375 : vector<8x64xf32>
    %377 = math.tanh %371 : vector<8x64xf32>
    %378 = vector.extract_strided_slice %376 {offsets = [0, 0], sizes = [8, 16], strides = [1, 1]} : vector<8x64xf32> to vector<8x16xf32>
    %379 = vector.extract_strided_slice %376 {offsets = [0, 16], sizes = [8, 16], strides = [1, 1]} : vector<8x64xf32> to vector<8x16xf32>
    %380 = vector.extract_strided_slice %377 {offsets = [0, 32], sizes = [8, 16], strides = [1, 1]} : vector<8x64xf32> to vector<8x16xf32>
    %381 = vector.extract_strided_slice %376 {offsets = [0, 48], sizes = [8, 16], strides = [1, 1]} : vector<8x64xf32> to vector<8x16xf32>
    %382 = arith.mulf %379, %337 : vector<8x16xf32>
    %383 = arith.mulf %378, %380 : vector<8x16xf32>
    %384 = arith.addf %382, %383 : vector<8x16xf32>
    %385 = math.tanh %384 : vector<8x16xf32>
    %386 = arith.mulf %381, %385 : vector<8x16xf32>
    %387 = tpu.concatenate %386, %384 in 1 : vector<8x16xf32>, vector<8x16xf32> -> vector<8x32xf32>
    %cst_100 = arith.constant dense<0.000000e+00> : vector<8x16xf32>
    %388 = tpu.matmul %387, %9, %cst_100 {dimension_numbers = #tpu.dot_dimension_numbers<[1], [0], [0], [1], [0, 0, 1, 1], [], []>} : vector<8x32xf32>, vector<32x16xf32>, vector<8x16xf32> -> vector<8x16xf32>
    %389 = vector.extract_strided_slice %243 {offsets = [0, 48], sizes = [8, 16], strides = [1, 1]} : vector<8x112xf32> to vector<8x16xf32>
    %390 = arith.addf %388, %389 : vector<8x16xf32>
    %391 = vector.broadcast %11 : vector<1x16xf32> to vector<8x16xf32>
    %392 = arith.addf %390, %391 : vector<8x16xf32>
    %393 = math.tanh %392 : vector<8x16xf32>
    %cst_101 = arith.constant dense<0.000000e+00> : vector<8x7xf32>
    %394 = tpu.matmul %393, %12, %cst_101 {dimension_numbers = #tpu.dot_dimension_numbers<[1], [0], [0], [1], [0, 0, 1, 1], [], []>} : vector<8x16xf32>, vector<16x7xf32>, vector<8x7xf32> -> vector<8x7xf32>
    %395 = vector.broadcast %13 : vector<1x7xf32> to vector<8x7xf32>
    %396 = arith.addf %394, %395 : vector<8x7xf32>
    %cst_102 = arith.constant dense<0xFF800000> : vector<8xf32>
    %397 = vector.multi_reduction <maximumf>, %396, %cst_102 [1] : vector<8x7xf32> to vector<8xf32>
    %398 = vector.shape_cast %397 : vector<8xf32> to vector<8x1xf32>
    %399 = vector.broadcast %398 : vector<8x1xf32> to vector<8x7xf32>
    %400 = arith.subf %396, %399 : vector<8x7xf32>
    %401 = math.exp %400 : vector<8x7xf32>
    %cst_103 = arith.constant dense<0.000000e+00> : vector<8xf32>
    %402 = vector.multi_reduction <add>, %401, %cst_103 [1] : vector<8x7xf32> to vector<8xf32>
    %403 = vector.shape_cast %402 : vector<8xf32> to vector<8x1xf32>
    %404 = tpu.reciprocal %403 {approx = true} : vector<8x1xf32> -> vector<8x1xf32>
    %405 = vector.broadcast %404 : vector<8x1xf32> to vector<8x7xf32>
    %406 = arith.mulf %401, %405 : vector<8x7xf32>
    %cst_104 = arith.constant dense<0.000000e+00> : vector<8x112xf32>
    %407 = tpu.matmul %406, %14, %cst_104 {dimension_numbers = #tpu.dot_dimension_numbers<[1], [0], [0], [1], [0, 0, 1, 1], [], []>} : vector<8x7xf32>, vector<7x112xf32>, vector<8x112xf32> -> vector<8x112xf32>
    %408 = arith.mulf %407, %242 : vector<8x112xf32>
    %cst_105 = arith.constant dense<0.000000e+00> : vector<8x64xf32>
    %409 = tpu.matmul %408, %15, %cst_105 {dimension_numbers = #tpu.dot_dimension_numbers<[1], [0], [0], [1], [0, 0, 1, 1], [], []>} : vector<8x112xf32>, vector<112x64xf32>, vector<8x64xf32> -> vector<8x64xf32>
    %410 = vector.extract_strided_slice %1 {offsets = [0, 3], sizes = [8, 1], strides = [1, 1]} : vector<8x7xf32> to vector<8x1xf32>
    %411 = vector.broadcast %410 : vector<8x1xf32> to vector<8x64xf32>
    %412 = vector.broadcast %16 : vector<1x64xf32> to vector<8x64xf32>
    %413 = arith.mulf %411, %412 : vector<8x64xf32>
    %414 = arith.addf %409, %413 : vector<8x64xf32>
    %cst_106 = arith.constant dense<0.000000e+00> : vector<8x64xf32>
    %415 = tpu.matmul %386, %18, %cst_106 {dimension_numbers = #tpu.dot_dimension_numbers<[1], [0], [0], [1], [0, 0, 1, 1], [], []>} : vector<8x16xf32>, vector<16x64xf32>, vector<8x64xf32> -> vector<8x64xf32>
    %416 = arith.addf %414, %415 : vector<8x64xf32>
    %417 = vector.broadcast %17 : vector<1x64xf32> to vector<8x64xf32>
    %418 = arith.addf %416, %417 : vector<8x64xf32>
    %419 = arith.negf %418 : vector<8x64xf32>
    %420 = math.exp %419 : vector<8x64xf32>
    %cst_107 = arith.constant 1.000000e+00 : f32
    %421 = vector.broadcast %cst_107 : f32 to vector<8x64xf32>
    %422 = arith.addf %421, %420 : vector<8x64xf32>
    %423 = arith.divf %421, %422 : vector<8x64xf32>
    %424 = math.tanh %418 : vector<8x64xf32>
    %425 = vector.extract_strided_slice %423 {offsets = [0, 0], sizes = [8, 16], strides = [1, 1]} : vector<8x64xf32> to vector<8x16xf32>
    %426 = vector.extract_strided_slice %423 {offsets = [0, 16], sizes = [8, 16], strides = [1, 1]} : vector<8x64xf32> to vector<8x16xf32>
    %427 = vector.extract_strided_slice %424 {offsets = [0, 32], sizes = [8, 16], strides = [1, 1]} : vector<8x64xf32> to vector<8x16xf32>
    %428 = vector.extract_strided_slice %423 {offsets = [0, 48], sizes = [8, 16], strides = [1, 1]} : vector<8x64xf32> to vector<8x16xf32>
    %429 = arith.mulf %426, %384 : vector<8x16xf32>
    %430 = arith.mulf %425, %427 : vector<8x16xf32>
    %431 = arith.addf %429, %430 : vector<8x16xf32>
    %432 = math.tanh %431 : vector<8x16xf32>
    %433 = arith.mulf %428, %432 : vector<8x16xf32>
    %434 = tpu.concatenate %433, %431 in 1 : vector<8x16xf32>, vector<8x16xf32> -> vector<8x32xf32>
    %cst_108 = arith.constant dense<0.000000e+00> : vector<8x16xf32>
    %435 = tpu.matmul %434, %9, %cst_108 {dimension_numbers = #tpu.dot_dimension_numbers<[1], [0], [0], [1], [0, 0, 1, 1], [], []>} : vector<8x32xf32>, vector<32x16xf32>, vector<8x16xf32> -> vector<8x16xf32>
    %436 = vector.extract_strided_slice %243 {offsets = [0, 64], sizes = [8, 16], strides = [1, 1]} : vector<8x112xf32> to vector<8x16xf32>
    %437 = arith.addf %435, %436 : vector<8x16xf32>
    %438 = vector.broadcast %11 : vector<1x16xf32> to vector<8x16xf32>
    %439 = arith.addf %437, %438 : vector<8x16xf32>
    %440 = math.tanh %439 : vector<8x16xf32>
    %cst_109 = arith.constant dense<0.000000e+00> : vector<8x7xf32>
    %441 = tpu.matmul %440, %12, %cst_109 {dimension_numbers = #tpu.dot_dimension_numbers<[1], [0], [0], [1], [0, 0, 1, 1], [], []>} : vector<8x16xf32>, vector<16x7xf32>, vector<8x7xf32> -> vector<8x7xf32>
    %442 = vector.broadcast %13 : vector<1x7xf32> to vector<8x7xf32>
    %443 = arith.addf %441, %442 : vector<8x7xf32>
    %cst_110 = arith.constant dense<0xFF800000> : vector<8xf32>
    %444 = vector.multi_reduction <maximumf>, %443, %cst_110 [1] : vector<8x7xf32> to vector<8xf32>
    %445 = vector.shape_cast %444 : vector<8xf32> to vector<8x1xf32>
    %446 = vector.broadcast %445 : vector<8x1xf32> to vector<8x7xf32>
    %447 = arith.subf %443, %446 : vector<8x7xf32>
    %448 = math.exp %447 : vector<8x7xf32>
    %cst_111 = arith.constant dense<0.000000e+00> : vector<8xf32>
    %449 = vector.multi_reduction <add>, %448, %cst_111 [1] : vector<8x7xf32> to vector<8xf32>
    %450 = vector.shape_cast %449 : vector<8xf32> to vector<8x1xf32>
    %451 = tpu.reciprocal %450 {approx = true} : vector<8x1xf32> -> vector<8x1xf32>
    %452 = vector.broadcast %451 : vector<8x1xf32> to vector<8x7xf32>
    %453 = arith.mulf %448, %452 : vector<8x7xf32>
    %cst_112 = arith.constant dense<0.000000e+00> : vector<8x112xf32>
    %454 = tpu.matmul %453, %14, %cst_112 {dimension_numbers = #tpu.dot_dimension_numbers<[1], [0], [0], [1], [0, 0, 1, 1], [], []>} : vector<8x7xf32>, vector<7x112xf32>, vector<8x112xf32> -> vector<8x112xf32>
    %455 = arith.mulf %454, %242 : vector<8x112xf32>
    %cst_113 = arith.constant dense<0.000000e+00> : vector<8x64xf32>
    %456 = tpu.matmul %455, %15, %cst_113 {dimension_numbers = #tpu.dot_dimension_numbers<[1], [0], [0], [1], [0, 0, 1, 1], [], []>} : vector<8x112xf32>, vector<112x64xf32>, vector<8x64xf32> -> vector<8x64xf32>
    %457 = vector.extract_strided_slice %1 {offsets = [0, 4], sizes = [8, 1], strides = [1, 1]} : vector<8x7xf32> to vector<8x1xf32>
    %458 = vector.broadcast %457 : vector<8x1xf32> to vector<8x64xf32>
    %459 = vector.broadcast %16 : vector<1x64xf32> to vector<8x64xf32>
    %460 = arith.mulf %458, %459 : vector<8x64xf32>
    %461 = arith.addf %456, %460 : vector<8x64xf32>
    %cst_114 = arith.constant dense<0.000000e+00> : vector<8x64xf32>
    %462 = tpu.matmul %433, %18, %cst_114 {dimension_numbers = #tpu.dot_dimension_numbers<[1], [0], [0], [1], [0, 0, 1, 1], [], []>} : vector<8x16xf32>, vector<16x64xf32>, vector<8x64xf32> -> vector<8x64xf32>
    %463 = arith.addf %461, %462 : vector<8x64xf32>
    %464 = vector.broadcast %17 : vector<1x64xf32> to vector<8x64xf32>
    %465 = arith.addf %463, %464 : vector<8x64xf32>
    %466 = arith.negf %465 : vector<8x64xf32>
    %467 = math.exp %466 : vector<8x64xf32>
    %cst_115 = arith.constant 1.000000e+00 : f32
    %468 = vector.broadcast %cst_115 : f32 to vector<8x64xf32>
    %469 = arith.addf %468, %467 : vector<8x64xf32>
    %470 = arith.divf %468, %469 : vector<8x64xf32>
    %471 = math.tanh %465 : vector<8x64xf32>
    %472 = vector.extract_strided_slice %470 {offsets = [0, 0], sizes = [8, 16], strides = [1, 1]} : vector<8x64xf32> to vector<8x16xf32>
    %473 = vector.extract_strided_slice %470 {offsets = [0, 16], sizes = [8, 16], strides = [1, 1]} : vector<8x64xf32> to vector<8x16xf32>
    %474 = vector.extract_strided_slice %471 {offsets = [0, 32], sizes = [8, 16], strides = [1, 1]} : vector<8x64xf32> to vector<8x16xf32>
    %475 = vector.extract_strided_slice %470 {offsets = [0, 48], sizes = [8, 16], strides = [1, 1]} : vector<8x64xf32> to vector<8x16xf32>
    %476 = arith.mulf %473, %431 : vector<8x16xf32>
    %477 = arith.mulf %472, %474 : vector<8x16xf32>
    %478 = arith.addf %476, %477 : vector<8x16xf32>
    %479 = math.tanh %478 : vector<8x16xf32>
    %480 = arith.mulf %475, %479 : vector<8x16xf32>
    %481 = tpu.concatenate %480, %478 in 1 : vector<8x16xf32>, vector<8x16xf32> -> vector<8x32xf32>
    %cst_116 = arith.constant dense<0.000000e+00> : vector<8x16xf32>
    %482 = tpu.matmul %481, %9, %cst_116 {dimension_numbers = #tpu.dot_dimension_numbers<[1], [0], [0], [1], [0, 0, 1, 1], [], []>} : vector<8x32xf32>, vector<32x16xf32>, vector<8x16xf32> -> vector<8x16xf32>
    %483 = vector.extract_strided_slice %243 {offsets = [0, 80], sizes = [8, 16], strides = [1, 1]} : vector<8x112xf32> to vector<8x16xf32>
    %484 = arith.addf %482, %483 : vector<8x16xf32>
    %485 = vector.broadcast %11 : vector<1x16xf32> to vector<8x16xf32>
    %486 = arith.addf %484, %485 : vector<8x16xf32>
    %487 = math.tanh %486 : vector<8x16xf32>
    %cst_117 = arith.constant dense<0.000000e+00> : vector<8x7xf32>
    %488 = tpu.matmul %487, %12, %cst_117 {dimension_numbers = #tpu.dot_dimension_numbers<[1], [0], [0], [1], [0, 0, 1, 1], [], []>} : vector<8x16xf32>, vector<16x7xf32>, vector<8x7xf32> -> vector<8x7xf32>
    %489 = vector.broadcast %13 : vector<1x7xf32> to vector<8x7xf32>
    %490 = arith.addf %488, %489 : vector<8x7xf32>
    %cst_118 = arith.constant dense<0xFF800000> : vector<8xf32>
    %491 = vector.multi_reduction <maximumf>, %490, %cst_118 [1] : vector<8x7xf32> to vector<8xf32>
    %492 = vector.shape_cast %491 : vector<8xf32> to vector<8x1xf32>
    %493 = vector.broadcast %492 : vector<8x1xf32> to vector<8x7xf32>
    %494 = arith.subf %490, %493 : vector<8x7xf32>
    %495 = math.exp %494 : vector<8x7xf32>
    %cst_119 = arith.constant dense<0.000000e+00> : vector<8xf32>
    %496 = vector.multi_reduction <add>, %495, %cst_119 [1] : vector<8x7xf32> to vector<8xf32>
    %497 = vector.shape_cast %496 : vector<8xf32> to vector<8x1xf32>
    %498 = tpu.reciprocal %497 {approx = true} : vector<8x1xf32> -> vector<8x1xf32>
    %499 = vector.broadcast %498 : vector<8x1xf32> to vector<8x7xf32>
    %500 = arith.mulf %495, %499 : vector<8x7xf32>
    %cst_120 = arith.constant dense<0.000000e+00> : vector<8x112xf32>
    %501 = tpu.matmul %500, %14, %cst_120 {dimension_numbers = #tpu.dot_dimension_numbers<[1], [0], [0], [1], [0, 0, 1, 1], [], []>} : vector<8x7xf32>, vector<7x112xf32>, vector<8x112xf32> -> vector<8x112xf32>
    %502 = arith.mulf %501, %242 : vector<8x112xf32>
    %cst_121 = arith.constant dense<0.000000e+00> : vector<8x64xf32>
    %503 = tpu.matmul %502, %15, %cst_121 {dimension_numbers = #tpu.dot_dimension_numbers<[1], [0], [0], [1], [0, 0, 1, 1], [], []>} : vector<8x112xf32>, vector<112x64xf32>, vector<8x64xf32> -> vector<8x64xf32>
    %504 = vector.extract_strided_slice %1 {offsets = [0, 5], sizes = [8, 1], strides = [1, 1]} : vector<8x7xf32> to vector<8x1xf32>
    %505 = vector.broadcast %504 : vector<8x1xf32> to vector<8x64xf32>
    %506 = vector.broadcast %16 : vector<1x64xf32> to vector<8x64xf32>
    %507 = arith.mulf %505, %506 : vector<8x64xf32>
    %508 = arith.addf %503, %507 : vector<8x64xf32>
    %cst_122 = arith.constant dense<0.000000e+00> : vector<8x64xf32>
    %509 = tpu.matmul %480, %18, %cst_122 {dimension_numbers = #tpu.dot_dimension_numbers<[1], [0], [0], [1], [0, 0, 1, 1], [], []>} : vector<8x16xf32>, vector<16x64xf32>, vector<8x64xf32> -> vector<8x64xf32>
    %510 = arith.addf %508, %509 : vector<8x64xf32>
    %511 = vector.broadcast %17 : vector<1x64xf32> to vector<8x64xf32>
    %512 = arith.addf %510, %511 : vector<8x64xf32>
    %513 = arith.negf %512 : vector<8x64xf32>
    %514 = math.exp %513 : vector<8x64xf32>
    %cst_123 = arith.constant 1.000000e+00 : f32
    %515 = vector.broadcast %cst_123 : f32 to vector<8x64xf32>
    %516 = arith.addf %515, %514 : vector<8x64xf32>
    %517 = arith.divf %515, %516 : vector<8x64xf32>
    %518 = math.tanh %512 : vector<8x64xf32>
    %519 = vector.extract_strided_slice %517 {offsets = [0, 0], sizes = [8, 16], strides = [1, 1]} : vector<8x64xf32> to vector<8x16xf32>
    %520 = vector.extract_strided_slice %517 {offsets = [0, 16], sizes = [8, 16], strides = [1, 1]} : vector<8x64xf32> to vector<8x16xf32>
    %521 = vector.extract_strided_slice %518 {offsets = [0, 32], sizes = [8, 16], strides = [1, 1]} : vector<8x64xf32> to vector<8x16xf32>
    %522 = vector.extract_strided_slice %517 {offsets = [0, 48], sizes = [8, 16], strides = [1, 1]} : vector<8x64xf32> to vector<8x16xf32>
    %523 = arith.mulf %520, %478 : vector<8x16xf32>
    %524 = arith.mulf %519, %521 : vector<8x16xf32>
    %525 = arith.addf %523, %524 : vector<8x16xf32>
    %526 = math.tanh %525 : vector<8x16xf32>
    %527 = arith.mulf %522, %526 : vector<8x16xf32>
    %cst_124 = arith.constant dense<0.000000e+00> : vector<8x1xf32>
    %528 = tpu.matmul %527, %19, %cst_124 {dimension_numbers = #tpu.dot_dimension_numbers<[1], [0], [0], [1], [0, 0, 1, 1], [], []>} : vector<8x16xf32>, vector<16x1xf32>, vector<8x1xf32> -> vector<8x1xf32>
    %cst_125 = arith.constant dense<0.000000e+00> : vector<8x1xf32>
    %529 = tpu.matmul %502, %20, %cst_125 {dimension_numbers = #tpu.dot_dimension_numbers<[1], [0], [0], [1], [0, 0, 1, 1], [], []>} : vector<8x112xf32>, vector<112x1xf32>, vector<8x1xf32> -> vector<8x1xf32>
    %530 = arith.addf %528, %529 : vector<8x1xf32>
    %531 = vector.broadcast %21 : vector<1x1xf32> to vector<8x1xf32>
    %532 = arith.addf %530, %531 : vector<8x1xf32>
    %c0_126 = arith.constant 0 : index
    %c0_127 = arith.constant 0 : index
    %533 = vector.load %arg22[%c0_126, %c0_127] : memref<8x1xf32, #tpu.memory_space<vmem>>, vector<8x1xf32>
    tpu.vector_store %arg22[%c0_126, %c0_127], %532 {strides = array<i32>} : memref<8x1xf32, #tpu.memory_space<vmem>>, vector<8x1xf32>,
    return
  }
}

</mosaic_0001>

<llo_original>
// kernel: tpu_custom_call.1
$region0: #{tpu_custom_call.1}
  #allocation0 [shape = 'u32[]', space=smem, size = 0x4, offset = 0x4, fixed_abs, tag = 'smem constant byte address 0x4 - core index']
  #allocation1 [shape = 'u32[144,128]{1,0:T(1,128)}', space=vmem, size = 0x12000, scoped, tag = 'internal scratch']
  #allocation2 [shape = 'f32[1,1]{1,0:T(1,128)S(1)}', space=vmem, size = 0x200, scoped, tag = 'scoped memory for tpu_custom_call.1']
  %s0 = inlined_call_operand.vmem [shape: f32[8,56], index: 0, kind: input, shape index: {}]
  %s1 = inlined_call_operand.vmem [shape: f32[8,7], index: 1, kind: input, shape index: {}]
  %s2 = inlined_call_operand.vmem [shape: f32[56,49], index: 2, kind: input, shape index: {}]
  %s3 = inlined_call_operand.vmem [shape: f32[32,7], index: 3, kind: input, shape index: {}]
  %s4 = inlined_call_operand.vmem [shape: f32[1,7], index: 4, kind: input, shape index: {}]
  %s5 = inlined_call_operand.vmem [shape: f32[7,8], index: 5, kind: input, shape index: {}]
  %s6 = inlined_call_operand.vmem [shape: f32[1,8], index: 6, kind: input, shape index: {}]
  %s7 = inlined_call_operand.vmem [shape: f32[24,64], index: 7, kind: input, shape index: {}]
  %s8 = inlined_call_operand.vmem [shape: f32[1,64], index: 8, kind: input, shape index: {}]
  %s9 = inlined_call_operand.vmem [shape: f32[32,16], index: 9, kind: input, shape index: {}]
  %s10 = inlined_call_operand.vmem [shape: f32[112,112], index: 10, kind: input, shape index: {}]
  %s11 = inlined_call_operand.vmem [shape: f32[1,16], index: 11, kind: input, shape index: {}]
  %s12 = inlined_call_operand.vmem [shape: f32[16,7], index: 12, kind: input, shape index: {}]
  %s13 = inlined_call_operand.vmem [shape: f32[1,7], index: 13, kind: input, shape index: {}]
  %s14 = inlined_call_operand.vmem [shape: f32[7,112], index: 14, kind: input, shape index: {}]
  %s15 = inlined_call_operand.vmem [shape: f32[112,64], index: 15, kind: input, shape index: {}]
  %s16 = inlined_call_operand.vmem [shape: f32[1,64], index: 16, kind: input, shape index: {}]
  %s17 = inlined_call_operand.vmem [shape: f32[1,64], index: 17, kind: input, shape index: {}]
  %s18 = inlined_call_operand.vmem [shape: f32[16,64], index: 18, kind: input, shape index: {}]
  %s19 = inlined_call_operand.vmem [shape: f32[16,1], index: 19, kind: input, shape index: {}]
  %s20 = inlined_call_operand.vmem [shape: f32[112,1], index: 20, kind: input, shape index: {}]
  %s21 = inlined_call_operand.<no memory space> [shape: f32[1,1], index: 21, kind: input, shape index: {}]
  %s22 = inlined_call_operand.vmem [shape: f32[8,1], index: 22, kind: output, shape index: {}]
  %s23 = sld [smem:[#allocation0]]
  $region98: #{tpu_custom_call.1} parent=0
    _
  %s25 = ssub.s32 1, %s23
  %s26 = scalar_select 0, %s25, %s23
  %v27 = vstv %s21
  %28 = vst [vmem:[#allocation2] sm:$0x1] %v27
  // Predicated region
  $region2: #{tpu_custom_call.1} parent=0 // pred_check
    _
  $region3: #{tpu_custom_call.1} parent=0 // pred_check_branch
    %30 = sbr.rel (0) target = $region5
  $region4: #{tpu_custom_call.1} parent=0 // pred_region
    _
  $region5: #{tpu_custom_call.1} parent=0 // pred_fallthru
    _
  // Predicated region
  $region6: #{tpu_custom_call.1} parent=0 // pred_check
    _
  $region7: #{tpu_custom_call.1} parent=0 // pred_check_branch
    %32 = sbr.rel (0) target = $region9
  $region8: #{tpu_custom_call.1} parent=0 // pred_region
    _
  $region9: #{tpu_custom_call.1} parent=0 // pred_fallthru
    _
  // Predicated region
  $region10: #{tpu_custom_call.1} parent=0 // pred_check
    _
  $region11: #{tpu_custom_call.1} parent=0 // pred_check_branch
    %34 = sbr.rel (0) target = $region13
  $region12: #{tpu_custom_call.1} parent=0 // pred_region
    _
  $region13: #{tpu_custom_call.1} parent=0 // pred_fallthru
    _
  // Predicated region
  $region14: #{tpu_custom_call.1} parent=0 // pred_check
    _
  $region15: #{tpu_custom_call.1} parent=0 // pred_check_branch
    %36 = sbr.rel (0) target = $region17
  $region16: #{tpu_custom_call.1} parent=0 // pred_region
    _
  $region17: #{tpu_custom_call.1} parent=0 // pred_fallthru
    _
  // Predicated region
  $region18: #{tpu_custom_call.1} parent=0 // pred_check
    _
  $region19: #{tpu_custom_call.1} parent=0 // pred_check_branch
    %38 = sbr.rel (0) target = $region21
  $region20: #{tpu_custom_call.1} parent=0 // pred_region
    _
  $region21: #{tpu_custom_call.1} parent=0 // pred_fallthru
    _
  // Predicated region
  $region22: #{tpu_custom_call.1} parent=0 // pred_check
    _
  $region23: #{tpu_custom_call.1} parent=0 // pred_check_branch
    %40 = sbr.rel (0) target = $region25
  $region24: #{tpu_custom_call.1} parent=0 // pred_region
    _
  $region25: #{tpu_custom_call.1} parent=0 // pred_fallthru
    _
  // Predicated region
  $region26: #{tpu_custom_call.1} parent=0 // pred_check
    _
  $region27: #{tpu_custom_call.1} parent=0 // pred_check_branch
    %42 = sbr.rel (0) target = $region29
  $region28: #{tpu_custom_call.1} parent=0 // pred_region
    _
  $region29: #{tpu_custom_call.1} parent=0 // pred_fallthru
    _
  // Predicated region
  $region30: #{tpu_custom_call.1} parent=0 // pred_check
    _
  $region31: #{tpu_custom_call.1} parent=0 // pred_check_branch
    %44 = sbr.rel (0) target = $region33
  $region32: #{tpu_custom_call.1} parent=0 // pred_region
    _
  $region33: #{tpu_custom_call.1} parent=0 // pred_fallthru
    _
  // Predicated region
  $region34: #{tpu_custom_call.1} parent=0 // pred_check
    _
  $region35: #{tpu_custom_call.1} parent=0 // pred_check_branch
    %46 = sbr.rel (0) target = $region37
  $region36: #{tpu_custom_call.1} parent=0 // pred_region
    _
  $region37: #{tpu_custom_call.1} parent=0 // pred_fallthru
    _
  // Predicated region
  $region38: #{tpu_custom_call.1} parent=0 // pred_check
    _
  $region39: #{tpu_custom_call.1} parent=0 // pred_check_branch
    %48 = sbr.rel (0) target = $region41
  $region40: #{tpu_custom_call.1} parent=0 // pred_region
    _
  $region41: #{tpu_custom_call.1} parent=0 // pred_fallthru
    _
  // Predicated region
  $region42: #{tpu_custom_call.1} parent=0 // pred_check
    _
  $region43: #{tpu_custom_call.1} parent=0 // pred_check_branch
    %50 = sbr.rel (0) target = $region45
  $region44: #{tpu_custom_call.1} parent=0 // pred_region
    _
  $region45: #{tpu_custom_call.1} parent=0 // pred_fallthru
    _
  // Predicated region
  $region46: #{tpu_custom_call.1} parent=0 // pred_check
    _
  $region47: #{tpu_custom_call.1} parent=0 // pred_check_branch
    %52 = sbr.rel (0) target = $region49
  $region48: #{tpu_custom_call.1} parent=0 // pred_region
    _
  $region49: #{tpu_custom_call.1} parent=0 // pred_fallthru
    _
  // Predicated region
  $region50: #{tpu_custom_call.1} parent=0 // pred_check
    _
  $region51: #{tpu_custom_call.1} parent=0 // pred_check_branch
    %54 = sbr.rel (0) target = $region53
  $region52: #{tpu_custom_call.1} parent=0 // pred_region
    _
  $region53: #{tpu_custom_call.1} parent=0 // pred_fallthru
    _
  // Predicated region
  $region54: #{tpu_custom_call.1} parent=0 // pred_check
    _
  $region55: #{tpu_custom_call.1} parent=0 // pred_check_branch
    %56 = sbr.rel (0) target = $region57
  $region56: #{tpu_custom_call.1} parent=0 // pred_region
    _
  $region57: #{tpu_custom_call.1} parent=0 // pred_fallthru
    _
  // Predicated region
  $region58: #{tpu_custom_call.1} parent=0 // pred_check
    _
  $region59: #{tpu_custom_call.1} parent=0 // pred_check_branch
    %58 = sbr.rel (0) target = $region61
  $region60: #{tpu_custom_call.1} parent=0 // pred_region
    _
  $region61: #{tpu_custom_call.1} parent=0 // pred_fallthru
    _
  // Predicated region
  $region62: #{tpu_custom_call.1} parent=0 // pred_check
    _
  $region63: #{tpu_custom_call.1} parent=0 // pred_check_branch
    %60 = sbr.rel (0) target = $region65
  $region64: #{tpu_custom_call.1} parent=0 // pred_region
    _
  $region65: #{tpu_custom_call.1} parent=0 // pred_fallthru
    _
  // Predicated region
  $region66: #{tpu_custom_call.1} parent=0 // pred_check
    _
  $region67: #{tpu_custom_call.1} parent=0 // pred_check_branch
    %62 = sbr.rel (0) target = $region69
  $region68: #{tpu_custom_call.1} parent=0 // pred_region
    _
  $region69: #{tpu_custom_call.1} parent=0 // pred_fallthru
    _
  // Predicated region
  $region70: #{tpu_custom_call.1} parent=0 // pred_check
    _
  $region71: #{tpu_custom_call.1} parent=0 // pred_check_branch
    %64 = sbr.rel (0) target = $region73
  $region72: #{tpu_custom_call.1} parent=0 // pred_region
    _
  $region73: #{tpu_custom_call.1} parent=0 // pred_fallthru
    _
  // Predicated region
  $region74: #{tpu_custom_call.1} parent=0 // pred_check
    _
  $region75: #{tpu_custom_call.1} parent=0 // pred_check_branch
    %66 = sbr.rel (0) target = $region77
  $region76: #{tpu_custom_call.1} parent=0 // pred_region
    _
  $region77: #{tpu_custom_call.1} parent=0 // pred_fallthru
    _
  // Predicated region
  $region78: #{tpu_custom_call.1} parent=0 // pred_check
    _
  $region79: #{tpu_custom_call.1} parent=0 // pred_check_branch
    %68 = sbr.rel (0) target = $region81
  $region80: #{tpu_custom_call.1} parent=0 // pred_region
    _
  $region81: #{tpu_custom_call.1} parent=0 // pred_fallthru
    _
  // Predicated region
  $region82: #{tpu_custom_call.1} parent=0 // pred_check
    _
  $region83: #{tpu_custom_call.1} parent=0 // pred_check_branch
    %70 = sbr.rel (0) target = $region85
  $region84: #{tpu_custom_call.1} parent=0 // pred_region
    _
  $region85: #{tpu_custom_call.1} parent=0 // pred_fallthru
    _
  // Predicated region
  $region86: #{tpu_custom_call.1} parent=0 // pred_check
    _
  $region87: #{tpu_custom_call.1} parent=0 // pred_check_branch
    %72 = sbr.rel (0) target = $region89
  $region88: #{tpu_custom_call.1} parent=0 // pred_region
    _
  $region89: #{tpu_custom_call.1} parent=0 // pred_fallthru
    _
  %v73 = vld [vmem:[%s0] sm:$0xff]
  %v74 = vld [vmem:[%s1] sm:$0xff]
  %v75 = vld [vmem:[%s2] sm:$0xff]
  %v76 = vld [vmem:[%s2 + $0x8] sm:$0xff]
  %v77 = vld [vmem:[%s2 + $0x10] sm:$0xff]
  %v78 = vld [vmem:[%s2 + $0x18] sm:$0xff]
  %v79 = vld [vmem:[%s2 + $0x20] sm:$0xff]
  %v80 = vld [vmem:[%s2 + $0x28] sm:$0xff]
  %v81 = vld [vmem:[%s2 + $0x30] sm:$0xff]
  %v82 = vld [vmem:[%s3] sm:$0xff]
  %v83 = vld [vmem:[%s3 + $0x8] sm:$0xff]
  %v84 = vld [vmem:[%s3 + $0x10] sm:$0xff]
  %v85 = vld [vmem:[%s3 + $0x18] sm:$0xff]
  %v86 = vld [vmem:[%s4] sm:$0x1]
  %v87 = vld [vmem:[%s5] sm:$0x7f]
  %v88 = vld [vmem:[%s6] sm:$0x1]
  %v89 = vld [vmem:[%s7] sm:$0xff]
  %v90 = vld [vmem:[%s7 + $0x8] sm:$0xff]
  %v91 = vld [vmem:[%s7 + $0x10] sm:$0xff]
  %v92 = vld [vmem:[%s8] sm:$0x1]
  %v93 = vld [vmem:[%s9] sm:$0xff]
  %v94 = vld [vmem:[%s9 + $0x8] sm:$0xff]
  %v95 = vld [vmem:[%s9 + $0x10] sm:$0xff]
  %v96 = vld [vmem:[%s9 + $0x18] sm:$0xff]
  %v97 = vld [vmem:[%s10] sm:$0xff]
  %v98 = vld [vmem:[%s10 + $0x8] sm:$0xff]
  %v99 = vld [vmem:[%s10 + $0x10] sm:$0xff]
  %v100 = vld [vmem:[%s10 + $0x18] sm:$0xff]
  %v101 = vld [vmem:[%s10 + $0x20] sm:$0xff]
  %v102 = vld [vmem:[%s10 + $0x28] sm:$0xff]
  %v103 = vld [vmem:[%s10 + $0x30] sm:$0xff]
  %v104 = vld [vmem:[%s10 + $0x38] sm:$0xff]
  %v105 = vld [vmem:[%s10 + $0x40] sm:$0xff]
  %v106 = vld [vmem:[%s10 + $0x48] sm:$0xff]
  %v107 = vld [vmem:[%s10 + $0x50] sm:$0xff]
  %v108 = vld [vmem:[%s10 + $0x58] sm:$0xff]
  %v109 = vld [vmem:[%s10 + $0x60] sm:$0xff]
  %v110 = vld [vmem:[%s10 + $0x68] sm:$0xff]
  %v111 = vld [vmem:[%s11] sm:$0x1]
  %v112 = vld [vmem:[%s12] sm:$0xff]
  %v113 = vld [vmem:[%s12 + $0x8] sm:$0xff]
  %v114 = vld [vmem:[%s13] sm:$0x1]
  %v115 = vld [vmem:[%s14] sm:$0x7f]
  %v116 = vld [vmem:[%s15] sm:$0xff]
  %v117 = vld [vmem:[%s15 + $0x8] sm:$0xff]
  %v118 = vld [vmem:[%s15 + $0x10] sm:$0xff]
  %v119 = vld [vmem:[%s15 + $0x18] sm:$0xff]
  %v120 = vld [vmem:[%s15 + $0x20] sm:$0xff]
  %v121 = vld [vmem:[%s15 + $0x28] sm:$0xff]
  %v122 = vld [vmem:[%s15 + $0x30] sm:$0xff]
  %v123 = vld [vmem:[%s15 + $0x38] sm:$0xff]
  %v124 = vld [vmem:[%s15 + $0x40] sm:$0xff]
  %v125 = vld [vmem:[%s15 + $0x48] sm:$0xff]
  %v126 = vld [vmem:[%s15 + $0x50] sm:$0xff]
  %v127 = vld [vmem:[%s15 + $0x58] sm:$0xff]
  %v128 = vld [vmem:[%s15 + $0x60] sm:$0xff]
  %v129 = vld [vmem:[%s15 + $0x68] sm:$0xff]
  %v130 = vld [vmem:[%s16] sm:$0x1]
  %v131 = vld [vmem:[%s17] sm:$0x1]
  %v132 = vld [vmem:[%s18] sm:$0xff]
  %v133 = vld [vmem:[%s18 + $0x8] sm:$0xff]
  %v134 = vld [vmem:[%s19] sm:$0xff]
  %v135 = vld [vmem:[%s19 + $0x8] sm:$0xff]
  %v136 = vld [vmem:[%s20] sm:$0xff]
  %v137 = vld [vmem:[%s20 + $0x8] sm:$0xff]
  %v138 = vld [vmem:[%s20 + $0x10] sm:$0xff]
  %v139 = vld [vmem:[%s20 + $0x18] sm:$0xff]
  %v140 = vld [vmem:[%s20 + $0x20] sm:$0xff]
  %v141 = vld [vmem:[%s20 + $0x28] sm:$0xff]
  %v142 = vld [vmem:[%s20 + $0x30] sm:$0xff]
  %v143 = vld [vmem:[%s20 + $0x38] sm:$0xff]
  %v144 = vld [vmem:[%s20 + $0x40] sm:$0xff]
  %v145 = vld [vmem:[%s20 + $0x48] sm:$0xff]
  %v146 = vld [vmem:[%s20 + $0x50] sm:$0xff]
  %v147 = vld [vmem:[%s20 + $0x58] sm:$0xff]
  %v148 = vld [vmem:[%s20 + $0x60] sm:$0xff]
  %v149 = vld [vmem:[%s20 + $0x68] sm:$0xff]
  %v150 = vld [vmem:[#allocation2] sm:$0x1]
  %vm151 = vcmask 457728
  %v153 = vsel %vm151, %v73, 0
  %155 = vmatprep.subr.mxu0 0.0
  %156 = vmatpush1.msra.mxu0 0.0
  %157 = vmatprep.subr.mxu0 0.0
  %158 = vmatpush1.msra.mxu0 0.0
  %159 = vmatprep.subr.mxu0 0.0
  %160 = vmatpush1.msra.mxu0 0.0
  %161 = vmatprep.subr.mxu0 0.0
  %162 = vmatpush1.msra.mxu0 0.0
  %163 = vmatprep.subr.mxu0 0.0
  %164 = vmatpush1.msra.mxu0 0.0
  %165 = vmatprep.subr.mxu0 0.0
  %166 = vmatpush1.msra.mxu0 0.0
  %167 = vmatprep.subr.mxu0 0.0
  %168 = vmatpush1.msra.mxu0 0.0
  %169 = vmatprep.subr.mxu0 0.0
  %170 = vmatpush1.msra.mxu0 0.0
  %171 = vmatprep.subr.mxu0 0.0
  %172 = vmatpush1.msra.mxu0 0.0
  %173 = vmatprep.subr.mxu0 0.0
  %174 = vmatpush1.msra.mxu0 %v81
  %175 = vmatprep.subr.mxu0 0.0
  %176 = vmatpush1.msra.mxu0 %v80
  %177 = vmatprep.subr.mxu0 0.0
  %178 = vmatpush1.msra.mxu0 %v79
  %179 = vmatprep.subr.mxu0 0.0
  %180 = vmatpush1.msra.mxu0 %v78
  %181 = vmatprep.subr.mxu0 0.0
  %182 = vmatpush1.msra.mxu0 %v77
  %183 = vmatprep.subr.mxu0 0.0
  %184 = vmatpush1.msra.mxu0 %v76
  %185 = vmatprep.subr.mxu0 0.0
  %186 = vmatpush1.msra.mxu0 %v75
  %187 = vmatprep.subr.mxu0 0.0
  %188 = vmatpush2.msra.mxu0 0.0
  %189 = vmatprep.subr.mxu0 0.0
  %190 = vmatpush2.msra.mxu0 0.0
  %191 = vmatprep.subr.mxu0 0.0
  %192 = vmatpush2.msra.mxu0 0.0
  %193 = vmatprep.subr.mxu0 0.0
  %194 = vmatpush2.msra.mxu0 0.0
  %195 = vmatprep.subr.mxu0 0.0
  %196 = vmatpush2.msra.mxu0 0.0
  %197 = vmatprep.subr.mxu0 0.0
  %198 = vmatpush2.msra.mxu0 0.0
  %199 = vmatprep.subr.mxu0 0.0
  %200 = vmatpush2.msra.mxu0 0.0
  %201 = vmatprep.subr.mxu0 0.0
  %202 = vmatpush2.msra.mxu0 0.0
  %203 = vmatprep.subr.mxu0 0.0
  %204 = vmatpush2.msra.mxu0 0.0
  %205 = vmatprep.subr.mxu0 0.0
  %206 = vmatpush2.msra.mxu0 0.0
  %207 = vmatprep.subr.mxu0 0.0
  %208 = vmatpush2.msra.mxu0 0.0
  %209 = vmatprep.subr.mxu0 0.0
  %210 = vmatpush2.msra.mxu0 0.0
  %211 = vmatprep.subr.mxu0 0.0
  %212 = vmatpush2.msra.mxu0 0.0
  %213 = vmatprep.subr.mxu0 0.0
  %214 = vmatpush2.msra.mxu0 0.0
  %215 = vmatprep.subr.mxu0 0.0
  %216 = vmatpush2.msra.mxu0 0.0
  %217 = vmatprep.subr.mxu0 0.0
  %218 = vmatpush2.msra.mxu0 0.0
  %219 = vmatprep.mubr.f32.mxu0 0.0
  %220 = vmatmul.mubr.f32.gmra.mxu0 %v153
  %v221 = vpop.f32.mrf.mxu0
  %v222 = vadd.f32 0.0, %v221
  %v223 = vpop.f32.mrf.mxu0
  %224 = vdwg.mxu0
  %vm225 = vcmask 261120
  %v227 = vsel %vm225, 0.0, 0
  %229 = vmatprep.subr.mxu0 0.0
  %230 = vmatpush1.msra.mxu0 0.0
  %231 = vmatprep.subr.mxu0 0.0
  %232 = vmatpush1.msra.mxu0 0.0
  %233 = vmatprep.subr.mxu0 0.0
  %234 = vmatpush1.msra.mxu0 0.0
  %235 = vmatprep.subr.mxu0 0.0
  %236 = vmatpush1.msra.mxu0 0.0
  %237 = vmatprep.subr.mxu0 0.0
  %238 = vmatpush1.msra.mxu0 0.0
  %239 = vmatprep.subr.mxu0 0.0
  %240 = vmatpush1.msra.mxu0 0.0
  %241 = vmatprep.subr.mxu0 0.0
  %242 = vmatpush1.msra.mxu0 0.0
  %243 = vmatprep.subr.mxu0 0.0
  %244 = vmatpush1.msra.mxu0 0.0
  %245 = vmatprep.subr.mxu0 0.0
  %246 = vmatpush1.msra.mxu0 0.0
  %247 = vmatprep.subr.mxu0 0.0
  %248 = vmatpush1.msra.mxu0 0.0
  %249 = vmatprep.subr.mxu0 0.0
  %250 = vmatpush1.msra.mxu0 0.0
  %251 = vmatprep.subr.mxu0 0.0
  %252 = vmatpush1.msra.mxu0 0.0
  %253 = vmatprep.subr.mxu0 0.0
  %254 = vmatpush1.msra.mxu0 %v85
  %255 = vmatprep.subr.mxu0 0.0
  %256 = vmatpush1.msra.mxu0 %v84
  %257 = vmatprep.subr.mxu0 0.0
  %258 = vmatpush1.msra.mxu0 %v83
  %259 = vmatprep.subr.mxu0 0.0
  %260 = vmatpush1.msra.mxu0 %v82
  %261 = vmatprep.subr.mxu0 0.0
  %262 = vmatpush2.msra.mxu0 0.0
  %263 = vmatprep.subr.mxu0 0.0
  %264 = vmatpush2.msra.mxu0 0.0
  %265 = vmatprep.subr.mxu0 0.0
  %266 = vmatpush2.msra.mxu0 0.0
  %267 = vmatprep.subr.mxu0 0.0
  %268 = vmatpush2.msra.mxu0 0.0
  %269 = vmatprep.subr.mxu0 0.0
  %270 = vmatpush2.msra.mxu0 0.0
  %271 = vmatprep.subr.mxu0 0.0
  %272 = vmatpush2.msra.mxu0 0.0
  %273 = vmatprep.subr.mxu0 0.0
  %274 = vmatpush2.msra.mxu0 0.0
  %275 = vmatprep.subr.mxu0 0.0
  %276 = vmatpush2.msra.mxu0 0.0
  %277 = vmatprep.subr.mxu0 0.0
  %278 = vmatpush2.msra.mxu0 0.0
  %279 = vmatprep.subr.mxu0 0.0
  %280 = vmatpush2.msra.mxu0 0.0
  %281 = vmatprep.subr.mxu0 0.0
  %282 = vmatpush2.msra.mxu0 0.0
  %283 = vmatprep.subr.mxu0 0.0
  %284 = vmatpush2.msra.mxu0 0.0
  %285 = vmatprep.subr.mxu0 0.0
  %286 = vmatpush2.msra.mxu0 0.0
  %287 = vmatprep.subr.mxu0 0.0
  %288 = vmatpush2.msra.mxu0 0.0
  %289 = vmatprep.subr.mxu0 0.0
  %290 = vmatpush2.msra.mxu0 0.0
  %291 = vmatprep.subr.mxu0 0.0
  %292 = vmatpush2.msra.mxu0 0.0
  %293 = vmatprep.mubr.f32.mxu0 0.0
  %294 = vmatmul.mubr.f32.gmra.mxu0 %v227
  %v295 = vpop.f32.mrf.mxu0
  %v296 = vadd.f32 0.0, %v295
  %v297 = vpop.f32.mrf.mxu0
  %298 = vdwg.mxu0
  %v299 = vadd.f32 %v222, %v296
  %v301 = vlaneseq
  %v302 = vshrl.u32 %v301, 7
  %v303 = vsub.s32 0, %v302
  %v304 = vrot.slane %v86, %v303
  %v306 = vadd.f32 %v299, %v304
  %v307 = vtanh.pop %v306
  %v309 = vlaneseq
  %v310 = vshrl.u32 %v309, 7
  %v311 = vsub.s32 0, %v310
  %v312 = vrot.slane %v88, %v311
  %vm314 = vcmask 56320
  %v316 = vsel %vm314, %v307, 0
  %vm318 = vcmask 1046528
  %v320 = vsel %vm318, %v87, 0
  %322 = vmatprep.subr.mxu0 0.0
  %323 = vmatpush1.msra.mxu0 0.0
  %324 = vmatprep.subr.mxu0 0.0
  %325 = vmatpush1.msra.mxu0 0.0
  %326 = vmatprep.subr.mxu0 0.0
  %327 = vmatpush1.msra.mxu0 0.0
  %328 = vmatprep.subr.mxu0 0.0
  %329 = vmatpush1.msra.mxu0 0.0
  %330 = vmatprep.subr.mxu0 0.0
  %331 = vmatpush1.msra.mxu0 0.0
  %332 = vmatprep.subr.mxu0 0.0
  %333 = vmatpush1.msra.mxu0 0.0
  %334 = vmatprep.subr.mxu0 0.0
  %335 = vmatpush1.msra.mxu0 0.0
  %336 = vmatprep.subr.mxu0 0.0
  %337 = vmatpush1.msra.mxu0 0.0
  %338 = vmatprep.subr.mxu0 0.0
  %339 = vmatpush1.msra.mxu0 0.0
  %340 = vmatprep.subr.mxu0 0.0
  %341 = vmatpush1.msra.mxu0 0.0
  %342 = vmatprep.subr.mxu0 0.0
  %343 = vmatpush1.msra.mxu0 0.0
  %344 = vmatprep.subr.mxu0 0.0
  %345 = vmatpush1.msra.mxu0 0.0
  %346 = vmatprep.subr.mxu0 0.0
  %347 = vmatpush1.msra.mxu0 0.0
  %348 = vmatprep.subr.mxu0 0.0
  %349 = vmatpush1.msra.mxu0 0.0
  %350 = vmatprep.subr.mxu0 0.0
  %351 = vmatpush1.msra.mxu0 0.0
  %352 = vmatprep.subr.mxu0 0.0
  %353 = vmatpush1.msra.mxu0 %v320
  %354 = vmatprep.subr.mxu0 0.0
  %355 = vmatpush2.msra.mxu0 0.0
  %356 = vmatprep.subr.mxu0 0.0
  %357 = vmatpush2.msra.mxu0 0.0
  %358 = vmatprep.subr.mxu0 0.0
  %359 = vmatpush2.msra.mxu0 0.0
  %360 = vmatprep.subr.mxu0 0.0
  %361 = vmatpush2.msra.mxu0 0.0
  %362 = vmatprep.subr.mxu0 0.0
  %363 = vmatpush2.msra.mxu0 0.0
  %364 = vmatprep.subr.mxu0 0.0
  %365 = vmatpush2.msra.mxu0 0.0
  %366 = vmatprep.subr.mxu0 0.0
  %367 = vmatpush2.msra.mxu0 0.0
  %368 = vmatprep.subr.mxu0 0.0
  %369 = vmatpush2.msra.mxu0 0.0
  %370 = vmatprep.subr.mxu0 0.0
  %371 = vmatpush2.msra.mxu0 0.0
  %372 = vmatprep.subr.mxu0 0.0
  %373 = vmatpush2.msra.mxu0 0.0
  %374 = vmatprep.subr.mxu0 0.0
  %375 = vmatpush2.msra.mxu0 0.0
  %376 = vmatprep.subr.mxu0 0.0
  %377 = vmatpush2.msra.mxu0 0.0
  %378 = vmatprep.subr.mxu0 0.0
  %379 = vmatpush2.msra.mxu0 0.0
  %380 = vmatprep.subr.mxu0 0.0
  %381 = vmatpush2.msra.mxu0 0.0
  %382 = vmatprep.subr.mxu0 0.0
  %383 = vmatpush2.msra.mxu0 0.0
  %384 = vmatprep.subr.mxu0 0.0
  %385 = vmatpush2.msra.mxu0 0.0
  %386 = vmatprep.mubr.f32.mxu0 0.0
  %387 = vmatmul.mubr.f32.gmra.mxu0 %v316
  %v388 = vpop.f32.mrf.mxu0
  %v389 = vadd.f32 %v312, %v388
  %v390 = vpop.f32.mrf.mxu0
  %391 = vdwg.mxu0
  %v392 = vmul.f32 %v389, %v73
  %vm393 = vcmask 64512
  %v394 = vsel %vm393, %v392, 0.0
  %v396 = vlaneseq
  %v397 = vshrl.u32 %v396, 7
  %v398 = vsub.s32 0, %v397
  %v399 = vrot.slane %v92, %v398
  %vm401 = vcmask 195584
  %v403 = vsel %vm401, %v394, 0
  %405 = vmatprep.subr.mxu0 0.0
  %406 = vmatpush1.msra.mxu0 0.0
  %407 = vmatprep.subr.mxu0 0.0
  %408 = vmatpush1.msra.mxu0 0.0
  %409 = vmatprep.subr.mxu0 0.0
  %410 = vmatpush1.msra.mxu0 0.0
  %411 = vmatprep.subr.mxu0 0.0
  %412 = vmatpush1.msra.mxu0 0.0
  %413 = vmatprep.subr.mxu0 0.0
  %414 = vmatpush1.msra.mxu0 0.0
  %415 = vmatprep.subr.mxu0 0.0
  %416 = vmatpush1.msra.mxu0 0.0
  %417 = vmatprep.subr.mxu0 0.0
  %418 = vmatpush1.msra.mxu0 0.0
  %419 = vmatprep.subr.mxu0 0.0
  %420 = vmatpush1.msra.mxu0 0.0
  %421 = vmatprep.subr.mxu0 0.0
  %422 = vmatpush1.msra.mxu0 0.0
  %423 = vmatprep.subr.mxu0 0.0
  %424 = vmatpush1.msra.mxu0 0.0
  %425 = vmatprep.subr.mxu0 0.0
  %426 = vmatpush1.msra.mxu0 0.0
  %427 = vmatprep.subr.mxu0 0.0
  %428 = vmatpush1.msra.mxu0 0.0
  %429 = vmatprep.subr.mxu0 0.0
  %430 = vmatpush1.msra.mxu0 0.0
  %431 = vmatprep.subr.mxu0 0.0
  %432 = vmatpush1.msra.mxu0 %v91
  %433 = vmatprep.subr.mxu0 0.0
  %434 = vmatpush1.msra.mxu0 %v90
  %435 = vmatprep.subr.mxu0 0.0
  %436 = vmatpush1.msra.mxu0 %v89
  %437 = vmatprep.subr.mxu0 0.0
  %438 = vmatpush2.msra.mxu0 0.0
  %439 = vmatprep.subr.mxu0 0.0
  %440 = vmatpush2.msra.mxu0 0.0
  %441 = vmatprep.subr.mxu0 0.0
  %442 = vmatpush2.msra.mxu0 0.0
  %443 = vmatprep.subr.mxu0 0.0
  %444 = vmatpush2.msra.mxu0 0.0
  %445 = vmatprep.subr.mxu0 0.0
  %446 = vmatpush2.msra.mxu0 0.0
  %447 = vmatprep.subr.mxu0 0.0
  %448 = vmatpush2.msra.mxu0 0.0
  %449 = vmatprep.subr.mxu0 0.0
  %450 = vmatpush2.msra.mxu0 0.0
  %451 = vmatprep.subr.mxu0 0.0
  %452 = vmatpush2.msra.mxu0 0.0
  %453 = vmatprep.subr.mxu0 0.0
  %454 = vmatpush2.msra.mxu0 0.0
  %455 = vmatprep.subr.mxu0 0.0
  %456 = vmatpush2.msra.mxu0 0.0
  %457 = vmatprep.subr.mxu0 0.0
  %458 = vmatpush2.msra.mxu0 0.0
  %459 = vmatprep.subr.mxu0 0.0
  %460 = vmatpush2.msra.mxu0 0.0
  %461 = vmatprep.subr.mxu0 0.0
  %462 = vmatpush2.msra.mxu0 0.0
  %463 = vmatprep.subr.mxu0 0.0
  %464 = vmatpush2.msra.mxu0 0.0
  %465 = vmatprep.subr.mxu0 0.0
  %466 = vmatpush2.msra.mxu0 0.0
  %467 = vmatprep.subr.mxu0 0.0
  %468 = vmatpush2.msra.mxu0 0.0
  %469 = vmatprep.mubr.f32.mxu0 0.0
  %470 = vmatmul.mubr.f32.gmra.mxu0 %v403
  %v471 = vpop.f32.mrf.mxu0
  %v472 = vadd.f32 %v399, %v471
  %v473 = vpop.f32.mrf.mxu0
  %474 = vdwg.mxu0
  %v475 = vxor.u32 %v472, 2147483648
  %v476 = vmul.f32 %v475, 1.442695
  %v477 = vpow.pop %v476
  %v478 = vadd.f32 %v477, 1.0
  %v479 = vrcp.pop %v478
  %v480 = vmul.f32 1.0, %v479
  %v481 = vtanh.pop %v472
  %v482 = vmul.f32 %v480, 0.0
  %484 = vrot.lane.b32.xlu0 %v481, 96
  %v485 = vpop.permute.xlu0 %484
  %v487 = vmul.f32 %v480, %v485
  %489 = vrot.lane.b32.xlu0 %v487, 16
  %v490 = vpop.permute.xlu0 %489
  %v492 = vadd.f32 %v482, %v490
  %v493 = vtanh.pop %v492
  %495 = vrot.lane.b32.xlu0 %v493, 32
  %v496 = vpop.permute.xlu0 %495
  %v498 = vmul.f32 %v480, %v496
  %500 = vrot.lane.b32.xlu0 %v498, 80
  %v501 = vpop.permute.xlu0 %500
  %vm503 = vcmask 130048
  %v504 = vsel %vm503, %v501, %v492
  %v506 = vsel %vm225, %v504, 0
  %508 = vmatprep.subr.mxu0 0.0
  %509 = vmatpush1.msra.mxu0 0.0
  %510 = vmatprep.subr.mxu0 0.0
  %511 = vmatpush1.msra.mxu0 0.0
  %512 = vmatprep.subr.mxu0 0.0
  %513 = vmatpush1.msra.mxu0 0.0
  %514 = vmatprep.subr.mxu0 0.0
  %515 = vmatpush1.msra.mxu0 0.0
  %516 = vmatprep.subr.mxu0 0.0
  %517 = vmatpush1.msra.mxu0 0.0
  %518 = vmatprep.subr.mxu0 0.0
  %519 = vmatpush1.msra.mxu0 0.0
  %520 = vmatprep.subr.mxu0 0.0
  %521 = vmatpush1.msra.mxu0 0.0
  %522 = vmatprep.subr.mxu0 0.0
  %523 = vmatpush1.msra.mxu0 0.0
  %524 = vmatprep.subr.mxu0 0.0
  %525 = vmatpush1.msra.mxu0 0.0
  %526 = vmatprep.subr.mxu0 0.0
  %527 = vmatpush1.msra.mxu0 0.0
  %528 = vmatprep.subr.mxu0 0.0
  %529 = vmatpush1.msra.mxu0 0.0
  %530 = vmatprep.subr.mxu0 0.0
  %531 = vmatpush1.msra.mxu0 0.0
  %532 = vmatprep.subr.mxu0 0.0
  %533 = vmatpush1.msra.mxu0 %v85
  %534 = vmatprep.subr.mxu0 0.0
  %535 = vmatpush1.msra.mxu0 %v84
  %536 = vmatprep.subr.mxu0 0.0
  %537 = vmatpush1.msra.mxu0 %v83
  %538 = vmatprep.subr.mxu0 0.0
  %539 = vmatpush1.msra.mxu0 %v82
  %540 = vmatprep.subr.mxu0 0.0
  %541 = vmatpush2.msra.mxu0 0.0
  %542 = vmatprep.subr.mxu0 0.0
  %543 = vmatpush2.msra.mxu0 0.0
  %544 = vmatprep.subr.mxu0 0.0
  %545 = vmatpush2.msra.mxu0 0.0
  %546 = vmatprep.subr.mxu0 0.0
  %547 = vmatpush2.msra.mxu0 0.0
  %548 = vmatprep.subr.mxu0 0.0
  %549 = vmatpush2.msra.mxu0 0.0
  %550 = vmatprep.subr.mxu0 0.0
  %551 = vmatpush2.msra.mxu0 0.0
  %552 = vmatprep.subr.mxu0 0.0
  %553 = vmatpush2.msra.mxu0 0.0
  %554 = vmatprep.subr.mxu0 0.0
  %555 = vmatpush2.msra.mxu0 0.0
  %556 = vmatprep.subr.mxu0 0.0
  %557 = vmatpush2.msra.mxu0 0.0
  %558 = vmatprep.subr.mxu0 0.0
  %559 = vmatpush2.msra.mxu0 0.0
  %560 = vmatprep.subr.mxu0 0.0
  %561 = vmatpush2.msra.mxu0 0.0
  %562 = vmatprep.subr.mxu0 0.0
  %563 = vmatpush2.msra.mxu0 0.0
  %564 = vmatprep.subr.mxu0 0.0
  %565 = vmatpush2.msra.mxu0 0.0
  %566 = vmatprep.subr.mxu0 0.0
  %567 = vmatpush2.msra.mxu0 0.0
  %568 = vmatprep.subr.mxu0 0.0
  %569 = vmatpush2.msra.mxu0 0.0
  %570 = vmatprep.subr.mxu0 0.0
  %571 = vmatpush2.msra.mxu0 0.0
  %572 = vmatprep.mubr.f32.mxu0 0.0
  %573 = vmatmul.mubr.f32.gmra.mxu0 %v506
  %v574 = vpop.f32.mrf.mxu0
  %v575 = vadd.f32 0.0, %v574
  %v576 = vpop.f32.mrf.mxu0
  %577 = vdwg.mxu0
  %579 = vrot.lane.b32.xlu0 %v575, 7
  %v580 = vpop.permute.xlu0 %579
  %v582 = vadd.f32 %v222, %v580
  %583 = vrot.lane.b32.xlu0 %v304, 7
  %v584 = vpop.permute.xlu0 %583
  %v586 = vadd.f32 %v582, %v584
  %v587 = vtanh.pop %v586
  %589 = vrot.lane.b32.xlu0 %v587, 121
  %v590 = vpop.permute.xlu0 %589
  %v591 = vsel %vm314, %v590, 0
  %593 = vmatprep.subr.mxu0 0.0
  %594 = vmatpush1.msra.mxu0 0.0
  %595 = vmatprep.subr.mxu0 0.0
  %596 = vmatpush1.msra.mxu0 0.0
  %597 = vmatprep.subr.mxu0 0.0
  %598 = vmatpush1.msra.mxu0 0.0
  %599 = vmatprep.subr.mxu0 0.0
  %600 = vmatpush1.msra.mxu0 0.0
  %601 = vmatprep.subr.mxu0 0.0
  %602 = vmatpush1.msra.mxu0 0.0
  %603 = vmatprep.subr.mxu0 0.0
  %604 = vmatpush1.msra.mxu0 0.0
  %605 = vmatprep.subr.mxu0 0.0
  %606 = vmatpush1.msra.mxu0 0.0
  %607 = vmatprep.subr.mxu0 0.0
  %608 = vmatpush1.msra.mxu0 0.0
  %609 = vmatprep.subr.mxu0 0.0
  %610 = vmatpush1.msra.mxu0 0.0
  %611 = vmatprep.subr.mxu0 0.0
  %612 = vmatpush1.msra.mxu0 0.0
  %613 = vmatprep.subr.mxu0 0.0
  %614 = vmatpush1.msra.mxu0 0.0
  %615 = vmatprep.subr.mxu0 0.0
  %616 = vmatpush1.msra.mxu0 0.0
  %617 = vmatprep.subr.mxu0 0.0
  %618 = vmatpush1.msra.mxu0 0.0
  %619 = vmatprep.subr.mxu0 0.0
  %620 = vmatpush1.msra.mxu0 0.0
  %621 = vmatprep.subr.mxu0 0.0
  %622 = vmatpush1.msra.mxu0 0.0
  %623 = vmatprep.subr.mxu0 0.0
  %624 = vmatpush1.msra.mxu0 %v320
  %625 = vmatprep.subr.mxu0 0.0
  %626 = vmatpush2.msra.mxu0 0.0
  %627 = vmatprep.subr.mxu0 0.0
  %628 = vmatpush2.msra.mxu0 0.0
  %629 = vmatprep.subr.mxu0 0.0
  %630 = vmatpush2.msra.mxu0 0.0
  %631 = vmatprep.subr.mxu0 0.0
  %632 = vmatpush2.msra.mxu0 0.0
  %633 = vmatprep.subr.mxu0 0.0
  %634 = vmatpush2.msra.mxu0 0.0
  %635 = vmatprep.subr.mxu0 0.0
  %636 = vmatpush2.msra.mxu0 0.0
  %637 = vmatprep.subr.mxu0 0.0
  %638 = vmatpush2.msra.mxu0 0.0
  %639 = vmatprep.subr.mxu0 0.0
  %640 = vmatpush2.msra.mxu0 0.0
  %641 = vmatprep.subr.mxu0 0.0
  %642 = vmatpush2.msra.mxu0 0.0
  %643 = vmatprep.subr.mxu0 0.0
  %644 = vmatpush2.msra.mxu0 0.0
  %645 = vmatprep.subr.mxu0 0.0
  %646 = vmatpush2.msra.mxu0 0.0
  %647 = vmatprep.subr.mxu0 0.0
  %648 = vmatpush2.msra.mxu0 0.0
  %649 = vmatprep.subr.mxu0 0.0
  %650 = vmatpush2.msra.mxu0 0.0
  %651 = vmatprep.subr.mxu0 0.0
  %652 = vmatpush2.msra.mxu0 0.0
  %653 = vmatprep.subr.mxu0 0.0
  %654 = vmatpush2.msra.mxu0 0.0
  %655 = vmatprep.subr.mxu0 0.0
  %656 = vmatpush2.msra.mxu0 0.0
  %657 = vmatprep.mubr.f32.mxu0 0.0
  %658 = vmatmul.mubr.f32.gmra.mxu0 %v591
  %v659 = vpop.f32.mrf.mxu0
  %v660 = vadd.f32 %v312, %v659
  %v661 = vpop.f32.mrf.mxu0
  %662 = vdwg.mxu0
  %663 = vrot.lane.b32.xlu0 %v73, 120
  %v664 = vpop.permute.xlu0 %663
  %v666 = vmul.f32 %v660, %v664
  %667 = vrot.lane.b32.xlu0 %v498, 88
  %v668 = vpop.permute.xlu0 %667
  %v670 = vsel %vm393, %v666, %v668
  %v672 = vsel %vm401, %v670, 0
  %674 = vmatprep.subr.mxu0 0.0
  %675 = vmatpush1.msra.mxu0 0.0
  %676 = vmatprep.subr.mxu0 0.0
  %677 = vmatpush1.msra.mxu0 0.0
  %678 = vmatprep.subr.mxu0 0.0
  %679 = vmatpush1.msra.mxu0 0.0
  %680 = vmatprep.subr.mxu0 0.0
  %681 = vmatpush1.msra.mxu0 0.0
  %682 = vmatprep.subr.mxu0 0.0
  %683 = vmatpush1.msra.mxu0 0.0
  %684 = vmatprep.subr.mxu0 0.0
  %685 = vmatpush1.msra.mxu0 0.0
  %686 = vmatprep.subr.mxu0 0.0
  %687 = vmatpush1.msra.mxu0 0.0
  %688 = vmatprep.subr.mxu0 0.0
  %689 = vmatpush1.msra.mxu0 0.0
  %690 = vmatprep.subr.mxu0 0.0
  %691 = vmatpush1.msra.mxu0 0.0
  %692 = vmatprep.subr.mxu0 0.0
  %693 = vmatpush1.msra.mxu0 0.0
  %694 = vmatprep.subr.mxu0 0.0
  %695 = vmatpush1.msra.mxu0 0.0
  %696 = vmatprep.subr.mxu0 0.0
  %697 = vmatpush1.msra.mxu0 0.0
  %698 = vmatprep.subr.mxu0 0.0
  %699 = vmatpush1.msra.mxu0 0.0
  %700 = vmatprep.subr.mxu0 0.0
  %701 = vmatpush1.msra.mxu0 %v91
  %702 = vmatprep.subr.mxu0 0.0
  %703 = vmatpush1.msra.mxu0 %v90
  %704 = vmatprep.subr.mxu0 0.0
  %705 = vmatpush1.msra.mxu0 %v89
  %706 = vmatprep.subr.mxu0 0.0
  %707 = vmatpush2.msra.mxu0 0.0
  %708 = vmatprep.subr.mxu0 0.0
  %709 = vmatpush2.msra.mxu0 0.0
  %710 = vmatprep.subr.mxu0 0.0
  %711 = vmatpush2.msra.mxu0 0.0
  %712 = vmatprep.subr.mxu0 0.0
  %713 = vmatpush2.msra.mxu0 0.0
  %714 = vmatprep.subr.mxu0 0.0
  %715 = vmatpush2.msra.mxu0 0.0
  %716 = vmatprep.subr.mxu0 0.0
  %717 = vmatpush2.msra.mxu0 0.0
  %718 = vmatprep.subr.mxu0 0.0
  %719 = vmatpush2.msra.mxu0 0.0
  %720 = vmatprep.subr.mxu0 0.0
  %721 = vmatpush2.msra.mxu0 0.0
  %722 = vmatprep.subr.mxu0 0.0
  %723 = vmatpush2.msra.mxu0 0.0
  %724 = vmatprep.subr.mxu0 0.0
  %725 = vmatpush2.msra.mxu0 0.0
  %726 = vmatprep.subr.mxu0 0.0
  %727 = vmatpush2.msra.mxu0 0.0
  %728 = vmatprep.subr.mxu0 0.0
  %729 = vmatpush2.msra.mxu0 0.0
  %730 = vmatprep.subr.mxu0 0.0
  %731 = vmatpush2.msra.mxu0 0.0
  %732 = vmatprep.subr.mxu0 0.0
  %733 = vmatpush2.msra.mxu0 0.0
  %734 = vmatprep.subr.mxu0 0.0
  %735 = vmatpush2.msra.mxu0 0.0
  %736 = vmatprep.subr.mxu0 0.0
  %737 = vmatpush2.msra.mxu0 0.0
  %738 = vmatprep.mubr.f32.mxu0 0.0
  %739 = vmatmul.mubr.f32.gmra.mxu0 %v672
  %v740 = vpop.f32.mrf.mxu0
  %v741 = vadd.f32 %v399, %v740
  %v742 = vpop.f32.mrf.mxu0
  %743 = vdwg.mxu0
  %v744 = vxor.u32 %v741, 2147483648
  %v745 = vmul.f32 %v744, 1.442695
  %v746 = vpow.pop %v745
  %v747 = vadd.f32 %v746, 1.0
  %v748 = vrcp.pop %v747
  %v749 = vmul.f32 1.0, %v748
  %v750 = vtanh.pop %v741
  %v751 = vmul.f32 %v749, %v492
  %753 = vrot.lane.b32.xlu0 %v750, 96
  %v754 = vpop.permute.xlu0 %753
  %v756 = vmul.f32 %v749, %v754
  %758 = vrot.lane.b32.xlu0 %v756, 16
  %v759 = vpop.permute.xlu0 %758
  %v761 = vadd.f32 %v751, %v759
  %v762 = vtanh.pop %v761
  %764 = vrot.lane.b32.xlu0 %v762, 32
  %v765 = vpop.permute.xlu0 %764
  %v767 = vmul.f32 %v749, %v765
  %769 = vrot.lane.b32.xlu0 %v767, 80
  %v770 = vpop.permute.xlu0 %769
  %v772 = vsel %vm503, %v770, %v761
  %v774 = vsel %vm225, %v772, 0
  %776 = vmatprep.subr.mxu0 0.0
  %777 = vmatpush1.msra.mxu0 0.0
  %778 = vmatprep.subr.mxu0 0.0
  %779 = vmatpush1.msra.mxu0 0.0
  %780 = vmatprep.subr.mxu0 0.0
  %781 = vmatpush1.msra.mxu0 0.0
  %782 = vmatprep.subr.mxu0 0.0
  %783 = vmatpush1.msra.mxu0 0.0
  %784 = vmatprep.subr.mxu0 0.0
  %785 = vmatpush1.msra.mxu0 0.0
  %786 = vmatprep.subr.mxu0 0.0
  %787 = vmatpush1.msra.mxu0 0.0
  %788 = vmatprep.subr.mxu0 0.0
  %789 = vmatpush1.msra.mxu0 0.0
  %790 = vmatprep.subr.mxu0 0.0
  %791 = vmatpush1.msra.mxu0 0.0
  %792 = vmatprep.subr.mxu0 0.0
  %793 = vmatpush1.msra.mxu0 0.0
  %794 = vmatprep.subr.mxu0 0.0
  %795 = vmatpush1.msra.mxu0 0.0
  %796 = vmatprep.subr.mxu0 0.0
  %797 = vmatpush1.msra.mxu0 0.0
  %798 = vmatprep.subr.mxu0 0.0
  %799 = vmatpush1.msra.mxu0 0.0
  %800 = vmatprep.subr.mxu0 0.0
  %801 = vmatpush1.msra.mxu0 %v85
  %802 = vmatprep.subr.mxu0 0.0
  %803 = vmatpush1.msra.mxu0 %v84
  %804 = vmatprep.subr.mxu0 0.0
  %805 = vmatpush1.msra.mxu0 %v83
  %806 = vmatprep.subr.mxu0 0.0
  %807 = vmatpush1.msra.mxu0 %v82
  %808 = vmatprep.subr.mxu0 0.0
  %809 = vmatpush2.msra.mxu0 0.0
  %810 = vmatprep.subr.mxu0 0.0
  %811 = vmatpush2.msra.mxu0 0.0
  %812 = vmatprep.subr.mxu0 0.0
  %813 = vmatpush2.msra.mxu0 0.0
  %814 = vmatprep.subr.mxu0 0.0
  %815 = vmatpush2.msra.mxu0 0.0
  %816 = vmatprep.subr.mxu0 0.0
  %817 = vmatpush2.msra.mxu0 0.0
  %818 = vmatprep.subr.mxu0 0.0
  %819 = vmatpush2.msra.mxu0 0.0
  %820 = vmatprep.subr.mxu0 0.0
  %821 = vmatpush2.msra.mxu0 0.0
  %822 = vmatprep.subr.mxu0 0.0
  %823 = vmatpush2.msra.mxu0 0.0
  %824 = vmatprep.subr.mxu0 0.0
  %825 = vmatpush2.msra.mxu0 0.0
  %826 = vmatprep.subr.mxu0 0.0
  %827 = vmatpush2.msra.mxu0 0.0
  %828 = vmatprep.subr.mxu0 0.0
  %829 = vmatpush2.msra.mxu0 0.0
  %830 = vmatprep.subr.mxu0 0.0
  %831 = vmatpush2.msra.mxu0 0.0
  %832 = vmatprep.subr.mxu0 0.0
  %833 = vmatpush2.msra.mxu0 0.0
  %834 = vmatprep.subr.mxu0 0.0
  %835 = vmatpush2.msra.mxu0 0.0
  %836 = vmatprep.subr.mxu0 0.0
  %837 = vmatpush2.msra.mxu0 0.0
  %838 = vmatprep.subr.mxu0 0.0
  %839 = vmatpush2.msra.mxu0 0.0
  %840 = vmatprep.mubr.f32.mxu0 0.0
  %841 = vmatmul.mubr.f32.gmra.mxu0 %v774
  %v842 = vpop.f32.mrf.mxu0
  %v843 = vadd.f32 0.0, %v842
  %v844 = vpop.f32.mrf.mxu0
  %845 = vdwg.mxu0
  %847 = vrot.lane.b32.xlu0 %v843, 14
  %v848 = vpop.permute.xlu0 %847
  %v850 = vadd.f32 %v222, %v848
  %851 = vrot.lane.b32.xlu0 %v304, 14
  %v852 = vpop.permute.xlu0 %851
  %v854 = vadd.f32 %v850, %v852
  %v855 = vtanh.pop %v854
  %857 = vrot.lane.b32.xlu0 %v855, 114
  %v858 = vpop.permute.xlu0 %857
  %v859 = vsel %vm314, %v858, 0
  %861 = vmatprep.subr.mxu0 0.0
  %862 = vmatpush1.msra.mxu0 0.0
  %863 = vmatprep.subr.mxu0 0.0
  %864 = vmatpush1.msra.mxu0 0.0
  %865 = vmatprep.subr.mxu0 0.0
  %866 = vmatpush1.msra.mxu0 0.0
  %867 = vmatprep.subr.mxu0 0.0
  %868 = vmatpush1.msra.mxu0 0.0
  %869 = vmatprep.subr.mxu0 0.0
  %870 = vmatpush1.msra.mxu0 0.0
  %871 = vmatprep.subr.mxu0 0.0
  %872 = vmatpush1.msra.mxu0 0.0
  %873 = vmatprep.subr.mxu0 0.0
  %874 = vmatpush1.msra.mxu0 0.0
  %875 = vmatprep.subr.mxu0 0.0
  %876 = vmatpush1.msra.mxu0 0.0
  %877 = vmatprep.subr.mxu0 0.0
  %878 = vmatpush1.msra.mxu0 0.0
  %879 = vmatprep.subr.mxu0 0.0
  %880 = vmatpush1.msra.mxu0 0.0
  %881 = vmatprep.subr.mxu0 0.0
  %882 = vmatpush1.msra.mxu0 0.0
  %883 = vmatprep.subr.mxu0 0.0
  %884 = vmatpush1.msra.mxu0 0.0
  %885 = vmatprep.subr.mxu0 0.0
  %886 = vmatpush1.msra.mxu0 0.0
  %887 = vmatprep.subr.mxu0 0.0
  %888 = vmatpush1.msra.mxu0 0.0
  %889 = vmatprep.subr.mxu0 0.0
  %890 = vmatpush1.msra.mxu0 0.0
  %891 = vmatprep.subr.mxu0 0.0
  %892 = vmatpush1.msra.mxu0 %v320
  %893 = vmatprep.subr.mxu0 0.0
  %894 = vmatpush2.msra.mxu0 0.0
  %895 = vmatprep.subr.mxu0 0.0
  %896 = vmatpush2.msra.mxu0 0.0
  %897 = vmatprep.subr.mxu0 0.0
  %898 = vmatpush2.msra.mxu0 0.0
  %899 = vmatprep.subr.mxu0 0.0
  %900 = vmatpush2.msra.mxu0 0.0
  %901 = vmatprep.subr.mxu0 0.0
  %902 = vmatpush2.msra.mxu0 0.0
  %903 = vmatprep.subr.mxu0 0.0
  %904 = vmatpush2.msra.mxu0 0.0
  %905 = vmatprep.subr.mxu0 0.0
  %906 = vmatpush2.msra.mxu0 0.0
  %907 = vmatprep.subr.mxu0 0.0
  %908 = vmatpush2.msra.mxu0 0.0
  %909 = vmatprep.subr.mxu0 0.0
  %910 = vmatpush2.msra.mxu0 0.0
  %911 = vmatprep.subr.mxu0 0.0
  %912 = vmatpush2.msra.mxu0 0.0
  %913 = vmatprep.subr.mxu0 0.0
  %914 = vmatpush2.msra.mxu0 0.0
  %915 = vmatprep.subr.mxu0 0.0
  %916 = vmatpush2.msra.mxu0 0.0
  %917 = vmatprep.subr.mxu0 0.0
  %918 = vmatpush2.msra.mxu0 0.0
  %919 = vmatprep.subr.mxu0 0.0
  %920 = vmatpush2.msra.mxu0 0.0
  %921 = vmatprep.subr.mxu0 0.0
  %922 = vmatpush2.msra.mxu0 0.0
  %923 = vmatprep.subr.mxu0 0.0
  %924 = vmatpush2.msra.mxu0 0.0
  %925 = vmatprep.mubr.f32.mxu0 0.0
  %926 = vmatmul.mubr.f32.gmra.mxu0 %v859
  %v927 = vpop.f32.mrf.mxu0
  %v928 = vadd.f32 %v312, %v927
  %v929 = vpop.f32.mrf.mxu0
  %930 = vdwg.mxu0
  %931 = vrot.lane.b32.xlu0 %v73, 112
  %v932 = vpop.permute.xlu0 %931
  %v934 = vmul.f32 %v928, %v932
  %935 = vrot.lane.b32.xlu0 %v767, 88
  %v936 = vpop.permute.xlu0 %935
  %v938 = vsel %vm393, %v934, %v936
  %v940 = vsel %vm401, %v938, 0
  %942 = vmatprep.subr.mxu0 0.0
  %943 = vmatpush1.msra.mxu0 0.0
  %944 = vmatprep.subr.mxu0 0.0
  %945 = vmatpush1.msra.mxu0 0.0
  %946 = vmatprep.subr.mxu0 0.0
  %947 = vmatpush1.msra.mxu0 0.0
  %948 = vmatprep.subr.mxu0 0.0
  %949 = vmatpush1.msra.mxu0 0.0
  %950 = vmatprep.subr.mxu0 0.0
  %951 = vmatpush1.msra.mxu0 0.0
  %952 = vmatprep.subr.mxu0 0.0
  %953 = vmatpush1.msra.mxu0 0.0
  %954 = vmatprep.subr.mxu0 0.0
  %955 = vmatpush1.msra.mxu0 0.0
  %956 = vmatprep.subr.mxu0 0.0
  %957 = vmatpush1.msra.mxu0 0.0
  %958 = vmatprep.subr.mxu0 0.0
  %959 = vmatpush1.msra.mxu0 0.0
  %960 = vmatprep.subr.mxu0 0.0
  %961 = vmatpush1.msra.mxu0 0.0
  %962 = vmatprep.subr.mxu0 0.0
  %963 = vmatpush1.msra.mxu0 0.0
  %964 = vmatprep.subr.mxu0 0.0
  %965 = vmatpush1.msra.mxu0 0.0
  %966 = vmatprep.subr.mxu0 0.0
  %967 = vmatpush1.msra.mxu0 0.0
  %968 = vmatprep.subr.mxu0 0.0
  %969 = vmatpush1.msra.mxu0 %v91
  %970 = vmatprep.subr.mxu0 0.0
  %971 = vmatpush1.msra.mxu0 %v90
  %972 = vmatprep.subr.mxu0 0.0
  %973 = vmatpush1.msra.mxu0 %v89
  %974 = vmatprep.subr.mxu0 0.0
  %975 = vmatpush2.msra.mxu0 0.0
  %976 = vmatprep.subr.mxu0 0.0
  %977 = vmatpush2.msra.mxu0 0.0
  %978 = vmatprep.subr.mxu0 0.0
  %979 = vmatpush2.msra.mxu0 0.0
  %980 = vmatprep.subr.mxu0 0.0
  %981 = vmatpush2.msra.mxu0 0.0
  %982 = vmatprep.subr.mxu0 0.0
  %983 = vmatpush2.msra.mxu0 0.0
  %984 = vmatprep.subr.mxu0 0.0
  %985 = vmatpush2.msra.mxu0 0.0
  %986 = vmatprep.subr.mxu0 0.0
  %987 = vmatpush2.msra.mxu0 0.0
  %988 = vmatprep.subr.mxu0 0.0
  %989 = vmatpush2.msra.mxu0 0.0
  %990 = vmatprep.subr.mxu0 0.0
  %991 = vmatpush2.msra.mxu0 0.0
  %992 = vmatprep.subr.mxu0 0.0
  %993 = vmatpush2.msra.mxu0 0.0
  %994 = vmatprep.subr.mxu0 0.0
  %995 = vmatpush2.msra.mxu0 0.0
  %996 = vmatprep.subr.mxu0 0.0
  %997 = vmatpush2.msra.mxu0 0.0
  %998 = vmatprep.subr.mxu0 0.0
  %999 = vmatpush2.msra.mxu0 0.0
  %1000 = vmatprep.subr.mxu0 0.0
  %1001 = vmatpush2.msra.mxu0 0.0
  %1002 = vmatprep.subr.mxu0 0.0
  %1003 = vmatpush2.msra.mxu0 0.0
  %1004 = vmatprep.subr.mxu0 0.0
  %1005 = vmatpush2.msra.mxu0 0.0
  %1006 = vmatprep.mubr.f32.mxu0 0.0
  %1007 = vmatmul.mubr.f32.gmra.mxu0 %v940
  %v1008 = vpop.f32.mrf.mxu0
  %v1009 = vadd.f32 %v399, %v1008
  %v1010 = vpop.f32.mrf.mxu0
  %1011 = vdwg.mxu0
  %v1012 = vxor.u32 %v1009, 2147483648
  %v1013 = vmul.f32 %v1012, 1.442695
  %v1014 = vpow.pop %v1013
  %v1015 = vadd.f32 %v1014, 1.0
  %v1016 = vrcp.pop %v1015
  %v1017 = vmul.f32 1.0, %v1016
  %v1018 = vtanh.pop %v1009
  %v1019 = vmul.f32 %v1017, %v761
  %1021 = vrot.lane.b32.xlu0 %v1018, 96
  %v1022 = vpop.permute.xlu0 %1021
  %v1024 = vmul.f32 %v1017, %v1022
  %1026 = vrot.lane.b32.xlu0 %v1024, 16
  %v1027 = vpop.permute.xlu0 %1026
  %v1029 = vadd.f32 %v1019, %v1027
  %v1030 = vtanh.pop %v1029
  %1032 = vrot.lane.b32.xlu0 %v1030, 32
  %v1033 = vpop.permute.xlu0 %1032
  %v1035 = vmul.f32 %v1017, %v1033
  %1037 = vrot.lane.b32.xlu0 %v1035, 80
  %v1038 = vpop.permute.xlu0 %1037
  %v1040 = vsel %vm503, %v1038, %v1029
  %v1042 = vsel %vm225, %v1040, 0
  %1044 = vmatprep.subr.mxu0 0.0
  %1045 = vmatpush1.msra.mxu0 0.0
  %1046 = vmatprep.subr.mxu0 0.0
  %1047 = vmatpush1.msra.mxu0 0.0
  %1048 = vmatprep.subr.mxu0 0.0
  %1049 = vmatpush1.msra.mxu0 0.0
  %1050 = vmatprep.subr.mxu0 0.0
  %1051 = vmatpush1.msra.mxu0 0.0
  %1052 = vmatprep.subr.mxu0 0.0
  %1053 = vmatpush1.msra.mxu0 0.0
  %1054 = vmatprep.subr.mxu0 0.0
  %1055 = vmatpush1.msra.mxu0 0.0
  %1056 = vmatprep.subr.mxu0 0.0
  %1057 = vmatpush1.msra.mxu0 0.0
  %1058 = vmatprep.subr.mxu0 0.0
  %1059 = vmatpush1.msra.mxu0 0.0
  %1060 = vmatprep.subr.mxu0 0.0
  %1061 = vmatpush1.msra.mxu0 0.0
  %1062 = vmatprep.subr.mxu0 0.0
  %1063 = vmatpush1.msra.mxu0 0.0
  %1064 = vmatprep.subr.mxu0 0.0
  %1065 = vmatpush1.msra.mxu0 0.0
  %1066 = vmatprep.subr.mxu0 0.0
  %1067 = vmatpush1.msra.mxu0 0.0
  %1068 = vmatprep.subr.mxu0 0.0
  %1069 = vmatpush1.msra.mxu0 %v85
  %1070 = vmatprep.subr.mxu0 0.0
  %1071 = vmatpush1.msra.mxu0 %v84
  %1072 = vmatprep.subr.mxu0 0.0
  %1073 = vmatpush1.msra.mxu0 %v83
  %1074 = vmatprep.subr.mxu0 0.0
  %1075 = vmatpush1.msra.mxu0 %v82
  %1076 = vmatprep.subr.mxu0 0.0
  %1077 = vmatpush2.msra.mxu0 0.0
  %1078 = vmatprep.subr.mxu0 0.0
  %1079 = vmatpush2.msra.mxu0 0.0
  %1080 = vmatprep.subr.mxu0 0.0
  %1081 = vmatpush2.msra.mxu0 0.0
  %1082 = vmatprep.subr.mxu0 0.0
  %1083 = vmatpush2.msra.mxu0 0.0
  %1084 = vmatprep.subr.mxu0 0.0
  %1085 = vmatpush2.msra.mxu0 0.0
  %1086 = vmatprep.subr.mxu0 0.0
  %1087 = vmatpush2.msra.mxu0 0.0
  %1088 = vmatprep.subr.mxu0 0.0
  %1089 = vmatpush2.msra.mxu0 0.0
  %1090 = vmatprep.subr.mxu0 0.0
  %1091 = vmatpush2.msra.mxu0 0.0
  %1092 = vmatprep.subr.mxu0 0.0
  %1093 = vmatpush2.msra.mxu0 0.0
  %1094 = vmatprep.subr.mxu0 0.0
  %1095 = vmatpush2.msra.mxu0 0.0
  %1096 = vmatprep.subr.mxu0 0.0
  %1097 = vmatpush2.msra.mxu0 0.0
  %1098 = vmatprep.subr.mxu0 0.0
  %1099 = vmatpush2.msra.mxu0 0.0
  %1100 = vmatprep.subr.mxu0 0.0
  %1101 = vmatpush2.msra.mxu0 0.0
  %1102 = vmatprep.subr.mxu0 0.0
  %1103 = vmatpush2.msra.mxu0 0.0
  %1104 = vmatprep.subr.mxu0 0.0
  %1105 = vmatpush2.msra.mxu0 0.0
  %1106 = vmatprep.subr.mxu0 0.0
  %1107 = vmatpush2.msra.mxu0 0.0
  %1108 = vmatprep.mubr.f32.mxu0 0.0
  %1109 = vmatmul.mubr.f32.gmra.mxu0 %v1042
  %v1110 = vpop.f32.mrf.mxu0
  %v1111 = vadd.f32 0.0, %v1110
  %v1112 = vpop.f32.mrf.mxu0
  %1113 = vdwg.mxu0
  %1115 = vrot.lane.b32.xlu0 %v1111, 21
  %v1116 = vpop.permute.xlu0 %1115
  %v1118 = vadd.f32 %v222, %v1116
  %1119 = vrot.lane.b32.xlu0 %v304, 21
  %v1120 = vpop.permute.xlu0 %1119
  %v1122 = vadd.f32 %v1118, %v1120
  %v1123 = vtanh.pop %v1122
  %1125 = vrot.lane.b32.xlu0 %v1123, 107
  %v1126 = vpop.permute.xlu0 %1125
  %v1127 = vsel %vm314, %v1126, 0
  %1129 = vmatprep.subr.mxu0 0.0
  %1130 = vmatpush1.msra.mxu0 0.0
  %1131 = vmatprep.subr.mxu0 0.0
  %1132 = vmatpush1.msra.mxu0 0.0
  %1133 = vmatprep.subr.mxu0 0.0
  %1134 = vmatpush1.msra.mxu0 0.0
  %1135 = vmatprep.subr.mxu0 0.0
  %1136 = vmatpush1.msra.mxu0 0.0
  %1137 = vmatprep.subr.mxu0 0.0
  %1138 = vmatpush1.msra.mxu0 0.0
  %1139 = vmatprep.subr.mxu0 0.0
  %1140 = vmatpush1.msra.mxu0 0.0
  %1141 = vmatprep.subr.mxu0 0.0
  %1142 = vmatpush1.msra.mxu0 0.0
  %1143 = vmatprep.subr.mxu0 0.0
  %1144 = vmatpush1.msra.mxu0 0.0
  %1145 = vmatprep.subr.mxu0 0.0
  %1146 = vmatpush1.msra.mxu0 0.0
  %1147 = vmatprep.subr.mxu0 0.0
  %1148 = vmatpush1.msra.mxu0 0.0
  %1149 = vmatprep.subr.mxu0 0.0
  %1150 = vmatpush1.msra.mxu0 0.0
  %1151 = vmatprep.subr.mxu0 0.0
  %1152 = vmatpush1.msra.mxu0 0.0
  %1153 = vmatprep.subr.mxu0 0.0
  %1154 = vmatpush1.msra.mxu0 0.0
  %1155 = vmatprep.subr.mxu0 0.0
  %1156 = vmatpush1.msra.mxu0 0.0
  %1157 = vmatprep.subr.mxu0 0.0
  %1158 = vmatpush1.msra.mxu0 0.0
  %1159 = vmatprep.subr.mxu0 0.0
  %1160 = vmatpush1.msra.mxu0 %v320
  %1161 = vmatprep.subr.mxu0 0.0
  %1162 = vmatpush2.msra.mxu0 0.0
  %1163 = vmatprep.subr.mxu0 0.0
  %1164 = vmatpush2.msra.mxu0 0.0
  %1165 = vmatprep.subr.mxu0 0.0
  %1166 = vmatpush2.msra.mxu0 0.0
  %1167 = vmatprep.subr.mxu0 0.0
  %1168 = vmatpush2.msra.mxu0 0.0
  %1169 = vmatprep.subr.mxu0 0.0
  %1170 = vmatpush2.msra.mxu0 0.0
  %1171 = vmatprep.subr.mxu0 0.0
  %1172 = vmatpush2.msra.mxu0 0.0
  %1173 = vmatprep.subr.mxu0 0.0
  %1174 = vmatpush2.msra.mxu0 0.0
  %1175 = vmatprep.subr.mxu0 0.0
  %1176 = vmatpush2.msra.mxu0 0.0
  %1177 = vmatprep.subr.mxu0 0.0
  %1178 = vmatpush2.msra.mxu0 0.0
  %1179 = vmatprep.subr.mxu0 0.0
  %1180 = vmatpush2.msra.mxu0 0.0
  %1181 = vmatprep.subr.mxu0 0.0
  %1182 = vmatpush2.msra.mxu0 0.0
  %1183 = vmatprep.subr.mxu0 0.0
  %1184 = vmatpush2.msra.mxu0 0.0
  %1185 = vmatprep.subr.mxu0 0.0
  %1186 = vmatpush2.msra.mxu0 0.0
  %1187 = vmatprep.subr.mxu0 0.0
  %1188 = vmatpush2.msra.mxu0 0.0
  %1189 = vmatprep.subr.mxu0 0.0
  %1190 = vmatpush2.msra.mxu0 0.0
  %1191 = vmatprep.subr.mxu0 0.0
  %1192 = vmatpush2.msra.mxu0 0.0
  %1193 = vmatprep.mubr.f32.mxu0 0.0
  %1194 = vmatmul.mubr.f32.gmra.mxu0 %v1127
  %v1195 = vpop.f32.mrf.mxu0
  %v1196 = vadd.f32 %v312, %v1195
  %v1197 = vpop.f32.mrf.mxu0
  %1198 = vdwg.mxu0
  %1199 = vrot.lane.b32.xlu0 %v73, 104
  %v1200 = vpop.permute.xlu0 %1199
  %v1202 = vmul.f32 %v1196, %v1200
  %1203 = vrot.lane.b32.xlu0 %v1035, 88
  %v1204 = vpop.permute.xlu0 %1203
  %v1206 = vsel %vm393, %v1202, %v1204
  %v1208 = vsel %vm401, %v1206, 0
  %1210 = vmatprep.subr.mxu0 0.0
  %1211 = vmatpush1.msra.mxu0 0.0
  %1212 = vmatprep.subr.mxu0 0.0
  %1213 = vmatpush1.msra.mxu0 0.0
  %1214 = vmatprep.subr.mxu0 0.0
  %1215 = vmatpush1.msra.mxu0 0.0
  %1216 = vmatprep.subr.mxu0 0.0
  %1217 = vmatpush1.msra.mxu0 0.0
  %1218 = vmatprep.subr.mxu0 0.0
  %1219 = vmatpush1.msra.mxu0 0.0
  %1220 = vmatprep.subr.mxu0 0.0
  %1221 = vmatpush1.msra.mxu0 0.0
  %1222 = vmatprep.subr.mxu0 0.0
  %1223 = vmatpush1.msra.mxu0 0.0
  %1224 = vmatprep.subr.mxu0 0.0
  %1225 = vmatpush1.msra.mxu0 0.0
  %1226 = vmatprep.subr.mxu0 0.0
  %1227 = vmatpush1.msra.mxu0 0.0
  %1228 = vmatprep.subr.mxu0 0.0
  %1229 = vmatpush1.msra.mxu0 0.0
  %1230 = vmatprep.subr.mxu0 0.0
  %1231 = vmatpush1.msra.mxu0 0.0
  %1232 = vmatprep.subr.mxu0 0.0
  %1233 = vmatpush1.msra.mxu0 0.0
  %1234 = vmatprep.subr.mxu0 0.0
  %1235 = vmatpush1.msra.mxu0 0.0
  %1236 = vmatprep.subr.mxu0 0.0
  %1237 = vmatpush1.msra.mxu0 %v91
  %1238 = vmatprep.subr.mxu0 0.0
  %1239 = vmatpush1.msra.mxu0 %v90
  %1240 = vmatprep.subr.mxu0 0.0
  %1241 = vmatpush1.msra.mxu0 %v89
  %1242 = vmatprep.subr.mxu0 0.0
  %1243 = vmatpush2.msra.mxu0 0.0
  %1244 = vmatprep.subr.mxu0 0.0
  %1245 = vmatpush2.msra.mxu0 0.0
  %1246 = vmatprep.subr.mxu0 0.0
  %1247 = vmatpush2.msra.mxu0 0.0
  %1248 = vmatprep.subr.mxu0 0.0
  %1249 = vmatpush2.msra.mxu0 0.0
  %1250 = vmatprep.subr.mxu0 0.0
  %1251 = vmatpush2.msra.mxu0 0.0
  %1252 = vmatprep.subr.mxu0 0.0
  %1253 = vmatpush2.msra.mxu0 0.0
  %1254 = vmatprep.subr.mxu0 0.0
  %1255 = vmatpush2.msra.mxu0 0.0
  %1256 = vmatprep.subr.mxu0 0.0
  %1257 = vmatpush2.msra.mxu0 0.0
  %1258 = vmatprep.subr.mxu0 0.0
  %1259 = vmatpush2.msra.mxu0 0.0
  %1260 = vmatprep.subr.mxu0 0.0
  %1261 = vmatpush2.msra.mxu0 0.0
  %1262 = vmatprep.subr.mxu0 0.0
  %1263 = vmatpush2.msra.mxu0 0.0
  %1264 = vmatprep.subr.mxu0 0.0
  %1265 = vmatpush2.msra.mxu0 0.0
  %1266 = vmatprep.subr.mxu0 0.0
  %1267 = vmatpush2.msra.mxu0 0.0
  %1268 = vmatprep.subr.mxu0 0.0
  %1269 = vmatpush2.msra.mxu0 0.0
  %1270 = vmatprep.subr.mxu0 0.0
  %1271 = vmatpush2.msra.mxu0 0.0
  %1272 = vmatprep.subr.mxu0 0.0
  %1273 = vmatpush2.msra.mxu0 0.0
  %1274 = vmatprep.mubr.f32.mxu0 0.0
  %1275 = vmatmul.mubr.f32.gmra.mxu0 %v1208
  %v1276 = vpop.f32.mrf.mxu0
  %v1277 = vadd.f32 %v399, %v1276
  %v1278 = vpop.f32.mrf.mxu0
  %1279 = vdwg.mxu0
  %v1280 = vxor.u32 %v1277, 2147483648
  %v1281 = vmul.f32 %v1280, 1.442695
  %v1282 = vpow.pop %v1281
  %v1283 = vadd.f32 %v1282, 1.0
  %v1284 = vrcp.pop %v1283
  %v1285 = vmul.f32 1.0, %v1284
  %v1286 = vtanh.pop %v1277
  %v1287 = vmul.f32 %v1285, %v1029
  %1289 = vrot.lane.b32.xlu0 %v1286, 96
  %v1290 = vpop.permute.xlu0 %1289
  %v1292 = vmul.f32 %v1285, %v1290
  %1294 = vrot.lane.b32.xlu0 %v1292, 16
  %v1295 = vpop.permute.xlu0 %1294
  %v1297 = vadd.f32 %v1287, %v1295
  %v1298 = vtanh.pop %v1297
  %1300 = vrot.lane.b32.xlu0 %v1298, 32
  %v1301 = vpop.permute.xlu0 %1300
  %v1303 = vmul.f32 %v1285, %v1301
  %1305 = vrot.lane.b32.xlu0 %v1303, 80
  %v1306 = vpop.permute.xlu0 %1305
  %v1308 = vsel %vm503, %v1306, %v1297
  %v1310 = vsel %vm225, %v1308, 0
  %1312 = vmatprep.subr.mxu0 0.0
  %1313 = vmatpush1.msra.mxu0 0.0
  %1314 = vmatprep.subr.mxu0 0.0
  %1315 = vmatpush1.msra.mxu0 0.0
  %1316 = vmatprep.subr.mxu0 0.0
  %1317 = vmatpush1.msra.mxu0 0.0
  %1318 = vmatprep.subr.mxu0 0.0
  %1319 = vmatpush1.msra.mxu0 0.0
  %1320 = vmatprep.subr.mxu0 0.0
  %1321 = vmatpush1.msra.mxu0 0.0
  %1322 = vmatprep.subr.mxu0 0.0
  %1323 = vmatpush1.msra.mxu0 0.0
  %1324 = vmatprep.subr.mxu0 0.0
  %1325 = vmatpush1.msra.mxu0 0.0
  %1326 = vmatprep.subr.mxu0 0.0
  %1327 = vmatpush1.msra.mxu0 0.0
  %1328 = vmatprep.subr.mxu0 0.0
  %1329 = vmatpush1.msra.mxu0 0.0
  %1330 = vmatprep.subr.mxu0 0.0
  %1331 = vmatpush1.msra.mxu0 0.0
  %1332 = vmatprep.subr.mxu0 0.0
  %1333 = vmatpush1.msra.mxu0 0.0
  %1334 = vmatprep.subr.mxu0 0.0
  %1335 = vmatpush1.msra.mxu0 0.0
  %1336 = vmatprep.subr.mxu0 0.0
  %1337 = vmatpush1.msra.mxu0 %v85
  %1338 = vmatprep.subr.mxu0 0.0
  %1339 = vmatpush1.msra.mxu0 %v84
  %1340 = vmatprep.subr.mxu0 0.0
  %1341 = vmatpush1.msra.mxu0 %v83
  %1342 = vmatprep.subr.mxu0 0.0
  %1343 = vmatpush1.msra.mxu0 %v82
  %1344 = vmatprep.subr.mxu0 0.0
  %1345 = vmatpush2.msra.mxu0 0.0
  %1346 = vmatprep.subr.mxu0 0.0
  %1347 = vmatpush2.msra.mxu0 0.0
  %1348 = vmatprep.subr.mxu0 0.0
  %1349 = vmatpush2.msra.mxu0 0.0
  %1350 = vmatprep.subr.mxu0 0.0
  %1351 = vmatpush2.msra.mxu0 0.0
  %1352 = vmatprep.subr.mxu0 0.0
  %1353 = vmatpush2.msra.mxu0 0.0
  %1354 = vmatprep.subr.mxu0 0.0
  %1355 = vmatpush2.msra.mxu0 0.0
  %1356 = vmatprep.subr.mxu0 0.0
  %1357 = vmatpush2.msra.mxu0 0.0
  %1358 = vmatprep.subr.mxu0 0.0
  %1359 = vmatpush2.msra.mxu0 0.0
  %1360 = vmatprep.subr.mxu0 0.0
  %1361 = vmatpush2.msra.mxu0 0.0
  %1362 = vmatprep.subr.mxu0 0.0
  %1363 = vmatpush2.msra.mxu0 0.0
  %1364 = vmatprep.subr.mxu0 0.0
  %1365 = vmatpush2.msra.mxu0 0.0
  %1366 = vmatprep.subr.mxu0 0.0
  %1367 = vmatpush2.msra.mxu0 0.0
  %1368 = vmatprep.subr.mxu0 0.0
  %1369 = vmatpush2.msra.mxu0 0.0
  %1370 = vmatprep.subr.mxu0 0.0
  %1371 = vmatpush2.msra.mxu0 0.0
  %1372 = vmatprep.subr.mxu0 0.0
  %1373 = vmatpush2.msra.mxu0 0.0
  %1374 = vmatprep.subr.mxu0 0.0
  %1375 = vmatpush2.msra.mxu0 0.0
  %1376 = vmatprep.mubr.f32.mxu0 0.0
  %1377 = vmatmul.mubr.f32.gmra.mxu0 %v1310
  %v1378 = vpop.f32.mrf.mxu0
  %v1379 = vadd.f32 0.0, %v1378
  %v1380 = vpop.f32.mrf.mxu0
  %1381 = vdwg.mxu0
  %1383 = vrot.lane.b32.xlu0 %v1379, 28
  %v1384 = vpop.permute.xlu0 %1383
  %v1386 = vadd.f32 %v222, %v1384
  %1387 = vrot.lane.b32.xlu0 %v304, 28
  %v1388 = vpop.permute.xlu0 %1387
  %v1390 = vadd.f32 %v1386, %v1388
  %v1391 = vtanh.pop %v1390
  %1393 = vrot.lane.b32.xlu0 %v1391, 100
  %v1394 = vpop.permute.xlu0 %1393
  %v1395 = vsel %vm314, %v1394, 0
  %1397 = vmatprep.subr.mxu0 0.0
  %1398 = vmatpush1.msra.mxu0 0.0
  %1399 = vmatprep.subr.mxu0 0.0
  %1400 = vmatpush1.msra.mxu0 0.0
  %1401 = vmatprep.subr.mxu0 0.0
  %1402 = vmatpush1.msra.mxu0 0.0
  %1403 = vmatprep.subr.mxu0 0.0
  %1404 = vmatpush1.msra.mxu0 0.0
  %1405 = vmatprep.subr.mxu0 0.0
  %1406 = vmatpush1.msra.mxu0 0.0
  %1407 = vmatprep.subr.mxu0 0.0
  %1408 = vmatpush1.msra.mxu0 0.0
  %1409 = vmatprep.subr.mxu0 0.0
  %1410 = vmatpush1.msra.mxu0 0.0
  %1411 = vmatprep.subr.mxu0 0.0
  %1412 = vmatpush1.msra.mxu0 0.0
  %1413 = vmatprep.subr.mxu0 0.0
  %1414 = vmatpush1.msra.mxu0 0.0
  %1415 = vmatprep.subr.mxu0 0.0
  %1416 = vmatpush1.msra.mxu0 0.0
  %1417 = vmatprep.subr.mxu0 0.0
  %1418 = vmatpush1.msra.mxu0 0.0
  %1419 = vmatprep.subr.mxu0 0.0
  %1420 = vmatpush1.msra.mxu0 0.0
  %1421 = vmatprep.subr.mxu0 0.0
  %1422 = vmatpush1.msra.mxu0 0.0
  %1423 = vmatprep.subr.mxu0 0.0
  %1424 = vmatpush1.msra.mxu0 0.0
  %1425 = vmatprep.subr.mxu0 0.0
  %1426 = vmatpush1.msra.mxu0 0.0
  %1427 = vmatprep.subr.mxu0 0.0
  %1428 = vmatpush1.msra.mxu0 %v320
  %1429 = vmatprep.subr.mxu0 0.0
  %1430 = vmatpush2.msra.mxu0 0.0
  %1431 = vmatprep.subr.mxu0 0.0
  %1432 = vmatpush2.msra.mxu0 0.0
  %1433 = vmatprep.subr.mxu0 0.0
  %1434 = vmatpush2.msra.mxu0 0.0
  %1435 = vmatprep.subr.mxu0 0.0
  %1436 = vmatpush2.msra.mxu0 0.0
  %1437 = vmatprep.subr.mxu0 0.0
  %1438 = vmatpush2.msra.mxu0 0.0
  %1439 = vmatprep.subr.mxu0 0.0
  %1440 = vmatpush2.msra.mxu0 0.0
  %1441 = vmatprep.subr.mxu0 0.0
  %1442 = vmatpush2.msra.mxu0 0.0
  %1443 = vmatprep.subr.mxu0 0.0
  %1444 = vmatpush2.msra.mxu0 0.0
  %1445 = vmatprep.subr.mxu0 0.0
  %1446 = vmatpush2.msra.mxu0 0.0
  %1447 = vmatprep.subr.mxu0 0.0
  %1448 = vmatpush2.msra.mxu0 0.0
  %1449 = vmatprep.subr.mxu0 0.0
  %1450 = vmatpush2.msra.mxu0 0.0
  %1451 = vmatprep.subr.mxu0 0.0
  %1452 = vmatpush2.msra.mxu0 0.0
  %1453 = vmatprep.subr.mxu0 0.0
  %1454 = vmatpush2.msra.mxu0 0.0
  %1455 = vmatprep.subr.mxu0 0.0
  %1456 = vmatpush2.msra.mxu0 0.0
  %1457 = vmatprep.subr.mxu0 0.0
  %1458 = vmatpush2.msra.mxu0 0.0
  %1459 = vmatprep.subr.mxu0 0.0
  %1460 = vmatpush2.msra.mxu0 0.0
  %1461 = vmatprep.mubr.f32.mxu0 0.0
  %1462 = vmatmul.mubr.f32.gmra.mxu0 %v1395
  %v1463 = vpop.f32.mrf.mxu0
  %v1464 = vadd.f32 %v312, %v1463
  %v1465 = vpop.f32.mrf.mxu0
  %1466 = vdwg.mxu0
  %1467 = vrot.lane.b32.xlu0 %v73, 96
  %v1468 = vpop.permute.xlu0 %1467
  %v1470 = vmul.f32 %v1464, %v1468
  %1471 = vrot.lane.b32.xlu0 %v1303, 88
  %v1472 = vpop.permute.xlu0 %1471
  %v1474 = vsel %vm393, %v1470, %v1472
  %v1476 = vsel %vm401, %v1474, 0
  %1478 = vmatprep.subr.mxu0 0.0
  %1479 = vmatpush1.msra.mxu0 0.0
  %1480 = vmatprep.subr.mxu0 0.0
  %1481 = vmatpush1.msra.mxu0 0.0
  %1482 = vmatprep.subr.mxu0 0.0
  %1483 = vmatpush1.msra.mxu0 0.0
  %1484 = vmatprep.subr.mxu0 0.0
  %1485 = vmatpush1.msra.mxu0 0.0
  %1486 = vmatprep.subr.mxu0 0.0
  %1487 = vmatpush1.msra.mxu0 0.0
  %1488 = vmatprep.subr.mxu0 0.0
  %1489 = vmatpush1.msra.mxu0 0.0
  %1490 = vmatprep.subr.mxu0 0.0
  %1491 = vmatpush1.msra.mxu0 0.0
  %1492 = vmatprep.subr.mxu0 0.0
  %1493 = vmatpush1.msra.mxu0 0.0
  %1494 = vmatprep.subr.mxu0 0.0
  %1495 = vmatpush1.msra.mxu0 0.0
  %1496 = vmatprep.subr.mxu0 0.0
  %1497 = vmatpush1.msra.mxu0 0.0
  %1498 = vmatprep.subr.mxu0 0.0
  %1499 = vmatpush1.msra.mxu0 0.0
  %1500 = vmatprep.subr.mxu0 0.0
  %1501 = vmatpush1.msra.mxu0 0.0
  %1502 = vmatprep.subr.mxu0 0.0
  %1503 = vmatpush1.msra.mxu0 0.0
  %1504 = vmatprep.subr.mxu0 0.0
  %1505 = vmatpush1.msra.mxu0 %v91
  %1506 = vmatprep.subr.mxu0 0.0
  %1507 = vmatpush1.msra.mxu0 %v90
  %1508 = vmatprep.subr.mxu0 0.0
  %1509 = vmatpush1.msra.mxu0 %v89
  %1510 = vmatprep.subr.mxu0 0.0
  %1511 = vmatpush2.msra.mxu0 0.0
  %1512 = vmatprep.subr.mxu0 0.0
  %1513 = vmatpush2.msra.mxu0 0.0
  %1514 = vmatprep.subr.mxu0 0.0
  %1515 = vmatpush2.msra.mxu0 0.0
  %1516 = vmatprep.subr.mxu0 0.0
  %1517 = vmatpush2.msra.mxu0 0.0
  %1518 = vmatprep.subr.mxu0 0.0
  %1519 = vmatpush2.msra.mxu0 0.0
  %1520 = vmatprep.subr.mxu0 0.0
  %1521 = vmatpush2.msra.mxu0 0.0
  %1522 = vmatprep.subr.mxu0 0.0
  %1523 = vmatpush2.msra.mxu0 0.0
  %1524 = vmatprep.subr.mxu0 0.0
  %1525 = vmatpush2.msra.mxu0 0.0
  %1526 = vmatprep.subr.mxu0 0.0
  %1527 = vmatpush2.msra.mxu0 0.0
  %1528 = vmatprep.subr.mxu0 0.0
  %1529 = vmatpush2.msra.mxu0 0.0
  %1530 = vmatprep.subr.mxu0 0.0
  %1531 = vmatpush2.msra.mxu0 0.0
  %1532 = vmatprep.subr.mxu0 0.0
  %1533 = vmatpush2.msra.mxu0 0.0
  %1534 = vmatprep.subr.mxu0 0.0
  %1535 = vmatpush2.msra.mxu0 0.0
  %1536 = vmatprep.subr.mxu0 0.0
  %1537 = vmatpush2.msra.mxu0 0.0
  %1538 = vmatprep.subr.mxu0 0.0
  %1539 = vmatpush2.msra.mxu0 0.0
  %1540 = vmatprep.subr.mxu0 0.0
  %1541 = vmatpush2.msra.mxu0 0.0
  %1542 = vmatprep.mubr.f32.mxu0 0.0
  %1543 = vmatmul.mubr.f32.gmra.mxu0 %v1476
  %v1544 = vpop.f32.mrf.mxu0
  %v1545 = vadd.f32 %v399, %v1544
  %v1546 = vpop.f32.mrf.mxu0
  %1547 = vdwg.mxu0
  %v1548 = vxor.u32 %v1545, 2147483648
  %v1549 = vmul.f32 %v1548, 1.442695
  %v1550 = vpow.pop %v1549
  %v1551 = vadd.f32 %v1550, 1.0
  %v1552 = vrcp.pop %v1551
  %v1553 = vmul.f32 1.0, %v1552
  %v1554 = vtanh.pop %v1545
  %v1555 = vmul.f32 %v1553, %v1297
  %1557 = vrot.lane.b32.xlu0 %v1554, 96
  %v1558 = vpop.permute.xlu0 %1557
  %v1560 = vmul.f32 %v1553, %v1558
  %1562 = vrot.lane.b32.xlu0 %v1560, 16
  %v1563 = vpop.permute.xlu0 %1562
  %v1565 = vadd.f32 %v1555, %v1563
  %v1566 = vtanh.pop %v1565
  %1568 = vrot.lane.b32.xlu0 %v1566, 32
  %v1569 = vpop.permute.xlu0 %1568
  %v1571 = vmul.f32 %v1553, %v1569
  %1573 = vrot.lane.b32.xlu0 %v1571, 80
  %v1574 = vpop.permute.xlu0 %1573
  %v1576 = vsel %vm503, %v1574, %v1565
  %v1578 = vsel %vm225, %v1576, 0
  %1580 = vmatprep.subr.mxu0 0.0
  %1581 = vmatpush1.msra.mxu0 0.0
  %1582 = vmatprep.subr.mxu0 0.0
  %1583 = vmatpush1.msra.mxu0 0.0
  %1584 = vmatprep.subr.mxu0 0.0
  %1585 = vmatpush1.msra.mxu0 0.0
  %1586 = vmatprep.subr.mxu0 0.0
  %1587 = vmatpush1.msra.mxu0 0.0
  %1588 = vmatprep.subr.mxu0 0.0
  %1589 = vmatpush1.msra.mxu0 0.0
  %1590 = vmatprep.subr.mxu0 0.0
  %1591 = vmatpush1.msra.mxu0 0.0
  %1592 = vmatprep.subr.mxu0 0.0
  %1593 = vmatpush1.msra.mxu0 0.0
  %1594 = vmatprep.subr.mxu0 0.0
  %1595 = vmatpush1.msra.mxu0 0.0
  %1596 = vmatprep.subr.mxu0 0.0
  %1597 = vmatpush1.msra.mxu0 0.0
  %1598 = vmatprep.subr.mxu0 0.0
  %1599 = vmatpush1.msra.mxu0 0.0
  %1600 = vmatprep.subr.mxu0 0.0
  %1601 = vmatpush1.msra.mxu0 0.0
  %1602 = vmatprep.subr.mxu0 0.0
  %1603 = vmatpush1.msra.mxu0 0.0
  %1604 = vmatprep.subr.mxu0 0.0
  %1605 = vmatpush1.msra.mxu0 %v85
  %1606 = vmatprep.subr.mxu0 0.0
  %1607 = vmatpush1.msra.mxu0 %v84
  %1608 = vmatprep.subr.mxu0 0.0
  %1609 = vmatpush1.msra.mxu0 %v83
  %1610 = vmatprep.subr.mxu0 0.0
  %1611 = vmatpush1.msra.mxu0 %v82
  %1612 = vmatprep.subr.mxu0 0.0
  %1613 = vmatpush2.msra.mxu0 0.0
  %1614 = vmatprep.subr.mxu0 0.0
  %1615 = vmatpush2.msra.mxu0 0.0
  %1616 = vmatprep.subr.mxu0 0.0
  %1617 = vmatpush2.msra.mxu0 0.0
  %1618 = vmatprep.subr.mxu0 0.0
  %1619 = vmatpush2.msra.mxu0 0.0
  %1620 = vmatprep.subr.mxu0 0.0
  %1621 = vmatpush2.msra.mxu0 0.0
  %1622 = vmatprep.subr.mxu0 0.0
  %1623 = vmatpush2.msra.mxu0 0.0
  %1624 = vmatprep.subr.mxu0 0.0
  %1625 = vmatpush2.msra.mxu0 0.0
  %1626 = vmatprep.subr.mxu0 0.0
  %1627 = vmatpush2.msra.mxu0 0.0
  %1628 = vmatprep.subr.mxu0 0.0
  %1629 = vmatpush2.msra.mxu0 0.0
  %1630 = vmatprep.subr.mxu0 0.0
  %1631 = vmatpush2.msra.mxu0 0.0
  %1632 = vmatprep.subr.mxu0 0.0
  %1633 = vmatpush2.msra.mxu0 0.0
  %1634 = vmatprep.subr.mxu0 0.0
  %1635 = vmatpush2.msra.mxu0 0.0
  %1636 = vmatprep.subr.mxu0 0.0
  %1637 = vmatpush2.msra.mxu0 0.0
  %1638 = vmatprep.subr.mxu0 0.0
  %1639 = vmatpush2.msra.mxu0 0.0
  %1640 = vmatprep.subr.mxu0 0.0
  %1641 = vmatpush2.msra.mxu0 0.0
  %1642 = vmatprep.subr.mxu0 0.0
  %1643 = vmatpush2.msra.mxu0 0.0
  %1644 = vmatprep.mubr.f32.mxu0 0.0
  %1645 = vmatmul.mubr.f32.gmra.mxu0 %v1578
  %v1646 = vpop.f32.mrf.mxu0
  %v1647 = vadd.f32 0.0, %v1646
  %v1648 = vpop.f32.mrf.mxu0
  %1649 = vdwg.mxu0
  %1651 = vrot.lane.b32.xlu0 %v1647, 35
  %v1652 = vpop.permute.xlu0 %1651
  %v1654 = vadd.f32 %v222, %v1652
  %1655 = vrot.lane.b32.xlu0 %v304, 35
  %v1656 = vpop.permute.xlu0 %1655
  %v1658 = vadd.f32 %v1654, %v1656
  %v1659 = vtanh.pop %v1658
  %1661 = vrot.lane.b32.xlu0 %v1659, 93
  %v1662 = vpop.permute.xlu0 %1661
  %v1663 = vsel %vm314, %v1662, 0
  %1665 = vmatprep.subr.mxu0 0.0
  %1666 = vmatpush1.msra.mxu0 0.0
  %1667 = vmatprep.subr.mxu0 0.0
  %1668 = vmatpush1.msra.mxu0 0.0
  %1669 = vmatprep.subr.mxu0 0.0
  %1670 = vmatpush1.msra.mxu0 0.0
  %1671 = vmatprep.subr.mxu0 0.0
  %1672 = vmatpush1.msra.mxu0 0.0
  %1673 = vmatprep.subr.mxu0 0.0
  %1674 = vmatpush1.msra.mxu0 0.0
  %1675 = vmatprep.subr.mxu0 0.0
  %1676 = vmatpush1.msra.mxu0 0.0
  %1677 = vmatprep.subr.mxu0 0.0
  %1678 = vmatpush1.msra.mxu0 0.0
  %1679 = vmatprep.subr.mxu0 0.0
  %1680 = vmatpush1.msra.mxu0 0.0
  %1681 = vmatprep.subr.mxu0 0.0
  %1682 = vmatpush1.msra.mxu0 0.0
  %1683 = vmatprep.subr.mxu0 0.0
  %1684 = vmatpush1.msra.mxu0 0.0
  %1685 = vmatprep.subr.mxu0 0.0
  %1686 = vmatpush1.msra.mxu0 0.0
  %1687 = vmatprep.subr.mxu0 0.0
  %1688 = vmatpush1.msra.mxu0 0.0
  %1689 = vmatprep.subr.mxu0 0.0
  %1690 = vmatpush1.msra.mxu0 0.0
  %1691 = vmatprep.subr.mxu0 0.0
  %1692 = vmatpush1.msra.mxu0 0.0
  %1693 = vmatprep.subr.mxu0 0.0
  %1694 = vmatpush1.msra.mxu0 0.0
  %1695 = vmatprep.subr.mxu0 0.0
  %1696 = vmatpush1.msra.mxu0 %v320
  %1697 = vmatprep.subr.mxu0 0.0
  %1698 = vmatpush2.msra.mxu0 0.0
  %1699 = vmatprep.subr.mxu0 0.0
  %1700 = vmatpush2.msra.mxu0 0.0
  %1701 = vmatprep.subr.mxu0 0.0
  %1702 = vmatpush2.msra.mxu0 0.0
  %1703 = vmatprep.subr.mxu0 0.0
  %1704 = vmatpush2.msra.mxu0 0.0
  %1705 = vmatprep.subr.mxu0 0.0
  %1706 = vmatpush2.msra.mxu0 0.0
  %1707 = vmatprep.subr.mxu0 0.0
  %1708 = vmatpush2.msra.mxu0 0.0
  %1709 = vmatprep.subr.mxu0 0.0
  %1710 = vmatpush2.msra.mxu0 0.0
  %1711 = vmatprep.subr.mxu0 0.0
  %1712 = vmatpush2.msra.mxu0 0.0
  %1713 = vmatprep.subr.mxu0 0.0
  %1714 = vmatpush2.msra.mxu0 0.0
  %1715 = vmatprep.subr.mxu0 0.0
  %1716 = vmatpush2.msra.mxu0 0.0
  %1717 = vmatprep.subr.mxu0 0.0
  %1718 = vmatpush2.msra.mxu0 0.0
  %1719 = vmatprep.subr.mxu0 0.0
  %1720 = vmatpush2.msra.mxu0 0.0
  %1721 = vmatprep.subr.mxu0 0.0
  %1722 = vmatpush2.msra.mxu0 0.0
  %1723 = vmatprep.subr.mxu0 0.0
  %1724 = vmatpush2.msra.mxu0 0.0
  %1725 = vmatprep.subr.mxu0 0.0
  %1726 = vmatpush2.msra.mxu0 0.0
  %1727 = vmatprep.subr.mxu0 0.0
  %1728 = vmatpush2.msra.mxu0 0.0
  %1729 = vmatprep.mubr.f32.mxu0 0.0
  %1730 = vmatmul.mubr.f32.gmra.mxu0 %v1663
  %v1731 = vpop.f32.mrf.mxu0
  %v1732 = vadd.f32 %v312, %v1731
  %v1733 = vpop.f32.mrf.mxu0
  %1734 = vdwg.mxu0
  %1735 = vrot.lane.b32.xlu0 %v73, 88
  %v1736 = vpop.permute.xlu0 %1735
  %v1738 = vmul.f32 %v1732, %v1736
  %1739 = vrot.lane.b32.xlu0 %v1571, 88
  %v1740 = vpop.permute.xlu0 %1739
  %v1742 = vsel %vm393, %v1738, %v1740
  %v1744 = vsel %vm401, %v1742, 0
  %1746 = vmatprep.subr.mxu0 0.0
  %1747 = vmatpush1.msra.mxu0 0.0
  %1748 = vmatprep.subr.mxu0 0.0
  %1749 = vmatpush1.msra.mxu0 0.0
  %1750 = vmatprep.subr.mxu0 0.0
  %1751 = vmatpush1.msra.mxu0 0.0
  %1752 = vmatprep.subr.mxu0 0.0
  %1753 = vmatpush1.msra.mxu0 0.0
  %1754 = vmatprep.subr.mxu0 0.0
  %1755 = vmatpush1.msra.mxu0 0.0
  %1756 = vmatprep.subr.mxu0 0.0
  %1757 = vmatpush1.msra.mxu0 0.0
  %1758 = vmatprep.subr.mxu0 0.0
  %1759 = vmatpush1.msra.mxu0 0.0
  %1760 = vmatprep.subr.mxu0 0.0
  %1761 = vmatpush1.msra.mxu0 0.0
  %1762 = vmatprep.subr.mxu0 0.0
  %1763 = vmatpush1.msra.mxu0 0.0
  %1764 = vmatprep.subr.mxu0 0.0
  %1765 = vmatpush1.msra.mxu0 0.0
  %1766 = vmatprep.subr.mxu0 0.0
  %1767 = vmatpush1.msra.mxu0 0.0
  %1768 = vmatprep.subr.mxu0 0.0
  %1769 = vmatpush1.msra.mxu0 0.0
  %1770 = vmatprep.subr.mxu0 0.0
  %1771 = vmatpush1.msra.mxu0 0.0
  %1772 = vmatprep.subr.mxu0 0.0
  %1773 = vmatpush1.msra.mxu0 %v91
  %1774 = vmatprep.subr.mxu0 0.0
  %1775 = vmatpush1.msra.mxu0 %v90
  %1776 = vmatprep.subr.mxu0 0.0
  %1777 = vmatpush1.msra.mxu0 %v89
  %1778 = vmatprep.subr.mxu0 0.0
  %1779 = vmatpush2.msra.mxu0 0.0
  %1780 = vmatprep.subr.mxu0 0.0
  %1781 = vmatpush2.msra.mxu0 0.0
  %1782 = vmatprep.subr.mxu0 0.0
  %1783 = vmatpush2.msra.mxu0 0.0
  %1784 = vmatprep.subr.mxu0 0.0
  %1785 = vmatpush2.msra.mxu0 0.0
  %1786 = vmatprep.subr.mxu0 0.0
  %1787 = vmatpush2.msra.mxu0 0.0
  %1788 = vmatprep.subr.mxu0 0.0
  %1789 = vmatpush2.msra.mxu0 0.0
  %1790 = vmatprep.subr.mxu0 0.0
  %1791 = vmatpush2.msra.mxu0 0.0
  %1792 = vmatprep.subr.mxu0 0.0
  %1793 = vmatpush2.msra.mxu0 0.0
  %1794 = vmatprep.subr.mxu0 0.0
  %1795 = vmatpush2.msra.mxu0 0.0
  %1796 = vmatprep.subr.mxu0 0.0
  %1797 = vmatpush2.msra.mxu0 0.0
  %1798 = vmatprep.subr.mxu0 0.0
  %1799 = vmatpush2.msra.mxu0 0.0
  %1800 = vmatprep.subr.mxu0 0.0
  %1801 = vmatpush2.msra.mxu0 0.0
  %1802 = vmatprep.subr.mxu0 0.0
  %1803 = vmatpush2.msra.mxu0 0.0
  %1804 = vmatprep.subr.mxu0 0.0
  %1805 = vmatpush2.msra.mxu0 0.0
  %1806 = vmatprep.subr.mxu0 0.0
  %1807 = vmatpush2.msra.mxu0 0.0
  %1808 = vmatprep.subr.mxu0 0.0
  %1809 = vmatpush2.msra.mxu0 0.0
  %1810 = vmatprep.mubr.f32.mxu0 0.0
  %1811 = vmatmul.mubr.f32.gmra.mxu0 %v1744
  %v1812 = vpop.f32.mrf.mxu0
  %v1813 = vadd.f32 %v399, %v1812
  %v1814 = vpop.f32.mrf.mxu0
  %1815 = vdwg.mxu0
  %v1816 = vxor.u32 %v1813, 2147483648
  %v1817 = vmul.f32 %v1816, 1.442695
  %v1818 = vpow.pop %v1817
  %v1819 = vadd.f32 %v1818, 1.0
  %v1820 = vrcp.pop %v1819
  %v1821 = vmul.f32 1.0, %v1820
  %v1822 = vtanh.pop %v1813
  %v1823 = vmul.f32 %v1821, %v1565
  %1825 = vrot.lane.b32.xlu0 %v1822, 96
  %v1826 = vpop.permute.xlu0 %1825
  %v1828 = vmul.f32 %v1821, %v1826
  %1830 = vrot.lane.b32.xlu0 %v1828, 16
  %v1831 = vpop.permute.xlu0 %1830
  %v1833 = vadd.f32 %v1823, %v1831
  %v1834 = vtanh.pop %v1833
  %1836 = vrot.lane.b32.xlu0 %v1834, 32
  %v1837 = vpop.permute.xlu0 %1836
  %v1839 = vmul.f32 %v1821, %v1837
  %1841 = vrot.lane.b32.xlu0 %v1839, 80
  %v1842 = vpop.permute.xlu0 %1841
  %v1844 = vsel %vm503, %v1842, %v1833
  %v1846 = vsel %vm225, %v1844, 0
  %1848 = vmatprep.subr.mxu0 0.0
  %1849 = vmatpush1.msra.mxu0 0.0
  %1850 = vmatprep.subr.mxu0 0.0
  %1851 = vmatpush1.msra.mxu0 0.0
  %1852 = vmatprep.subr.mxu0 0.0
  %1853 = vmatpush1.msra.mxu0 0.0
  %1854 = vmatprep.subr.mxu0 0.0
  %1855 = vmatpush1.msra.mxu0 0.0
  %1856 = vmatprep.subr.mxu0 0.0
  %1857 = vmatpush1.msra.mxu0 0.0
  %1858 = vmatprep.subr.mxu0 0.0
  %1859 = vmatpush1.msra.mxu0 0.0
  %1860 = vmatprep.subr.mxu0 0.0
  %1861 = vmatpush1.msra.mxu0 0.0
  %1862 = vmatprep.subr.mxu0 0.0
  %1863 = vmatpush1.msra.mxu0 0.0
  %1864 = vmatprep.subr.mxu0 0.0
  %1865 = vmatpush1.msra.mxu0 0.0
  %1866 = vmatprep.subr.mxu0 0.0
  %1867 = vmatpush1.msra.mxu0 0.0
  %1868 = vmatprep.subr.mxu0 0.0
  %1869 = vmatpush1.msra.mxu0 0.0
  %1870 = vmatprep.subr.mxu0 0.0
  %1871 = vmatpush1.msra.mxu0 0.0
  %1872 = vmatprep.subr.mxu0 0.0
  %1873 = vmatpush1.msra.mxu0 %v85
  %1874 = vmatprep.subr.mxu0 0.0
  %1875 = vmatpush1.msra.mxu0 %v84
  %1876 = vmatprep.subr.mxu0 0.0
  %1877 = vmatpush1.msra.mxu0 %v83
  %1878 = vmatprep.subr.mxu0 0.0
  %1879 = vmatpush1.msra.mxu0 %v82
  %1880 = vmatprep.subr.mxu0 0.0
  %1881 = vmatpush2.msra.mxu0 0.0
  %1882 = vmatprep.subr.mxu0 0.0
  %1883 = vmatpush2.msra.mxu0 0.0
  %1884 = vmatprep.subr.mxu0 0.0
  %1885 = vmatpush2.msra.mxu0 0.0
  %1886 = vmatprep.subr.mxu0 0.0
  %1887 = vmatpush2.msra.mxu0 0.0
  %1888 = vmatprep.subr.mxu0 0.0
  %1889 = vmatpush2.msra.mxu0 0.0
  %1890 = vmatprep.subr.mxu0 0.0
  %1891 = vmatpush2.msra.mxu0 0.0
  %1892 = vmatprep.subr.mxu0 0.0
  %1893 = vmatpush2.msra.mxu0 0.0
  %1894 = vmatprep.subr.mxu0 0.0
  %1895 = vmatpush2.msra.mxu0 0.0
  %1896 = vmatprep.subr.mxu0 0.0
  %1897 = vmatpush2.msra.mxu0 0.0
  %1898 = vmatprep.subr.mxu0 0.0
  %1899 = vmatpush2.msra.mxu0 0.0
  %1900 = vmatprep.subr.mxu0 0.0
  %1901 = vmatpush2.msra.mxu0 0.0
  %1902 = vmatprep.subr.mxu0 0.0
  %1903 = vmatpush2.msra.mxu0 0.0
  %1904 = vmatprep.subr.mxu0 0.0
  %1905 = vmatpush2.msra.mxu0 0.0
  %1906 = vmatprep.subr.mxu0 0.0
  %1907 = vmatpush2.msra.mxu0 0.0
  %1908 = vmatprep.subr.mxu0 0.0
  %1909 = vmatpush2.msra.mxu0 0.0
  %1910 = vmatprep.subr.mxu0 0.0
  %1911 = vmatpush2.msra.mxu0 0.0
  %1912 = vmatprep.mubr.f32.mxu0 0.0
  %1913 = vmatmul.mubr.f32.gmra.mxu0 %v1846
  %v1914 = vpop.f32.mrf.mxu0
  %v1915 = vadd.f32 0.0, %v1914
  %v1916 = vpop.f32.mrf.mxu0
  %1917 = vdwg.mxu0
  %1919 = vrot.lane.b32.xlu0 %v1915, 42
  %v1920 = vpop.permute.xlu0 %1919
  %v1922 = vadd.f32 %v222, %v1920
  %1923 = vrot.lane.b32.xlu0 %v304, 42
  %v1924 = vpop.permute.xlu0 %1923
  %v1926 = vadd.f32 %v1922, %v1924
  %v1927 = vtanh.pop %v1926
  %1929 = vrot.lane.b32.xlu0 %v1927, 86
  %v1930 = vpop.permute.xlu0 %1929
  %v1931 = vsel %vm314, %v1930, 0
  %1933 = vmatprep.subr.mxu0 0.0
  %1934 = vmatpush1.msra.mxu0 0.0
  %1935 = vmatprep.subr.mxu0 0.0
  %1936 = vmatpush1.msra.mxu0 0.0
  %1937 = vmatprep.subr.mxu0 0.0
  %1938 = vmatpush1.msra.mxu0 0.0
  %1939 = vmatprep.subr.mxu0 0.0
  %1940 = vmatpush1.msra.mxu0 0.0
  %1941 = vmatprep.subr.mxu0 0.0
  %1942 = vmatpush1.msra.mxu0 0.0
  %1943 = vmatprep.subr.mxu0 0.0
  %1944 = vmatpush1.msra.mxu0 0.0
  %1945 = vmatprep.subr.mxu0 0.0
  %1946 = vmatpush1.msra.mxu0 0.0
  %1947 = vmatprep.subr.mxu0 0.0
  %1948 = vmatpush1.msra.mxu0 0.0
  %1949 = vmatprep.subr.mxu0 0.0
  %1950 = vmatpush1.msra.mxu0 0.0
  %1951 = vmatprep.subr.mxu0 0.0
  %1952 = vmatpush1.msra.mxu0 0.0
  %1953 = vmatprep.subr.mxu0 0.0
  %1954 = vmatpush1.msra.mxu0 0.0
  %1955 = vmatprep.subr.mxu0 0.0
  %1956 = vmatpush1.msra.mxu0 0.0
  %1957 = vmatprep.subr.mxu0 0.0
  %1958 = vmatpush1.msra.mxu0 0.0
  %1959 = vmatprep.subr.mxu0 0.0
  %1960 = vmatpush1.msra.mxu0 0.0
  %1961 = vmatprep.subr.mxu0 0.0
  %1962 = vmatpush1.msra.mxu0 0.0
  %1963 = vmatprep.subr.mxu0 0.0
  %1964 = vmatpush1.msra.mxu0 %v320
  %1965 = vmatprep.subr.mxu0 0.0
  %1966 = vmatpush2.msra.mxu0 0.0
  %1967 = vmatprep.subr.mxu0 0.0
  %1968 = vmatpush2.msra.mxu0 0.0
  %1969 = vmatprep.subr.mxu0 0.0
  %1970 = vmatpush2.msra.mxu0 0.0
  %1971 = vmatprep.subr.mxu0 0.0
  %1972 = vmatpush2.msra.mxu0 0.0
  %1973 = vmatprep.subr.mxu0 0.0
  %1974 = vmatpush2.msra.mxu0 0.0
  %1975 = vmatprep.subr.mxu0 0.0
  %1976 = vmatpush2.msra.mxu0 0.0
  %1977 = vmatprep.subr.mxu0 0.0
  %1978 = vmatpush2.msra.mxu0 0.0
  %1979 = vmatprep.subr.mxu0 0.0
  %1980 = vmatpush2.msra.mxu0 0.0
  %1981 = vmatprep.subr.mxu0 0.0
  %1982 = vmatpush2.msra.mxu0 0.0
  %1983 = vmatprep.subr.mxu0 0.0
  %1984 = vmatpush2.msra.mxu0 0.0
  %1985 = vmatprep.subr.mxu0 0.0
  %1986 = vmatpush2.msra.mxu0 0.0
  %1987 = vmatprep.subr.mxu0 0.0
  %1988 = vmatpush2.msra.mxu0 0.0
  %1989 = vmatprep.subr.mxu0 0.0
  %1990 = vmatpush2.msra.mxu0 0.0
  %1991 = vmatprep.subr.mxu0 0.0
  %1992 = vmatpush2.msra.mxu0 0.0
  %1993 = vmatprep.subr.mxu0 0.0
  %1994 = vmatpush2.msra.mxu0 0.0
  %1995 = vmatprep.subr.mxu0 0.0
  %1996 = vmatpush2.msra.mxu0 0.0
  %1997 = vmatprep.mubr.f32.mxu0 0.0
  %1998 = vmatmul.mubr.f32.gmra.mxu0 %v1931
  %v1999 = vpop.f32.mrf.mxu0
  %v2000 = vadd.f32 %v312, %v1999
  %v2001 = vpop.f32.mrf.mxu0
  %2002 = vdwg.mxu0
  %2003 = vrot.lane.b32.xlu0 %v73, 80
  %v2004 = vpop.permute.xlu0 %2003
  %v2006 = vmul.f32 %v2000, %v2004
  %2007 = vrot.lane.b32.xlu0 %v1839, 88
  %v2008 = vpop.permute.xlu0 %2007
  %v2010 = vsel %vm393, %v2006, %v2008
  %v2012 = vsel %vm401, %v2010, 0
  %2014 = vmatprep.subr.mxu0 0.0
  %2015 = vmatpush1.msra.mxu0 0.0
  %2016 = vmatprep.subr.mxu0 0.0
  %2017 = vmatpush1.msra.mxu0 0.0
  %2018 = vmatprep.subr.mxu0 0.0
  %2019 = vmatpush1.msra.mxu0 0.0
  %2020 = vmatprep.subr.mxu0 0.0
  %2021 = vmatpush1.msra.mxu0 0.0
  %2022 = vmatprep.subr.mxu0 0.0
  %2023 = vmatpush1.msra.mxu0 0.0
  %2024 = vmatprep.subr.mxu0 0.0
  %2025 = vmatpush1.msra.mxu0 0.0
  %2026 = vmatprep.subr.mxu0 0.0
  %2027 = vmatpush1.msra.mxu0 0.0
  %2028 = vmatprep.subr.mxu0 0.0
  %2029 = vmatpush1.msra.mxu0 0.0
  %2030 = vmatprep.subr.mxu0 0.0
  %2031 = vmatpush1.msra.mxu0 0.0
  %2032 = vmatprep.subr.mxu0 0.0
  %2033 = vmatpush1.msra.mxu0 0.0
  %2034 = vmatprep.subr.mxu0 0.0
  %2035 = vmatpush1.msra.mxu0 0.0
  %2036 = vmatprep.subr.mxu0 0.0
  %2037 = vmatpush1.msra.mxu0 0.0
  %2038 = vmatprep.subr.mxu0 0.0
  %2039 = vmatpush1.msra.mxu0 0.0
  %2040 = vmatprep.subr.mxu0 0.0
  %2041 = vmatpush1.msra.mxu0 %v91
  %2042 = vmatprep.subr.mxu0 0.0
  %2043 = vmatpush1.msra.mxu0 %v90
  %2044 = vmatprep.subr.mxu0 0.0
  %2045 = vmatpush1.msra.mxu0 %v89
  %2046 = vmatprep.subr.mxu0 0.0
  %2047 = vmatpush2.msra.mxu0 0.0
  %2048 = vmatprep.subr.mxu0 0.0
  %2049 = vmatpush2.msra.mxu0 0.0
  %2050 = vmatprep.subr.mxu0 0.0
  %2051 = vmatpush2.msra.mxu0 0.0
  %2052 = vmatprep.subr.mxu0 0.0
  %2053 = vmatpush2.msra.mxu0 0.0
  %2054 = vmatprep.subr.mxu0 0.0
  %2055 = vmatpush2.msra.mxu0 0.0
  %2056 = vmatprep.subr.mxu0 0.0
  %2057 = vmatpush2.msra.mxu0 0.0
  %2058 = vmatprep.subr.mxu0 0.0
  %2059 = vmatpush2.msra.mxu0 0.0
  %2060 = vmatprep.subr.mxu0 0.0
  %2061 = vmatpush2.msra.mxu0 0.0
  %2062 = vmatprep.subr.mxu0 0.0
  %2063 = vmatpush2.msra.mxu0 0.0
  %2064 = vmatprep.subr.mxu0 0.0
  %2065 = vmatpush2.msra.mxu0 0.0
  %2066 = vmatprep.subr.mxu0 0.0
  %2067 = vmatpush2.msra.mxu0 0.0
  %2068 = vmatprep.subr.mxu0 0.0
  %2069 = vmatpush2.msra.mxu0 0.0
  %2070 = vmatprep.subr.mxu0 0.0
  %2071 = vmatpush2.msra.mxu0 0.0
  %2072 = vmatprep.subr.mxu0 0.0
  %2073 = vmatpush2.msra.mxu0 0.0
  %2074 = vmatprep.subr.mxu0 0.0
  %2075 = vmatpush2.msra.mxu0 0.0
  %2076 = vmatprep.subr.mxu0 0.0
  %2077 = vmatpush2.msra.mxu0 0.0
  %2078 = vmatprep.mubr.f32.mxu0 0.0
  %2079 = vmatmul.mubr.f32.gmra.mxu0 %v2012
  %v2080 = vpop.f32.mrf.mxu0
  %v2081 = vadd.f32 %v399, %v2080
  %v2082 = vpop.f32.mrf.mxu0
  %2083 = vdwg.mxu0
  %v2084 = vxor.u32 %v2081, 2147483648
  %v2085 = vmul.f32 %v2084, 1.442695
  %v2086 = vpow.pop %v2085
  %v2087 = vadd.f32 %v2086, 1.0
  %v2088 = vrcp.pop %v2087
  %v2089 = vmul.f32 1.0, %v2088
  %v2090 = vtanh.pop %v2081
  %v2091 = vmul.f32 %v2089, %v1833
  %2093 = vrot.lane.b32.xlu0 %v2090, 96
  %v2094 = vpop.permute.xlu0 %2093
  %v2096 = vmul.f32 %v2089, %v2094
  %2098 = vrot.lane.b32.xlu0 %v2096, 16
  %v2099 = vpop.permute.xlu0 %2098
  %v2101 = vadd.f32 %v2091, %v2099
  %v2102 = vtanh.pop %v2101
  %2104 = vrot.lane.b32.xlu0 %v2102, 32
  %v2105 = vpop.permute.xlu0 %2104
  %v2107 = vmul.f32 %v2089, %v2105
  %2108 = vrot.lane.b32.xlu0 %v767, 96
  %v2109 = vpop.permute.xlu0 %2108
  %2111 = vrot.lane.b32.xlu0 %v1035, 112
  %v2112 = vpop.permute.xlu0 %2111
  %2114 = vrot.lane.b32.xlu0 %v1571, 16
  %v2115 = vpop.permute.xlu0 %2114
  %2117 = vrot.lane.b32.xlu0 %v1839, 32
  %v2118 = vpop.permute.xlu0 %2117
  %2121 = vrot.lane.b32.xlu0 %v2107, 48
  %v2122 = vpop.permute.xlu0 %2121
  %v2124 = vsel %vm503, %v501, %v2109
  %v2125 = vsel %vm225, %v2124, %v2112
  %vm2126 = vcmask 392192
  %v2127 = vsel %vm2126, %v2125, %v1303
  %vm2128 = vcmask 523264
  %v2129 = vsel %vm2128, %v2127, %v2115
  %vm2130 = vcmask 654336
  %v2131 = vsel %vm2130, %v2129, %v2118
  %vm2132 = vcmask 785408
  %v2133 = vsel %vm2132, %v2131, %v2122
  %vm2134 = vcmask 916480
  %v2136 = vsel %vm2134, %v2133, 0
  %2138 = vmatprep.subr.mxu0 0.0
  %2139 = vmatpush1.msra.mxu0 0.0
  %2140 = vmatprep.subr.mxu0 0.0
  %2141 = vmatpush1.msra.mxu0 0.0
  %2142 = vmatprep.subr.mxu0 0.0
  %2143 = vmatpush1.msra.mxu0 %v110
  %2144 = vmatprep.subr.mxu0 0.0
  %2145 = vmatpush1.msra.mxu0 %v109
  %2146 = vmatprep.subr.mxu0 0.0
  %2147 = vmatpush1.msra.mxu0 %v108
  %2148 = vmatprep.subr.mxu0 0.0
  %2149 = vmatpush1.msra.mxu0 %v107
  %2150 = vmatprep.subr.mxu0 0.0
  %2151 = vmatpush1.msra.mxu0 %v106
  %2152 = vmatprep.subr.mxu0 0.0
  %2153 = vmatpush1.msra.mxu0 %v105
  %2154 = vmatprep.subr.mxu0 0.0
  %2155 = vmatpush1.msra.mxu0 %v104
  %2156 = vmatprep.subr.mxu0 0.0
  %2157 = vmatpush1.msra.mxu0 %v103
  %2158 = vmatprep.subr.mxu0 0.0
  %2159 = vmatpush1.msra.mxu0 %v102
  %2160 = vmatprep.subr.mxu0 0.0
  %2161 = vmatpush1.msra.mxu0 %v101
  %2162 = vmatprep.subr.mxu0 0.0
  %2163 = vmatpush1.msra.mxu0 %v100
  %2164 = vmatprep.subr.mxu0 0.0
  %2165 = vmatpush1.msra.mxu0 %v99
  %2166 = vmatprep.subr.mxu0 0.0
  %2167 = vmatpush1.msra.mxu0 %v98
  %2168 = vmatprep.subr.mxu0 0.0
  %2169 = vmatpush1.msra.mxu0 %v97
  %2170 = vmatprep.subr.mxu0 0.0
  %2171 = vmatpush2.msra.mxu0 0.0
  %2172 = vmatprep.subr.mxu0 0.0
  %2173 = vmatpush2.msra.mxu0 0.0
  %2174 = vmatprep.subr.mxu0 0.0
  %2175 = vmatpush2.msra.mxu0 0.0
  %2176 = vmatprep.subr.mxu0 0.0
  %2177 = vmatpush2.msra.mxu0 0.0
  %2178 = vmatprep.subr.mxu0 0.0
  %2179 = vmatpush2.msra.mxu0 0.0
  %2180 = vmatprep.subr.mxu0 0.0
  %2181 = vmatpush2.msra.mxu0 0.0
  %2182 = vmatprep.subr.mxu0 0.0
  %2183 = vmatpush2.msra.mxu0 0.0
  %2184 = vmatprep.subr.mxu0 0.0
  %2185 = vmatpush2.msra.mxu0 0.0
  %2186 = vmatprep.subr.mxu0 0.0
  %2187 = vmatpush2.msra.mxu0 0.0
  %2188 = vmatprep.subr.mxu0 0.0
  %2189 = vmatpush2.msra.mxu0 0.0
  %2190 = vmatprep.subr.mxu0 0.0
  %2191 = vmatpush2.msra.mxu0 0.0
  %2192 = vmatprep.subr.mxu0 0.0
  %2193 = vmatpush2.msra.mxu0 0.0
  %2194 = vmatprep.subr.mxu0 0.0
  %2195 = vmatpush2.msra.mxu0 0.0
  %2196 = vmatprep.subr.mxu0 0.0
  %2197 = vmatpush2.msra.mxu0 0.0
  %2198 = vmatprep.subr.mxu0 0.0
  %2199 = vmatpush2.msra.mxu0 0.0
  %2200 = vmatprep.subr.mxu0 0.0
  %2201 = vmatpush2.msra.mxu0 0.0
  %2202 = vmatprep.mubr.f32.mxu0 0.0
  %2203 = vmatmul.mubr.f32.gmra.mxu0 %v2136
  %v2204 = vpop.f32.mrf.mxu0
  %v2205 = vadd.f32 0.0, %v2204
  %v2206 = vpop.f32.mrf.mxu0
  %2207 = vdwg.mxu0
  %2208 = vmatprep.subr.mxu0 0.0
  %2209 = vmatpush1.msra.mxu0 0.0
  %2210 = vmatprep.subr.mxu0 0.0
  %2211 = vmatpush1.msra.mxu0 0.0
  %2212 = vmatprep.subr.mxu0 0.0
  %2213 = vmatpush1.msra.mxu0 0.0
  %2214 = vmatprep.subr.mxu0 0.0
  %2215 = vmatpush1.msra.mxu0 0.0
  %2216 = vmatprep.subr.mxu0 0.0
  %2217 = vmatpush1.msra.mxu0 0.0
  %2218 = vmatprep.subr.mxu0 0.0
  %2219 = vmatpush1.msra.mxu0 0.0
  %2220 = vmatprep.subr.mxu0 0.0
  %2221 = vmatpush1.msra.mxu0 0.0
  %2222 = vmatprep.subr.mxu0 0.0
  %2223 = vmatpush1.msra.mxu0 0.0
  %2224 = vmatprep.subr.mxu0 0.0
  %2225 = vmatpush1.msra.mxu0 0.0
  %2226 = vmatprep.subr.mxu0 0.0
  %2227 = vmatpush1.msra.mxu0 0.0
  %2228 = vmatprep.subr.mxu0 0.0
  %2229 = vmatpush1.msra.mxu0 0.0
  %2230 = vmatprep.subr.mxu0 0.0
  %2231 = vmatpush1.msra.mxu0 0.0
  %2232 = vmatprep.subr.mxu0 0.0
  %2233 = vmatpush1.msra.mxu0 %v96
  %2234 = vmatprep.subr.mxu0 0.0
  %2235 = vmatpush1.msra.mxu0 %v95
  %2236 = vmatprep.subr.mxu0 0.0
  %2237 = vmatpush1.msra.mxu0 %v94
  %2238 = vmatprep.subr.mxu0 0.0
  %2239 = vmatpush1.msra.mxu0 %v93
  %2240 = vmatprep.subr.mxu0 0.0
  %2241 = vmatpush2.msra.mxu0 0.0
  %2242 = vmatprep.subr.mxu0 0.0
  %2243 = vmatpush2.msra.mxu0 0.0
  %2244 = vmatprep.subr.mxu0 0.0
  %2245 = vmatpush2.msra.mxu0 0.0
  %2246 = vmatprep.subr.mxu0 0.0
  %2247 = vmatpush2.msra.mxu0 0.0
  %2248 = vmatprep.subr.mxu0 0.0
  %2249 = vmatpush2.msra.mxu0 0.0
  %2250 = vmatprep.subr.mxu0 0.0
  %2251 = vmatpush2.msra.mxu0 0.0
  %2252 = vmatprep.subr.mxu0 0.0
  %2253 = vmatpush2.msra.mxu0 0.0
  %2254 = vmatprep.subr.mxu0 0.0
  %2255 = vmatpush2.msra.mxu0 0.0
  %2256 = vmatprep.subr.mxu0 0.0
  %2257 = vmatpush2.msra.mxu0 0.0
  %2258 = vmatprep.subr.mxu0 0.0
  %2259 = vmatpush2.msra.mxu0 0.0
  %2260 = vmatprep.subr.mxu0 0.0
  %2261 = vmatpush2.msra.mxu0 0.0
  %2262 = vmatprep.subr.mxu0 0.0
  %2263 = vmatpush2.msra.mxu0 0.0
  %2264 = vmatprep.subr.mxu0 0.0
  %2265 = vmatpush2.msra.mxu0 0.0
  %2266 = vmatprep.subr.mxu0 0.0
  %2267 = vmatpush2.msra.mxu0 0.0
  %2268 = vmatprep.subr.mxu0 0.0
  %2269 = vmatpush2.msra.mxu0 0.0
  %2270 = vmatprep.subr.mxu0 0.0
  %2271 = vmatpush2.msra.mxu0 0.0
  %2272 = vmatprep.mubr.f32.mxu0 0.0
  %2273 = vmatmul.mubr.f32.gmra.mxu0 %v227
  %v2274 = vpop.f32.mrf.mxu0
  %v2275 = vadd.f32 %v2205, %v2274
  %v2276 = vpop.f32.mrf.mxu0
  %2277 = vdwg.mxu0
  %v2279 = vlaneseq
  %v2280 = vshrl.u32 %v2279, 7
  %v2281 = vsub.s32 0, %v2280
  %v2282 = vrot.slane %v111, %v2281
  %v2284 = vadd.f32 %v2275, %v2282
  %v2285 = vtanh.pop %v2284
  %v2287 = vlaneseq
  %v2288 = vshrl.u32 %v2287, 7
  %v2289 = vsub.s32 0, %v2288
  %v2290 = vrot.slane %v114, %v2289
  %v2293 = vsel %vm503, %v2285, 0
  %2295 = vmatprep.subr.mxu0 0.0
  %2296 = vmatpush1.msra.mxu0 0.0
  %2297 = vmatprep.subr.mxu0 0.0
  %2298 = vmatpush1.msra.mxu0 0.0
  %2299 = vmatprep.subr.mxu0 0.0
  %2300 = vmatpush1.msra.mxu0 0.0
  %2301 = vmatprep.subr.mxu0 0.0
  %2302 = vmatpush1.msra.mxu0 0.0
  %2303 = vmatprep.subr.mxu0 0.0
  %2304 = vmatpush1.msra.mxu0 0.0
  %2305 = vmatprep.subr.mxu0 0.0
  %2306 = vmatpush1.msra.mxu0 0.0
  %2307 = vmatprep.subr.mxu0 0.0
  %2308 = vmatpush1.msra.mxu0 0.0
  %2309 = vmatprep.subr.mxu0 0.0
  %2310 = vmatpush1.msra.mxu0 0.0
  %2311 = vmatprep.subr.mxu0 0.0
  %2312 = vmatpush1.msra.mxu0 0.0
  %2313 = vmatprep.subr.mxu0 0.0
  %2314 = vmatpush1.msra.mxu0 0.0
  %2315 = vmatprep.subr.mxu0 0.0
  %2316 = vmatpush1.msra.mxu0 0.0
  %2317 = vmatprep.subr.mxu0 0.0
  %2318 = vmatpush1.msra.mxu0 0.0
  %2319 = vmatprep.subr.mxu0 0.0
  %2320 = vmatpush1.msra.mxu0 0.0
  %2321 = vmatprep.subr.mxu0 0.0
  %2322 = vmatpush1.msra.mxu0 0.0
  %2323 = vmatprep.subr.mxu0 0.0
  %2324 = vmatpush1.msra.mxu0 %v113
  %2325 = vmatprep.subr.mxu0 0.0
  %2326 = vmatpush1.msra.mxu0 %v112
  %2327 = vmatprep.subr.mxu0 0.0
  %2328 = vmatpush2.msra.mxu0 0.0
  %2329 = vmatprep.subr.mxu0 0.0
  %2330 = vmatpush2.msra.mxu0 0.0
  %2331 = vmatprep.subr.mxu0 0.0
  %2332 = vmatpush2.msra.mxu0 0.0
  %2333 = vmatprep.subr.mxu0 0.0
  %2334 = vmatpush2.msra.mxu0 0.0
  %2335 = vmatprep.subr.mxu0 0.0
  %2336 = vmatpush2.msra.mxu0 0.0
  %2337 = vmatprep.subr.mxu0 0.0
  %2338 = vmatpush2.msra.mxu0 0.0
  %2339 = vmatprep.subr.mxu0 0.0
  %2340 = vmatpush2.msra.mxu0 0.0
  %2341 = vmatprep.subr.mxu0 0.0
  %2342 = vmatpush2.msra.mxu0 0.0
  %2343 = vmatprep.subr.mxu0 0.0
  %2344 = vmatpush2.msra.mxu0 0.0
  %2345 = vmatprep.subr.mxu0 0.0
  %2346 = vmatpush2.msra.mxu0 0.0
  %2347 = vmatprep.subr.mxu0 0.0
  %2348 = vmatpush2.msra.mxu0 0.0
  %2349 = vmatprep.subr.mxu0 0.0
  %2350 = vmatpush2.msra.mxu0 0.0
  %2351 = vmatprep.subr.mxu0 0.0
  %2352 = vmatpush2.msra.mxu0 0.0
  %2353 = vmatprep.subr.mxu0 0.0
  %2354 = vmatpush2.msra.mxu0 0.0
  %2355 = vmatprep.subr.mxu0 0.0
  %2356 = vmatpush2.msra.mxu0 0.0
  %2357 = vmatprep.subr.mxu0 0.0
  %2358 = vmatpush2.msra.mxu0 0.0
  %2359 = vmatprep.mubr.f32.mxu0 0.0
  %2360 = vmatmul.mubr.f32.gmra.mxu0 %v2293
  %v2361 = vpop.f32.mrf.mxu0
  %v2362 = vadd.f32 %v2290, %v2361
  %v2363 = vpop.f32.mrf.mxu0
  %2364 = vdwg.mxu0
  %v2365 = vsel %vm314, %v2362, -inf
  %2366 = vmax.xlane.f32.xlu0 %v2365
  %v2367 = vpop.xlane.xlu0 %2366
  %v2368 = vsub.f32 %v2362, %v2367
  %v2369 = vmul.f32 %v2368, 1.442695
  %v2370 = vpow.pop %v2369
  %v2371 = vsel %vm314, %v2370, 0.0
  %2372 = vadd.xlane.f32.xlu0 %v2371
  %v2373 = vpop.xlane.xlu0 %2372
  %v2374 = vrcp.pop %v2373
  %v2375 = vmul.f32 %v2370, %v2374
  %v2377 = vsel %vm314, %v2375, 0
  %v2380 = vsel %vm318, %v115, 0
  %2382 = vmatprep.subr.mxu0 0.0
  %2383 = vmatpush1.msra.mxu0 0.0
  %2384 = vmatprep.subr.mxu0 0.0
  %2385 = vmatpush1.msra.mxu0 0.0
  %2386 = vmatprep.subr.mxu0 0.0
  %2387 = vmatpush1.msra.mxu0 0.0
  %2388 = vmatprep.subr.mxu0 0.0
  %2389 = vmatpush1.msra.mxu0 0.0
  %2390 = vmatprep.subr.mxu0 0.0
  %2391 = vmatpush1.msra.mxu0 0.0
  %2392 = vmatprep.subr.mxu0 0.0
  %2393 = vmatpush1.msra.mxu0 0.0
  %2394 = vmatprep.subr.mxu0 0.0
  %2395 = vmatpush1.msra.mxu0 0.0
  %2396 = vmatprep.subr.mxu0 0.0
  %2397 = vmatpush1.msra.mxu0 0.0
  %2398 = vmatprep.subr.mxu0 0.0
  %2399 = vmatpush1.msra.mxu0 0.0
  %2400 = vmatprep.subr.mxu0 0.0
  %2401 = vmatpush1.msra.mxu0 0.0
  %2402 = vmatprep.subr.mxu0 0.0
  %2403 = vmatpush1.msra.mxu0 0.0
  %2404 = vmatprep.subr.mxu0 0.0
  %2405 = vmatpush1.msra.mxu0 0.0
  %2406 = vmatprep.subr.mxu0 0.0
  %2407 = vmatpush1.msra.mxu0 0.0
  %2408 = vmatprep.subr.mxu0 0.0
  %2409 = vmatpush1.msra.mxu0 0.0
  %2410 = vmatprep.subr.mxu0 0.0
  %2411 = vmatpush1.msra.mxu0 0.0
  %2412 = vmatprep.subr.mxu0 0.0
  %2413 = vmatpush1.msra.mxu0 %v2380
  %2414 = vmatprep.subr.mxu0 0.0
  %2415 = vmatpush2.msra.mxu0 0.0
  %2416 = vmatprep.subr.mxu0 0.0
  %2417 = vmatpush2.msra.mxu0 0.0
  %2418 = vmatprep.subr.mxu0 0.0
  %2419 = vmatpush2.msra.mxu0 0.0
  %2420 = vmatprep.subr.mxu0 0.0
  %2421 = vmatpush2.msra.mxu0 0.0
  %2422 = vmatprep.subr.mxu0 0.0
  %2423 = vmatpush2.msra.mxu0 0.0
  %2424 = vmatprep.subr.mxu0 0.0
  %2425 = vmatpush2.msra.mxu0 0.0
  %2426 = vmatprep.subr.mxu0 0.0
  %2427 = vmatpush2.msra.mxu0 0.0
  %2428 = vmatprep.subr.mxu0 0.0
  %2429 = vmatpush2.msra.mxu0 0.0
  %2430 = vmatprep.subr.mxu0 0.0
  %2431 = vmatpush2.msra.mxu0 0.0
  %2432 = vmatprep.subr.mxu0 0.0
  %2433 = vmatpush2.msra.mxu0 0.0
  %2434 = vmatprep.subr.mxu0 0.0
  %2435 = vmatpush2.msra.mxu0 0.0
  %2436 = vmatprep.subr.mxu0 0.0
  %2437 = vmatpush2.msra.mxu0 0.0
  %2438 = vmatprep.subr.mxu0 0.0
  %2439 = vmatpush2.msra.mxu0 0.0
  %2440 = vmatprep.subr.mxu0 0.0
  %2441 = vmatpush2.msra.mxu0 0.0
  %2442 = vmatprep.subr.mxu0 0.0
  %2443 = vmatpush2.msra.mxu0 0.0
  %2444 = vmatprep.subr.mxu0 0.0
  %2445 = vmatpush2.msra.mxu0 0.0
  %2446 = vmatprep.mubr.f32.mxu0 0.0
  %2447 = vmatmul.mubr.f32.gmra.mxu0 %v2377
  %v2448 = vpop.f32.mrf.mxu0
  %v2449 = vadd.f32 0.0, %v2448
  %v2450 = vpop.f32.mrf.mxu0
  %2451 = vdwg.mxu0
  %v2452 = vmul.f32 %v2449, %v2133
  %2454 = vset.pattern.permute.xlu0 0
  %2455 = vperm.xlu0 %2454, %v74
  %v2456 = vpop.permute.xlu0 %2455
  %v2459 = vlaneseq
  %v2460 = vshrl.u32 %v2459, 7
  %v2461 = vsub.s32 0, %v2460
  %v2462 = vrot.slane %v130, %v2461
  %v2464 = vmul.f32 %v2456, %v2462
  %v2466 = vsel %vm2134, %v2452, 0
  %2468 = vmatprep.subr.mxu0 0.0
  %2469 = vmatpush1.msra.mxu0 0.0
  %2470 = vmatprep.subr.mxu0 0.0
  %2471 = vmatpush1.msra.mxu0 0.0
  %2472 = vmatprep.subr.mxu0 0.0
  %2473 = vmatpush1.msra.mxu0 %v129
  %2474 = vmatprep.subr.mxu0 0.0
  %2475 = vmatpush1.msra.mxu0 %v128
  %2476 = vmatprep.subr.mxu0 0.0
  %2477 = vmatpush1.msra.mxu0 %v127
  %2478 = vmatprep.subr.mxu0 0.0
  %2479 = vmatpush1.msra.mxu0 %v126
  %2480 = vmatprep.subr.mxu0 0.0
  %2481 = vmatpush1.msra.mxu0 %v125
  %2482 = vmatprep.subr.mxu0 0.0
  %2483 = vmatpush1.msra.mxu0 %v124
  %2484 = vmatprep.subr.mxu0 0.0
  %2485 = vmatpush1.msra.mxu0 %v123
  %2486 = vmatprep.subr.mxu0 0.0
  %2487 = vmatpush1.msra.mxu0 %v122
  %2488 = vmatprep.subr.mxu0 0.0
  %2489 = vmatpush1.msra.mxu0 %v121
  %2490 = vmatprep.subr.mxu0 0.0
  %2491 = vmatpush1.msra.mxu0 %v120
  %2492 = vmatprep.subr.mxu0 0.0
  %2493 = vmatpush1.msra.mxu0 %v119
  %2494 = vmatprep.subr.mxu0 0.0
  %2495 = vmatpush1.msra.mxu0 %v118
  %2496 = vmatprep.subr.mxu0 0.0
  %2497 = vmatpush1.msra.mxu0 %v117
  %2498 = vmatprep.subr.mxu0 0.0
  %2499 = vmatpush1.msra.mxu0 %v116
  %2500 = vmatprep.subr.mxu0 0.0
  %2501 = vmatpush2.msra.mxu0 0.0
  %2502 = vmatprep.subr.mxu0 0.0
  %2503 = vmatpush2.msra.mxu0 0.0
  %2504 = vmatprep.subr.mxu0 0.0
  %2505 = vmatpush2.msra.mxu0 0.0
  %2506 = vmatprep.subr.mxu0 0.0
  %2507 = vmatpush2.msra.mxu0 0.0
  %2508 = vmatprep.subr.mxu0 0.0
  %2509 = vmatpush2.msra.mxu0 0.0
  %2510 = vmatprep.subr.mxu0 0.0
  %2511 = vmatpush2.msra.mxu0 0.0
  %2512 = vmatprep.subr.mxu0 0.0
  %2513 = vmatpush2.msra.mxu0 0.0
  %2514 = vmatprep.subr.mxu0 0.0
  %2515 = vmatpush2.msra.mxu0 0.0
  %2516 = vmatprep.subr.mxu0 0.0
  %2517 = vmatpush2.msra.mxu0 0.0
  %2518 = vmatprep.subr.mxu0 0.0
  %2519 = vmatpush2.msra.mxu0 0.0
  %2520 = vmatprep.subr.mxu0 0.0
  %2521 = vmatpush2.msra.mxu0 0.0
  %2522 = vmatprep.subr.mxu0 0.0
  %2523 = vmatpush2.msra.mxu0 0.0
  %2524 = vmatprep.subr.mxu0 0.0
  %2525 = vmatpush2.msra.mxu0 0.0
  %2526 = vmatprep.subr.mxu0 0.0
  %2527 = vmatpush2.msra.mxu0 0.0
  %2528 = vmatprep.subr.mxu0 0.0
  %2529 = vmatpush2.msra.mxu0 0.0
  %2530 = vmatprep.subr.mxu0 0.0
  %2531 = vmatpush2.msra.mxu0 0.0
  %2532 = vmatprep.mubr.f32.mxu0 0.0
  %2533 = vmatmul.mubr.f32.gmra.mxu0 %v2466
  %v2534 = vpop.f32.mrf.mxu0
  %v2535 = vadd.f32 %v2464, %v2534
  %v2536 = vpop.f32.mrf.mxu0
  %2537 = vdwg.mxu0
  %v2538 = vsel %vm503, 0.0, 0
  %2540 = vmatprep.subr.mxu0 0.0
  %2541 = vmatpush1.msra.mxu0 0.0
  %2542 = vmatprep.subr.mxu0 0.0
  %2543 = vmatpush1.msra.mxu0 0.0
  %2544 = vmatprep.subr.mxu0 0.0
  %2545 = vmatpush1.msra.mxu0 0.0
  %2546 = vmatprep.subr.mxu0 0.0
  %2547 = vmatpush1.msra.mxu0 0.0
  %2548 = vmatprep.subr.mxu0 0.0
  %2549 = vmatpush1.msra.mxu0 0.0
  %2550 = vmatprep.subr.mxu0 0.0
  %2551 = vmatpush1.msra.mxu0 0.0
  %2552 = vmatprep.subr.mxu0 0.0
  %2553 = vmatpush1.msra.mxu0 0.0
  %2554 = vmatprep.subr.mxu0 0.0
  %2555 = vmatpush1.msra.mxu0 0.0
  %2556 = vmatprep.subr.mxu0 0.0
  %2557 = vmatpush1.msra.mxu0 0.0
  %2558 = vmatprep.subr.mxu0 0.0
  %2559 = vmatpush1.msra.mxu0 0.0
  %2560 = vmatprep.subr.mxu0 0.0
  %2561 = vmatpush1.msra.mxu0 0.0
  %2562 = vmatprep.subr.mxu0 0.0
  %2563 = vmatpush1.msra.mxu0 0.0
  %2564 = vmatprep.subr.mxu0 0.0
  %2565 = vmatpush1.msra.mxu0 0.0
  %2566 = vmatprep.subr.mxu0 0.0
  %2567 = vmatpush1.msra.mxu0 0.0
  %2568 = vmatprep.subr.mxu0 0.0
  %2569 = vmatpush1.msra.mxu0 %v133
  %2570 = vmatprep.subr.mxu0 0.0
  %2571 = vmatpush1.msra.mxu0 %v132
  %2572 = vmatprep.subr.mxu0 0.0
  %2573 = vmatpush2.msra.mxu0 0.0
  %2574 = vmatprep.subr.mxu0 0.0
  %2575 = vmatpush2.msra.mxu0 0.0
  %2576 = vmatprep.subr.mxu0 0.0
  %2577 = vmatpush2.msra.mxu0 0.0
  %2578 = vmatprep.subr.mxu0 0.0
  %2579 = vmatpush2.msra.mxu0 0.0
  %2580 = vmatprep.subr.mxu0 0.0
  %2581 = vmatpush2.msra.mxu0 0.0
  %2582 = vmatprep.subr.mxu0 0.0
  %2583 = vmatpush2.msra.mxu0 0.0
  %2584 = vmatprep.subr.mxu0 0.0
  %2585 = vmatpush2.msra.mxu0 0.0
  %2586 = vmatprep.subr.mxu0 0.0
  %2587 = vmatpush2.msra.mxu0 0.0
  %2588 = vmatprep.subr.mxu0 0.0
  %2589 = vmatpush2.msra.mxu0 0.0
  %2590 = vmatprep.subr.mxu0 0.0
  %2591 = vmatpush2.msra.mxu0 0.0
  %2592 = vmatprep.subr.mxu0 0.0
  %2593 = vmatpush2.msra.mxu0 0.0
  %2594 = vmatprep.subr.mxu0 0.0
  %2595 = vmatpush2.msra.mxu0 0.0
  %2596 = vmatprep.subr.mxu0 0.0
  %2597 = vmatpush2.msra.mxu0 0.0
  %2598 = vmatprep.subr.mxu0 0.0
  %2599 = vmatpush2.msra.mxu0 0.0
  %2600 = vmatprep.subr.mxu0 0.0
  %2601 = vmatpush2.msra.mxu0 0.0
  %2602 = vmatprep.subr.mxu0 0.0
  %2603 = vmatpush2.msra.mxu0 0.0
  %2604 = vmatprep.mubr.f32.mxu0 0.0
  %2605 = vmatmul.mubr.f32.gmra.mxu0 %v2538
  %v2606 = vpop.f32.mrf.mxu0
  %v2607 = vadd.f32 0.0, %v2606
  %v2608 = vpop.f32.mrf.mxu0
  %2609 = vdwg.mxu0
  %v2610 = vadd.f32 %v2535, %v2607
  %v2612 = vlaneseq
  %v2613 = vshrl.u32 %v2612, 7
  %v2614 = vsub.s32 0, %v2613
  %v2615 = vrot.slane %v131, %v2614
  %v2617 = vadd.f32 %v2610, %v2615
  %v2618 = vxor.u32 %v2617, 2147483648
  %v2619 = vmul.f32 %v2618, 1.442695
  %v2620 = vpow.pop %v2619
  %v2621 = vadd.f32 %v2620, 1.0
  %v2622 = vrcp.pop %v2621
  %v2623 = vmul.f32 1.0, %v2622
  %v2624 = vtanh.pop %v2617
  %v2625 = vmul.f32 %v2623, 0.0
  %2627 = vrot.lane.b32.xlu0 %v2624, 96
  %v2628 = vpop.permute.xlu0 %2627
  %v2630 = vmul.f32 %v2623, %v2628
  %2632 = vrot.lane.b32.xlu0 %v2630, 16
  %v2633 = vpop.permute.xlu0 %2632
  %v2635 = vadd.f32 %v2625, %v2633
  %v2636 = vtanh.pop %v2635
  %2638 = vrot.lane.b32.xlu0 %v2636, 32
  %v2639 = vpop.permute.xlu0 %2638
  %v2641 = vmul.f32 %v2623, %v2639
  %2643 = vrot.lane.b32.xlu0 %v2641, 80
  %v2644 = vpop.permute.xlu0 %2643
  %v2646 = vsel %vm503, %v2644, %v2635
  %2648 = vrot.lane.b32.xlu0 %v2205, 112
  %v2649 = vpop.permute.xlu0 %2648
  %v2652 = vsel %vm225, %v2646, 0
  %2654 = vmatprep.subr.mxu0 0.0
  %2655 = vmatpush1.msra.mxu0 0.0
  %2656 = vmatprep.subr.mxu0 0.0
  %2657 = vmatpush1.msra.mxu0 0.0
  %2658 = vmatprep.subr.mxu0 0.0
  %2659 = vmatpush1.msra.mxu0 0.0
  %2660 = vmatprep.subr.mxu0 0.0
  %2661 = vmatpush1.msra.mxu0 0.0
  %2662 = vmatprep.subr.mxu0 0.0
  %2663 = vmatpush1.msra.mxu0 0.0
  %2664 = vmatprep.subr.mxu0 0.0
  %2665 = vmatpush1.msra.mxu0 0.0
  %2666 = vmatprep.subr.mxu0 0.0
  %2667 = vmatpush1.msra.mxu0 0.0
  %2668 = vmatprep.subr.mxu0 0.0
  %2669 = vmatpush1.msra.mxu0 0.0
  %2670 = vmatprep.subr.mxu0 0.0
  %2671 = vmatpush1.msra.mxu0 0.0
  %2672 = vmatprep.subr.mxu0 0.0
  %2673 = vmatpush1.msra.mxu0 0.0
  %2674 = vmatprep.subr.mxu0 0.0
  %2675 = vmatpush1.msra.mxu0 0.0
  %2676 = vmatprep.subr.mxu0 0.0
  %2677 = vmatpush1.msra.mxu0 0.0
  %2678 = vmatprep.subr.mxu0 0.0
  %2679 = vmatpush1.msra.mxu0 %v96
  %2680 = vmatprep.subr.mxu0 0.0
  %2681 = vmatpush1.msra.mxu0 %v95
  %2682 = vmatprep.subr.mxu0 0.0
  %2683 = vmatpush1.msra.mxu0 %v94
  %2684 = vmatprep.subr.mxu0 0.0
  %2685 = vmatpush1.msra.mxu0 %v93
  %2686 = vmatprep.subr.mxu0 0.0
  %2687 = vmatpush2.msra.mxu0 0.0
  %2688 = vmatprep.subr.mxu0 0.0
  %2689 = vmatpush2.msra.mxu0 0.0
  %2690 = vmatprep.subr.mxu0 0.0
  %2691 = vmatpush2.msra.mxu0 0.0
  %2692 = vmatprep.subr.mxu0 0.0
  %2693 = vmatpush2.msra.mxu0 0.0
  %2694 = vmatprep.subr.mxu0 0.0
  %2695 = vmatpush2.msra.mxu0 0.0
  %2696 = vmatprep.subr.mxu0 0.0
  %2697 = vmatpush2.msra.mxu0 0.0
  %2698 = vmatprep.subr.mxu0 0.0
  %2699 = vmatpush2.msra.mxu0 0.0
  %2700 = vmatprep.subr.mxu0 0.0
  %2701 = vmatpush2.msra.mxu0 0.0
  %2702 = vmatprep.subr.mxu0 0.0
  %2703 = vmatpush2.msra.mxu0 0.0
  %2704 = vmatprep.subr.mxu0 0.0
  %2705 = vmatpush2.msra.mxu0 0.0
  %2706 = vmatprep.subr.mxu0 0.0
  %2707 = vmatpush2.msra.mxu0 0.0
  %2708 = vmatprep.subr.mxu0 0.0
  %2709 = vmatpush2.msra.mxu0 0.0
  %2710 = vmatprep.subr.mxu0 0.0
  %2711 = vmatpush2.msra.mxu0 0.0
  %2712 = vmatprep.subr.mxu0 0.0
  %2713 = vmatpush2.msra.mxu0 0.0
  %2714 = vmatprep.subr.mxu0 0.0
  %2715 = vmatpush2.msra.mxu0 0.0
  %2716 = vmatprep.subr.mxu0 0.0
  %2717 = vmatpush2.msra.mxu0 0.0
  %2718 = vmatprep.mubr.f32.mxu0 0.0
  %2719 = vmatmul.mubr.f32.gmra.mxu0 %v2652
  %v2720 = vpop.f32.mrf.mxu0
  %v2721 = vadd.f32 %v2649, %v2720
  %v2722 = vpop.f32.mrf.mxu0
  %2723 = vdwg.mxu0
  %v2724 = vadd.f32 %v2721, %v2282
  %v2725 = vtanh.pop %v2724
  %v2727 = vsel %vm503, %v2725, 0
  %2729 = vmatprep.subr.mxu0 0.0
  %2730 = vmatpush1.msra.mxu0 0.0
  %2731 = vmatprep.subr.mxu0 0.0
  %2732 = vmatpush1.msra.mxu0 0.0
  %2733 = vmatprep.subr.mxu0 0.0
  %2734 = vmatpush1.msra.mxu0 0.0
  %2735 = vmatprep.subr.mxu0 0.0
  %2736 = vmatpush1.msra.mxu0 0.0
  %2737 = vmatprep.subr.mxu0 0.0
  %2738 = vmatpush1.msra.mxu0 0.0
  %2739 = vmatprep.subr.mxu0 0.0
  %2740 = vmatpush1.msra.mxu0 0.0
  %2741 = vmatprep.subr.mxu0 0.0
  %2742 = vmatpush1.msra.mxu0 0.0
  %2743 = vmatprep.subr.mxu0 0.0
  %2744 = vmatpush1.msra.mxu0 0.0
  %2745 = vmatprep.subr.mxu0 0.0
  %2746 = vmatpush1.msra.mxu0 0.0
  %2747 = vmatprep.subr.mxu0 0.0
  %2748 = vmatpush1.msra.mxu0 0.0
  %2749 = vmatprep.subr.mxu0 0.0
  %2750 = vmatpush1.msra.mxu0 0.0
  %2751 = vmatprep.subr.mxu0 0.0
  %2752 = vmatpush1.msra.mxu0 0.0
  %2753 = vmatprep.subr.mxu0 0.0
  %2754 = vmatpush1.msra.mxu0 0.0
  %2755 = vmatprep.subr.mxu0 0.0
  %2756 = vmatpush1.msra.mxu0 0.0
  %2757 = vmatprep.subr.mxu0 0.0
  %2758 = vmatpush1.msra.mxu0 %v113
  %2759 = vmatprep.subr.mxu0 0.0
  %2760 = vmatpush1.msra.mxu0 %v112
  %2761 = vmatprep.subr.mxu0 0.0
  %2762 = vmatpush2.msra.mxu0 0.0
  %2763 = vmatprep.subr.mxu0 0.0
  %2764 = vmatpush2.msra.mxu0 0.0
  %2765 = vmatprep.subr.mxu0 0.0
  %2766 = vmatpush2.msra.mxu0 0.0
  %2767 = vmatprep.subr.mxu0 0.0
  %2768 = vmatpush2.msra.mxu0 0.0
  %2769 = vmatprep.subr.mxu0 0.0
  %2770 = vmatpush2.msra.mxu0 0.0
  %2771 = vmatprep.subr.mxu0 0.0
  %2772 = vmatpush2.msra.mxu0 0.0
  %2773 = vmatprep.subr.mxu0 0.0
  %2774 = vmatpush2.msra.mxu0 0.0
  %2775 = vmatprep.subr.mxu0 0.0
  %2776 = vmatpush2.msra.mxu0 0.0
  %2777 = vmatprep.subr.mxu0 0.0
  %2778 = vmatpush2.msra.mxu0 0.0
  %2779 = vmatprep.subr.mxu0 0.0
  %2780 = vmatpush2.msra.mxu0 0.0
  %2781 = vmatprep.subr.mxu0 0.0
  %2782 = vmatpush2.msra.mxu0 0.0
  %2783 = vmatprep.subr.mxu0 0.0
  %2784 = vmatpush2.msra.mxu0 0.0
  %2785 = vmatprep.subr.mxu0 0.0
  %2786 = vmatpush2.msra.mxu0 0.0
  %2787 = vmatprep.subr.mxu0 0.0
  %2788 = vmatpush2.msra.mxu0 0.0
  %2789 = vmatprep.subr.mxu0 0.0
  %2790 = vmatpush2.msra.mxu0 0.0
  %2791 = vmatprep.subr.mxu0 0.0
  %2792 = vmatpush2.msra.mxu0 0.0
  %2793 = vmatprep.mubr.f32.mxu0 0.0
  %2794 = vmatmul.mubr.f32.gmra.mxu0 %v2727
  %v2795 = vpop.f32.mrf.mxu0
  %v2796 = vadd.f32 %v2290, %v2795
  %v2797 = vpop.f32.mrf.mxu0
  %2798 = vdwg.mxu0
  %v2799 = vsel %vm314, %v2796, -inf
  %2800 = vmax.xlane.f32.xlu0 %v2799
  %v2801 = vpop.xlane.xlu0 %2800
  %v2802 = vsub.f32 %v2796, %v2801
  %v2803 = vmul.f32 %v2802, 1.442695
  %v2804 = vpow.pop %v2803
  %v2805 = vsel %vm314, %v2804, 0.0
  %2806 = vadd.xlane.f32.xlu0 %v2805
  %v2807 = vpop.xlane.xlu0 %2806
  %v2808 = vrcp.pop %v2807
  %v2809 = vmul.f32 %v2804, %v2808
  %v2811 = vsel %vm314, %v2809, 0
  %2813 = vmatprep.subr.mxu0 0.0
  %2814 = vmatpush1.msra.mxu0 0.0
  %2815 = vmatprep.subr.mxu0 0.0
  %2816 = vmatpush1.msra.mxu0 0.0
  %2817 = vmatprep.subr.mxu0 0.0
  %2818 = vmatpush1.msra.mxu0 0.0
  %2819 = vmatprep.subr.mxu0 0.0
  %2820 = vmatpush1.msra.mxu0 0.0
  %2821 = vmatprep.subr.mxu0 0.0
  %2822 = vmatpush1.msra.mxu0 0.0
  %2823 = vmatprep.subr.mxu0 0.0
  %2824 = vmatpush1.msra.mxu0 0.0
  %2825 = vmatprep.subr.mxu0 0.0
  %2826 = vmatpush1.msra.mxu0 0.0
  %2827 = vmatprep.subr.mxu0 0.0
  %2828 = vmatpush1.msra.mxu0 0.0
  %2829 = vmatprep.subr.mxu0 0.0
  %2830 = vmatpush1.msra.mxu0 0.0
  %2831 = vmatprep.subr.mxu0 0.0
  %2832 = vmatpush1.msra.mxu0 0.0
  %2833 = vmatprep.subr.mxu0 0.0
  %2834 = vmatpush1.msra.mxu0 0.0
  %2835 = vmatprep.subr.mxu0 0.0
  %2836 = vmatpush1.msra.mxu0 0.0
  %2837 = vmatprep.subr.mxu0 0.0
  %2838 = vmatpush1.msra.mxu0 0.0
  %2839 = vmatprep.subr.mxu0 0.0
  %2840 = vmatpush1.msra.mxu0 0.0
  %2841 = vmatprep.subr.mxu0 0.0
  %2842 = vmatpush1.msra.mxu0 0.0
  %2843 = vmatprep.subr.mxu0 0.0
  %2844 = vmatpush1.msra.mxu0 %v2380
  %2845 = vmatprep.subr.mxu0 0.0
  %2846 = vmatpush2.msra.mxu0 0.0
  %2847 = vmatprep.subr.mxu0 0.0
  %2848 = vmatpush2.msra.mxu0 0.0
  %2849 = vmatprep.subr.mxu0 0.0
  %2850 = vmatpush2.msra.mxu0 0.0
  %2851 = vmatprep.subr.mxu0 0.0
  %2852 = vmatpush2.msra.mxu0 0.0
  %2853 = vmatprep.subr.mxu0 0.0
  %2854 = vmatpush2.msra.mxu0 0.0
  %2855 = vmatprep.subr.mxu0 0.0
  %2856 = vmatpush2.msra.mxu0 0.0
  %2857 = vmatprep.subr.mxu0 0.0
  %2858 = vmatpush2.msra.mxu0 0.0
  %2859 = vmatprep.subr.mxu0 0.0
  %2860 = vmatpush2.msra.mxu0 0.0
  %2861 = vmatprep.subr.mxu0 0.0
  %2862 = vmatpush2.msra.mxu0 0.0
  %2863 = vmatprep.subr.mxu0 0.0
  %2864 = vmatpush2.msra.mxu0 0.0
  %2865 = vmatprep.subr.mxu0 0.0
  %2866 = vmatpush2.msra.mxu0 0.0
  %2867 = vmatprep.subr.mxu0 0.0
  %2868 = vmatpush2.msra.mxu0 0.0
  %2869 = vmatprep.subr.mxu0 0.0
  %2870 = vmatpush2.msra.mxu0 0.0
  %2871 = vmatprep.subr.mxu0 0.0
  %2872 = vmatpush2.msra.mxu0 0.0
  %2873 = vmatprep.subr.mxu0 0.0
  %2874 = vmatpush2.msra.mxu0 0.0
  %2875 = vmatprep.subr.mxu0 0.0
  %2876 = vmatpush2.msra.mxu0 0.0
  %2877 = vmatprep.mubr.f32.mxu0 0.0
  %2878 = vmatmul.mubr.f32.gmra.mxu0 %v2811
  %v2879 = vpop.f32.mrf.mxu0
  %v2880 = vadd.f32 0.0, %v2879
  %v2881 = vpop.f32.mrf.mxu0
  %2882 = vdwg.mxu0
  %v2883 = vmul.f32 %v2880, %v2133
  %2884 = vset.pattern.permute.xlu0 1
  %2885 = vperm.xlu0 %2884, %v74
  %v2886 = vpop.permute.xlu0 %2885
  %v2888 = vmul.f32 %v2886, %v2462
  %v2890 = vsel %vm2134, %v2883, 0
  %2892 = vmatprep.subr.mxu0 0.0
  %2893 = vmatpush1.msra.mxu0 0.0
  %2894 = vmatprep.subr.mxu0 0.0
  %2895 = vmatpush1.msra.mxu0 0.0
  %2896 = vmatprep.subr.mxu0 0.0
  %2897 = vmatpush1.msra.mxu0 %v129
  %2898 = vmatprep.subr.mxu0 0.0
  %2899 = vmatpush1.msra.mxu0 %v128
  %2900 = vmatprep.subr.mxu0 0.0
  %2901 = vmatpush1.msra.mxu0 %v127
  %2902 = vmatprep.subr.mxu0 0.0
  %2903 = vmatpush1.msra.mxu0 %v126
  %2904 = vmatprep.subr.mxu0 0.0
  %2905 = vmatpush1.msra.mxu0 %v125
  %2906 = vmatprep.subr.mxu0 0.0
  %2907 = vmatpush1.msra.mxu0 %v124
  %2908 = vmatprep.subr.mxu0 0.0
  %2909 = vmatpush1.msra.mxu0 %v123
  %2910 = vmatprep.subr.mxu0 0.0
  %2911 = vmatpush1.msra.mxu0 %v122
  %2912 = vmatprep.subr.mxu0 0.0
  %2913 = vmatpush1.msra.mxu0 %v121
  %2914 = vmatprep.subr.mxu0 0.0
  %2915 = vmatpush1.msra.mxu0 %v120
  %2916 = vmatprep.subr.mxu0 0.0
  %2917 = vmatpush1.msra.mxu0 %v119
  %2918 = vmatprep.subr.mxu0 0.0
  %2919 = vmatpush1.msra.mxu0 %v118
  %2920 = vmatprep.subr.mxu0 0.0
  %2921 = vmatpush1.msra.mxu0 %v117
  %2922 = vmatprep.subr.mxu0 0.0
  %2923 = vmatpush1.msra.mxu0 %v116
  %2924 = vmatprep.subr.mxu0 0.0
  %2925 = vmatpush2.msra.mxu0 0.0
  %2926 = vmatprep.subr.mxu0 0.0
  %2927 = vmatpush2.msra.mxu0 0.0
  %2928 = vmatprep.subr.mxu0 0.0
  %2929 = vmatpush2.msra.mxu0 0.0
  %2930 = vmatprep.subr.mxu0 0.0
  %2931 = vmatpush2.msra.mxu0 0.0
  %2932 = vmatprep.subr.mxu0 0.0
  %2933 = vmatpush2.msra.mxu0 0.0
  %2934 = vmatprep.subr.mxu0 0.0
  %2935 = vmatpush2.msra.mxu0 0.0
  %2936 = vmatprep.subr.mxu0 0.0
  %2937 = vmatpush2.msra.mxu0 0.0
  %2938 = vmatprep.subr.mxu0 0.0
  %2939 = vmatpush2.msra.mxu0 0.0
  %2940 = vmatprep.subr.mxu0 0.0
  %2941 = vmatpush2.msra.mxu0 0.0
  %2942 = vmatprep.subr.mxu0 0.0
  %2943 = vmatpush2.msra.mxu0 0.0
  %2944 = vmatprep.subr.mxu0 0.0
  %2945 = vmatpush2.msra.mxu0 0.0
  %2946 = vmatprep.subr.mxu0 0.0
  %2947 = vmatpush2.msra.mxu0 0.0
  %2948 = vmatprep.subr.mxu0 0.0
  %2949 = vmatpush2.msra.mxu0 0.0
  %2950 = vmatprep.subr.mxu0 0.0
  %2951 = vmatpush2.msra.mxu0 0.0
  %2952 = vmatprep.subr.mxu0 0.0
  %2953 = vmatpush2.msra.mxu0 0.0
  %2954 = vmatprep.subr.mxu0 0.0
  %2955 = vmatpush2.msra.mxu0 0.0
  %2956 = vmatprep.mubr.f32.mxu0 0.0
  %2957 = vmatmul.mubr.f32.gmra.mxu0 %v2890
  %v2958 = vpop.f32.mrf.mxu0
  %v2959 = vadd.f32 %v2888, %v2958
  %v2960 = vpop.f32.mrf.mxu0
  %2961 = vdwg.mxu0
  %v2962 = vsel %vm503, %v2644, 0
  %2964 = vmatprep.subr.mxu0 0.0
  %2965 = vmatpush1.msra.mxu0 0.0
  %2966 = vmatprep.subr.mxu0 0.0
  %2967 = vmatpush1.msra.mxu0 0.0
  %2968 = vmatprep.subr.mxu0 0.0
  %2969 = vmatpush1.msra.mxu0 0.0
  %2970 = vmatprep.subr.mxu0 0.0
  %2971 = vmatpush1.msra.mxu0 0.0
  %2972 = vmatprep.subr.mxu0 0.0
  %2973 = vmatpush1.msra.mxu0 0.0
  %2974 = vmatprep.subr.mxu0 0.0
  %2975 = vmatpush1.msra.mxu0 0.0
  %2976 = vmatprep.subr.mxu0 0.0
  %2977 = vmatpush1.msra.mxu0 0.0
  %2978 = vmatprep.subr.mxu0 0.0
  %2979 = vmatpush1.msra.mxu0 0.0
  %2980 = vmatprep.subr.mxu0 0.0
  %2981 = vmatpush1.msra.mxu0 0.0
  %2982 = vmatprep.subr.mxu0 0.0
  %2983 = vmatpush1.msra.mxu0 0.0
  %2984 = vmatprep.subr.mxu0 0.0
  %2985 = vmatpush1.msra.mxu0 0.0
  %2986 = vmatprep.subr.mxu0 0.0
  %2987 = vmatpush1.msra.mxu0 0.0
  %2988 = vmatprep.subr.mxu0 0.0
  %2989 = vmatpush1.msra.mxu0 0.0
  %2990 = vmatprep.subr.mxu0 0.0
  %2991 = vmatpush1.msra.mxu0 0.0
  %2992 = vmatprep.subr.mxu0 0.0
  %2993 = vmatpush1.msra.mxu0 %v133
  %2994 = vmatprep.subr.mxu0 0.0
  %2995 = vmatpush1.msra.mxu0 %v132
  %2996 = vmatprep.subr.mxu0 0.0
  %2997 = vmatpush2.msra.mxu0 0.0
  %2998 = vmatprep.subr.mxu0 0.0
  %2999 = vmatpush2.msra.mxu0 0.0
  %3000 = vmatprep.subr.mxu0 0.0
  %3001 = vmatpush2.msra.mxu0 0.0
  %3002 = vmatprep.subr.mxu0 0.0
  %3003 = vmatpush2.msra.mxu0 0.0
  %3004 = vmatprep.subr.mxu0 0.0
  %3005 = vmatpush2.msra.mxu0 0.0
  %3006 = vmatprep.subr.mxu0 0.0
  %3007 = vmatpush2.msra.mxu0 0.0
  %3008 = vmatprep.subr.mxu0 0.0
  %3009 = vmatpush2.msra.mxu0 0.0
  %3010 = vmatprep.subr.mxu0 0.0
  %3011 = vmatpush2.msra.mxu0 0.0
  %3012 = vmatprep.subr.mxu0 0.0
  %3013 = vmatpush2.msra.mxu0 0.0
  %3014 = vmatprep.subr.mxu0 0.0
  %3015 = vmatpush2.msra.mxu0 0.0
  %3016 = vmatprep.subr.mxu0 0.0
  %3017 = vmatpush2.msra.mxu0 0.0
  %3018 = vmatprep.subr.mxu0 0.0
  %3019 = vmatpush2.msra.mxu0 0.0
  %3020 = vmatprep.subr.mxu0 0.0
  %3021 = vmatpush2.msra.mxu0 0.0
  %3022 = vmatprep.subr.mxu0 0.0
  %3023 = vmatpush2.msra.mxu0 0.0
  %3024 = vmatprep.subr.mxu0 0.0
  %3025 = vmatpush2.msra.mxu0 0.0
  %3026 = vmatprep.subr.mxu0 0.0
  %3027 = vmatpush2.msra.mxu0 0.0
  %3028 = vmatprep.mubr.f32.mxu0 0.0
  %3029 = vmatmul.mubr.f32.gmra.mxu0 %v2962
  %v3030 = vpop.f32.mrf.mxu0
  %v3031 = vadd.f32 0.0, %v3030
  %v3032 = vpop.f32.mrf.mxu0
  %3033 = vdwg.mxu0
  %v3034 = vadd.f32 %v2959, %v3031
  %v3035 = vadd.f32 %v3034, %v2615
  %v3036 = vxor.u32 %v3035, 2147483648
  %v3037 = vmul.f32 %v3036, 1.442695
  %v3038 = vpow.pop %v3037
  %v3039 = vadd.f32 %v3038, 1.0
  %v3040 = vrcp.pop %v3039
  %v3041 = vmul.f32 1.0, %v3040
  %v3042 = vtanh.pop %v3035
  %v3043 = vmul.f32 %v3041, %v2635
  %3045 = vrot.lane.b32.xlu0 %v3042, 96
  %v3046 = vpop.permute.xlu0 %3045
  %v3048 = vmul.f32 %v3041, %v3046
  %3050 = vrot.lane.b32.xlu0 %v3048, 16
  %v3051 = vpop.permute.xlu0 %3050
  %v3053 = vadd.f32 %v3043, %v3051
  %v3054 = vtanh.pop %v3053
  %3056 = vrot.lane.b32.xlu0 %v3054, 32
  %v3057 = vpop.permute.xlu0 %3056
  %v3059 = vmul.f32 %v3041, %v3057
  %3061 = vrot.lane.b32.xlu0 %v3059, 80
  %v3062 = vpop.permute.xlu0 %3061
  %v3064 = vsel %vm503, %v3062, %v3053
  %3065 = vrot.lane.b32.xlu0 %v2205, 96
  %v3066 = vpop.permute.xlu0 %3065
  %v3069 = vsel %vm225, %v3064, 0
  %3071 = vmatprep.subr.mxu0 0.0
  %3072 = vmatpush1.msra.mxu0 0.0
  %3073 = vmatprep.subr.mxu0 0.0
  %3074 = vmatpush1.msra.mxu0 0.0
  %3075 = vmatprep.subr.mxu0 0.0
  %3076 = vmatpush1.msra.mxu0 0.0
  %3077 = vmatprep.subr.mxu0 0.0
  %3078 = vmatpush1.msra.mxu0 0.0
  %3079 = vmatprep.subr.mxu0 0.0
  %3080 = vmatpush1.msra.mxu0 0.0
  %3081 = vmatprep.subr.mxu0 0.0
  %3082 = vmatpush1.msra.mxu0 0.0
  %3083 = vmatprep.subr.mxu0 0.0
  %3084 = vmatpush1.msra.mxu0 0.0
  %3085 = vmatprep.subr.mxu0 0.0
  %3086 = vmatpush1.msra.mxu0 0.0
  %3087 = vmatprep.subr.mxu0 0.0
  %3088 = vmatpush1.msra.mxu0 0.0
  %3089 = vmatprep.subr.mxu0 0.0
  %3090 = vmatpush1.msra.mxu0 0.0
  %3091 = vmatprep.subr.mxu0 0.0
  %3092 = vmatpush1.msra.mxu0 0.0
  %3093 = vmatprep.subr.mxu0 0.0
  %3094 = vmatpush1.msra.mxu0 0.0
  %3095 = vmatprep.subr.mxu0 0.0
  %3096 = vmatpush1.msra.mxu0 %v96
  %3097 = vmatprep.subr.mxu0 0.0
  %3098 = vmatpush1.msra.mxu0 %v95
  %3099 = vmatprep.subr.mxu0 0.0
  %3100 = vmatpush1.msra.mxu0 %v94
  %3101 = vmatprep.subr.mxu0 0.0
  %3102 = vmatpush1.msra.mxu0 %v93
  %3103 = vmatprep.subr.mxu0 0.0
  %3104 = vmatpush2.msra.mxu0 0.0
  %3105 = vmatprep.subr.mxu0 0.0
  %3106 = vmatpush2.msra.mxu0 0.0
  %3107 = vmatprep.subr.mxu0 0.0
  %3108 = vmatpush2.msra.mxu0 0.0
  %3109 = vmatprep.subr.mxu0 0.0
  %3110 = vmatpush2.msra.mxu0 0.0
  %3111 = vmatprep.subr.mxu0 0.0
  %3112 = vmatpush2.msra.mxu0 0.0
  %3113 = vmatprep.subr.mxu0 0.0
  %3114 = vmatpush2.msra.mxu0 0.0
  %3115 = vmatprep.subr.mxu0 0.0
  %3116 = vmatpush2.msra.mxu0 0.0
  %3117 = vmatprep.subr.mxu0 0.0
  %3118 = vmatpush2.msra.mxu0 0.0
  %3119 = vmatprep.subr.mxu0 0.0
  %3120 = vmatpush2.msra.mxu0 0.0
  %3121 = vmatprep.subr.mxu0 0.0
  %3122 = vmatpush2.msra.mxu0 0.0
  %3123 = vmatprep.subr.mxu0 0.0
  %3124 = vmatpush2.msra.mxu0 0.0
  %3125 = vmatprep.subr.mxu0 0.0
  %3126 = vmatpush2.msra.mxu0 0.0
  %3127 = vmatprep.subr.mxu0 0.0
  %3128 = vmatpush2.msra.mxu0 0.0
  %3129 = vmatprep.subr.mxu0 0.0
  %3130 = vmatpush2.msra.mxu0 0.0
  %3131 = vmatprep.subr.mxu0 0.0
  %3132 = vmatpush2.msra.mxu0 0.0
  %3133 = vmatprep.subr.mxu0 0.0
  %3134 = vmatpush2.msra.mxu0 0.0
  %3135 = vmatprep.mubr.f32.mxu0 0.0
  %3136 = vmatmul.mubr.f32.gmra.mxu0 %v3069
  %v3137 = vpop.f32.mrf.mxu0
  %v3138 = vadd.f32 %v3066, %v3137
  %v3139 = vpop.f32.mrf.mxu0
  %3140 = vdwg.mxu0
  %v3141 = vadd.f32 %v3138, %v2282
  %v3142 = vtanh.pop %v3141
  %v3144 = vsel %vm503, %v3142, 0
  %3146 = vmatprep.subr.mxu0 0.0
  %3147 = vmatpush1.msra.mxu0 0.0
  %3148 = vmatprep.subr.mxu0 0.0
  %3149 = vmatpush1.msra.mxu0 0.0
  %3150 = vmatprep.subr.mxu0 0.0
  %3151 = vmatpush1.msra.mxu0 0.0
  %3152 = vmatprep.subr.mxu0 0.0
  %3153 = vmatpush1.msra.mxu0 0.0
  %3154 = vmatprep.subr.mxu0 0.0
  %3155 = vmatpush1.msra.mxu0 0.0
  %3156 = vmatprep.subr.mxu0 0.0
  %3157 = vmatpush1.msra.mxu0 0.0
  %3158 = vmatprep.subr.mxu0 0.0
  %3159 = vmatpush1.msra.mxu0 0.0
  %3160 = vmatprep.subr.mxu0 0.0
  %3161 = vmatpush1.msra.mxu0 0.0
  %3162 = vmatprep.subr.mxu0 0.0
  %3163 = vmatpush1.msra.mxu0 0.0
  %3164 = vmatprep.subr.mxu0 0.0
  %3165 = vmatpush1.msra.mxu0 0.0
  %3166 = vmatprep.subr.mxu0 0.0
  %3167 = vmatpush1.msra.mxu0 0.0
  %3168 = vmatprep.subr.mxu0 0.0
  %3169 = vmatpush1.msra.mxu0 0.0
  %3170 = vmatprep.subr.mxu0 0.0
  %3171 = vmatpush1.msra.mxu0 0.0
  %3172 = vmatprep.subr.mxu0 0.0
  %3173 = vmatpush1.msra.mxu0 0.0
  %3174 = vmatprep.subr.mxu0 0.0
  %3175 = vmatpush1.msra.mxu0 %v113
  %3176 = vmatprep.subr.mxu0 0.0
  %3177 = vmatpush1.msra.mxu0 %v112
  %3178 = vmatprep.subr.mxu0 0.0
  %3179 = vmatpush2.msra.mxu0 0.0
  %3180 = vmatprep.subr.mxu0 0.0
  %3181 = vmatpush2.msra.mxu0 0.0
  %3182 = vmatprep.subr.mxu0 0.0
  %3183 = vmatpush2.msra.mxu0 0.0
  %3184 = vmatprep.subr.mxu0 0.0
  %3185 = vmatpush2.msra.mxu0 0.0
  %3186 = vmatprep.subr.mxu0 0.0
  %3187 = vmatpush2.msra.mxu0 0.0
  %3188 = vmatprep.subr.mxu0 0.0
  %3189 = vmatpush2.msra.mxu0 0.0
  %3190 = vmatprep.subr.mxu0 0.0
  %3191 = vmatpush2.msra.mxu0 0.0
  %3192 = vmatprep.subr.mxu0 0.0
  %3193 = vmatpush2.msra.mxu0 0.0
  %3194 = vmatprep.subr.mxu0 0.0
  %3195 = vmatpush2.msra.mxu0 0.0
  %3196 = vmatprep.subr.mxu0 0.0
  %3197 = vmatpush2.msra.mxu0 0.0
  %3198 = vmatprep.subr.mxu0 0.0
  %3199 = vmatpush2.msra.mxu0 0.0
  %3200 = vmatprep.subr.mxu0 0.0
  %3201 = vmatpush2.msra.mxu0 0.0
  %3202 = vmatprep.subr.mxu0 0.0
  %3203 = vmatpush2.msra.mxu0 0.0
  %3204 = vmatprep.subr.mxu0 0.0
  %3205 = vmatpush2.msra.mxu0 0.0
  %3206 = vmatprep.subr.mxu0 0.0
  %3207 = vmatpush2.msra.mxu0 0.0
  %3208 = vmatprep.subr.mxu0 0.0
  %3209 = vmatpush2.msra.mxu0 0.0
  %3210 = vmatprep.mubr.f32.mxu0 0.0
  %3211 = vmatmul.mubr.f32.gmra.mxu0 %v3144
  %v3212 = vpop.f32.mrf.mxu0
  %v3213 = vadd.f32 %v2290, %v3212
  %v3214 = vpop.f32.mrf.mxu0
  %3215 = vdwg.mxu0
  %v3216 = vsel %vm314, %v3213, -inf
  %3217 = vmax.xlane.f32.xlu0 %v3216
  %v3218 = vpop.xlane.xlu0 %3217
  %v3219 = vsub.f32 %v3213, %v3218
  %v3220 = vmul.f32 %v3219, 1.442695
  %v3221 = vpow.pop %v3220
  %v3222 = vsel %vm314, %v3221, 0.0
  %3223 = vadd.xlane.f32.xlu0 %v3222
  %v3224 = vpop.xlane.xlu0 %3223
  %v3225 = vrcp.pop %v3224
  %v3226 = vmul.f32 %v3221, %v3225
  %v3228 = vsel %vm314, %v3226, 0
  %3230 = vmatprep.subr.mxu0 0.0
  %3231 = vmatpush1.msra.mxu0 0.0
  %3232 = vmatprep.subr.mxu0 0.0
  %3233 = vmatpush1.msra.mxu0 0.0
  %3234 = vmatprep.subr.mxu0 0.0
  %3235 = vmatpush1.msra.mxu0 0.0
  %3236 = vmatprep.subr.mxu0 0.0
  %3237 = vmatpush1.msra.mxu0 0.0
  %3238 = vmatprep.subr.mxu0 0.0
  %3239 = vmatpush1.msra.mxu0 0.0
  %3240 = vmatprep.subr.mxu0 0.0
  %3241 = vmatpush1.msra.mxu0 0.0
  %3242 = vmatprep.subr.mxu0 0.0
  %3243 = vmatpush1.msra.mxu0 0.0
  %3244 = vmatprep.subr.mxu0 0.0
  %3245 = vmatpush1.msra.mxu0 0.0
  %3246 = vmatprep.subr.mxu0 0.0
  %3247 = vmatpush1.msra.mxu0 0.0
  %3248 = vmatprep.subr.mxu0 0.0
  %3249 = vmatpush1.msra.mxu0 0.0
  %3250 = vmatprep.subr.mxu0 0.0
  %3251 = vmatpush1.msra.mxu0 0.0
  %3252 = vmatprep.subr.mxu0 0.0
  %3253 = vmatpush1.msra.mxu0 0.0
  %3254 = vmatprep.subr.mxu0 0.0
  %3255 = vmatpush1.msra.mxu0 0.0
  %3256 = vmatprep.subr.mxu0 0.0
  %3257 = vmatpush1.msra.mxu0 0.0
  %3258 = vmatprep.subr.mxu0 0.0
  %3259 = vmatpush1.msra.mxu0 0.0
  %3260 = vmatprep.subr.mxu0 0.0
  %3261 = vmatpush1.msra.mxu0 %v2380
  %3262 = vmatprep.subr.mxu0 0.0
  %3263 = vmatpush2.msra.mxu0 0.0
  %3264 = vmatprep.subr.mxu0 0.0
  %3265 = vmatpush2.msra.mxu0 0.0
  %3266 = vmatprep.subr.mxu0 0.0
  %3267 = vmatpush2.msra.mxu0 0.0
  %3268 = vmatprep.subr.mxu0 0.0
  %3269 = vmatpush2.msra.mxu0 0.0
  %3270 = vmatprep.subr.mxu0 0.0
  %3271 = vmatpush2.msra.mxu0 0.0
  %3272 = vmatprep.subr.mxu0 0.0
  %3273 = vmatpush2.msra.mxu0 0.0
  %3274 = vmatprep.subr.mxu0 0.0
  %3275 = vmatpush2.msra.mxu0 0.0
  %3276 = vmatprep.subr.mxu0 0.0
  %3277 = vmatpush2.msra.mxu0 0.0
  %3278 = vmatprep.subr.mxu0 0.0
  %3279 = vmatpush2.msra.mxu0 0.0
  %3280 = vmatprep.subr.mxu0 0.0
  %3281 = vmatpush2.msra.mxu0 0.0
  %3282 = vmatprep.subr.mxu0 0.0
  %3283 = vmatpush2.msra.mxu0 0.0
  %3284 = vmatprep.subr.mxu0 0.0
  %3285 = vmatpush2.msra.mxu0 0.0
  %3286 = vmatprep.subr.mxu0 0.0
  %3287 = vmatpush2.msra.mxu0 0.0
  %3288 = vmatprep.subr.mxu0 0.0
  %3289 = vmatpush2.msra.mxu0 0.0
  %3290 = vmatprep.subr.mxu0 0.0
  %3291 = vmatpush2.msra.mxu0 0.0
  %3292 = vmatprep.subr.mxu0 0.0
  %3293 = vmatpush2.msra.mxu0 0.0
  %3294 = vmatprep.mubr.f32.mxu0 0.0
  %3295 = vmatmul.mubr.f32.gmra.mxu0 %v3228
  %v3296 = vpop.f32.mrf.mxu0
  %v3297 = vadd.f32 0.0, %v3296
  %v3298 = vpop.f32.mrf.mxu0
  %3299 = vdwg.mxu0
  %v3300 = vmul.f32 %v3297, %v2133
  %3301 = vset.pattern.permute.xlu0 2
  %3302 = vperm.xlu0 %3301, %v74
  %v3303 = vpop.permute.xlu0 %3302
  %v3305 = vmul.f32 %v3303, %v2462
  %v3307 = vsel %vm2134, %v3300, 0
  %3309 = vmatprep.subr.mxu0 0.0
  %3310 = vmatpush1.msra.mxu0 0.0
  %3311 = vmatprep.subr.mxu0 0.0
  %3312 = vmatpush1.msra.mxu0 0.0
  %3313 = vmatprep.subr.mxu0 0.0
  %3314 = vmatpush1.msra.mxu0 %v129
  %3315 = vmatprep.subr.mxu0 0.0
  %3316 = vmatpush1.msra.mxu0 %v128
  %3317 = vmatprep.subr.mxu0 0.0
  %3318 = vmatpush1.msra.mxu0 %v127
  %3319 = vmatprep.subr.mxu0 0.0
  %3320 = vmatpush1.msra.mxu0 %v126
  %3321 = vmatprep.subr.mxu0 0.0
  %3322 = vmatpush1.msra.mxu0 %v125
  %3323 = vmatprep.subr.mxu0 0.0
  %3324 = vmatpush1.msra.mxu0 %v124
  %3325 = vmatprep.subr.mxu0 0.0
  %3326 = vmatpush1.msra.mxu0 %v123
  %3327 = vmatprep.subr.mxu0 0.0
  %3328 = vmatpush1.msra.mxu0 %v122
  %3329 = vmatprep.subr.mxu0 0.0
  %3330 = vmatpush1.msra.mxu0 %v121
  %3331 = vmatprep.subr.mxu0 0.0
  %3332 = vmatpush1.msra.mxu0 %v120
  %3333 = vmatprep.subr.mxu0 0.0
  %3334 = vmatpush1.msra.mxu0 %v119
  %3335 = vmatprep.subr.mxu0 0.0
  %3336 = vmatpush1.msra.mxu0 %v118
  %3337 = vmatprep.subr.mxu0 0.0
  %3338 = vmatpush1.msra.mxu0 %v117
  %3339 = vmatprep.subr.mxu0 0.0
  %3340 = vmatpush1.msra.mxu0 %v116
  %3341 = vmatprep.subr.mxu0 0.0
  %3342 = vmatpush2.msra.mxu0 0.0
  %3343 = vmatprep.subr.mxu0 0.0
  %3344 = vmatpush2.msra.mxu0 0.0
  %3345 = vmatprep.subr.mxu0 0.0
  %3346 = vmatpush2.msra.mxu0 0.0
  %3347 = vmatprep.subr.mxu0 0.0
  %3348 = vmatpush2.msra.mxu0 0.0
  %3349 = vmatprep.subr.mxu0 0.0
  %3350 = vmatpush2.msra.mxu0 0.0
  %3351 = vmatprep.subr.mxu0 0.0
  %3352 = vmatpush2.msra.mxu0 0.0
  %3353 = vmatprep.subr.mxu0 0.0
  %3354 = vmatpush2.msra.mxu0 0.0
  %3355 = vmatprep.subr.mxu0 0.0
  %3356 = vmatpush2.msra.mxu0 0.0
  %3357 = vmatprep.subr.mxu0 0.0
  %3358 = vmatpush2.msra.mxu0 0.0
  %3359 = vmatprep.subr.mxu0 0.0
  %3360 = vmatpush2.msra.mxu0 0.0
  %3361 = vmatprep.subr.mxu0 0.0
  %3362 = vmatpush2.msra.mxu0 0.0
  %3363 = vmatprep.subr.mxu0 0.0
  %3364 = vmatpush2.msra.mxu0 0.0
  %3365 = vmatprep.subr.mxu0 0.0
  %3366 = vmatpush2.msra.mxu0 0.0
  %3367 = vmatprep.subr.mxu0 0.0
  %3368 = vmatpush2.msra.mxu0 0.0
  %3369 = vmatprep.subr.mxu0 0.0
  %3370 = vmatpush2.msra.mxu0 0.0
  %3371 = vmatprep.subr.mxu0 0.0
  %3372 = vmatpush2.msra.mxu0 0.0
  %3373 = vmatprep.mubr.f32.mxu0 0.0
  %3374 = vmatmul.mubr.f32.gmra.mxu0 %v3307
  %v3375 = vpop.f32.mrf.mxu0
  %v3376 = vadd.f32 %v3305, %v3375
  %v3377 = vpop.f32.mrf.mxu0
  %3378 = vdwg.mxu0
  %v3379 = vsel %vm503, %v3062, 0
  %3381 = vmatprep.subr.mxu0 0.0
  %3382 = vmatpush1.msra.mxu0 0.0
  %3383 = vmatprep.subr.mxu0 0.0
  %3384 = vmatpush1.msra.mxu0 0.0
  %3385 = vmatprep.subr.mxu0 0.0
  %3386 = vmatpush1.msra.mxu0 0.0
  %3387 = vmatprep.subr.mxu0 0.0
  %3388 = vmatpush1.msra.mxu0 0.0
  %3389 = vmatprep.subr.mxu0 0.0
  %3390 = vmatpush1.msra.mxu0 0.0
  %3391 = vmatprep.subr.mxu0 0.0
  %3392 = vmatpush1.msra.mxu0 0.0
  %3393 = vmatprep.subr.mxu0 0.0
  %3394 = vmatpush1.msra.mxu0 0.0
  %3395 = vmatprep.subr.mxu0 0.0
  %3396 = vmatpush1.msra.mxu0 0.0
  %3397 = vmatprep.subr.mxu0 0.0
  %3398 = vmatpush1.msra.mxu0 0.0
  %3399 = vmatprep.subr.mxu0 0.0
  %3400 = vmatpush1.msra.mxu0 0.0
  %3401 = vmatprep.subr.mxu0 0.0
  %3402 = vmatpush1.msra.mxu0 0.0
  %3403 = vmatprep.subr.mxu0 0.0
  %3404 = vmatpush1.msra.mxu0 0.0
  %3405 = vmatprep.subr.mxu0 0.0
  %3406 = vmatpush1.msra.mxu0 0.0
  %3407 = vmatprep.subr.mxu0 0.0
  %3408 = vmatpush1.msra.mxu0 0.0
  %3409 = vmatprep.subr.mxu0 0.0
  %3410 = vmatpush1.msra.mxu0 %v133
  %3411 = vmatprep.subr.mxu0 0.0
  %3412 = vmatpush1.msra.mxu0 %v132
  %3413 = vmatprep.subr.mxu0 0.0
  %3414 = vmatpush2.msra.mxu0 0.0
  %3415 = vmatprep.subr.mxu0 0.0
  %3416 = vmatpush2.msra.mxu0 0.0
  %3417 = vmatprep.subr.mxu0 0.0
  %3418 = vmatpush2.msra.mxu0 0.0
  %3419 = vmatprep.subr.mxu0 0.0
  %3420 = vmatpush2.msra.mxu0 0.0
  %3421 = vmatprep.subr.mxu0 0.0
  %3422 = vmatpush2.msra.mxu0 0.0
  %3423 = vmatprep.subr.mxu0 0.0
  %3424 = vmatpush2.msra.mxu0 0.0
  %3425 = vmatprep.subr.mxu0 0.0
  %3426 = vmatpush2.msra.mxu0 0.0
  %3427 = vmatprep.subr.mxu0 0.0
  %3428 = vmatpush2.msra.mxu0 0.0
  %3429 = vmatprep.subr.mxu0 0.0
  %3430 = vmatpush2.msra.mxu0 0.0
  %3431 = vmatprep.subr.mxu0 0.0
  %3432 = vmatpush2.msra.mxu0 0.0
  %3433 = vmatprep.subr.mxu0 0.0
  %3434 = vmatpush2.msra.mxu0 0.0
  %3435 = vmatprep.subr.mxu0 0.0
  %3436 = vmatpush2.msra.mxu0 0.0
  %3437 = vmatprep.subr.mxu0 0.0
  %3438 = vmatpush2.msra.mxu0 0.0
  %3439 = vmatprep.subr.mxu0 0.0
  %3440 = vmatpush2.msra.mxu0 0.0
  %3441 = vmatprep.subr.mxu0 0.0
  %3442 = vmatpush2.msra.mxu0 0.0
  %3443 = vmatprep.subr.mxu0 0.0
  %3444 = vmatpush2.msra.mxu0 0.0
  %3445 = vmatprep.mubr.f32.mxu0 0.0
  %3446 = vmatmul.mubr.f32.gmra.mxu0 %v3379
  %v3447 = vpop.f32.mrf.mxu0
  %v3448 = vadd.f32 0.0, %v3447
  %v3449 = vpop.f32.mrf.mxu0
  %3450 = vdwg.mxu0
  %v3451 = vadd.f32 %v3376, %v3448
  %v3452 = vadd.f32 %v3451, %v2615
  %v3453 = vxor.u32 %v3452, 2147483648
  %v3454 = vmul.f32 %v3453, 1.442695
  %v3455 = vpow.pop %v3454
  %v3456 = vadd.f32 %v3455, 1.0
  %v3457 = vrcp.pop %v3456
  %v3458 = vmul.f32 1.0, %v3457
  %v3459 = vtanh.pop %v3452
  %v3460 = vmul.f32 %v3458, %v3053
  %3462 = vrot.lane.b32.xlu0 %v3459, 96
  %v3463 = vpop.permute.xlu0 %3462
  %v3465 = vmul.f32 %v3458, %v3463
  %3467 = vrot.lane.b32.xlu0 %v3465, 16
  %v3468 = vpop.permute.xlu0 %3467
  %v3470 = vadd.f32 %v3460, %v3468
  %v3471 = vtanh.pop %v3470
  %3473 = vrot.lane.b32.xlu0 %v3471, 32
  %v3474 = vpop.permute.xlu0 %3473
  %v3476 = vmul.f32 %v3458, %v3474
  %3478 = vrot.lane.b32.xlu0 %v3476, 80
  %v3479 = vpop.permute.xlu0 %3478
  %v3481 = vsel %vm503, %v3479, %v3470
  %3482 = vrot.lane.b32.xlu0 %v2205, 80
  %v3483 = vpop.permute.xlu0 %3482
  %v3486 = vsel %vm225, %v3481, 0
  %3488 = vmatprep.subr.mxu0 0.0
  %3489 = vmatpush1.msra.mxu0 0.0
  %3490 = vmatprep.subr.mxu0 0.0
  %3491 = vmatpush1.msra.mxu0 0.0
  %3492 = vmatprep.subr.mxu0 0.0
  %3493 = vmatpush1.msra.mxu0 0.0
  %3494 = vmatprep.subr.mxu0 0.0
  %3495 = vmatpush1.msra.mxu0 0.0
  %3496 = vmatprep.subr.mxu0 0.0
  %3497 = vmatpush1.msra.mxu0 0.0
  %3498 = vmatprep.subr.mxu0 0.0
  %3499 = vmatpush1.msra.mxu0 0.0
  %3500 = vmatprep.subr.mxu0 0.0
  %3501 = vmatpush1.msra.mxu0 0.0
  %3502 = vmatprep.subr.mxu0 0.0
  %3503 = vmatpush1.msra.mxu0 0.0
  %3504 = vmatprep.subr.mxu0 0.0
  %3505 = vmatpush1.msra.mxu0 0.0
  %3506 = vmatprep.subr.mxu0 0.0
  %3507 = vmatpush1.msra.mxu0 0.0
  %3508 = vmatprep.subr.mxu0 0.0
  %3509 = vmatpush1.msra.mxu0 0.0
  %3510 = vmatprep.subr.mxu0 0.0
  %3511 = vmatpush1.msra.mxu0 0.0
  %3512 = vmatprep.subr.mxu0 0.0
  %3513 = vmatpush1.msra.mxu0 %v96
  %3514 = vmatprep.subr.mxu0 0.0
  %3515 = vmatpush1.msra.mxu0 %v95
  %3516 = vmatprep.subr.mxu0 0.0
  %3517 = vmatpush1.msra.mxu0 %v94
  %3518 = vmatprep.subr.mxu0 0.0
  %3519 = vmatpush1.msra.mxu0 %v93
  %3520 = vmatprep.subr.mxu0 0.0
  %3521 = vmatpush2.msra.mxu0 0.0
  %3522 = vmatprep.subr.mxu0 0.0
  %3523 = vmatpush2.msra.mxu0 0.0
  %3524 = vmatprep.subr.mxu0 0.0
  %3525 = vmatpush2.msra.mxu0 0.0
  %3526 = vmatprep.subr.mxu0 0.0
  %3527 = vmatpush2.msra.mxu0 0.0
  %3528 = vmatprep.subr.mxu0 0.0
  %3529 = vmatpush2.msra.mxu0 0.0
  %3530 = vmatprep.subr.mxu0 0.0
  %3531 = vmatpush2.msra.mxu0 0.0
  %3532 = vmatprep.subr.mxu0 0.0
  %3533 = vmatpush2.msra.mxu0 0.0
  %3534 = vmatprep.subr.mxu0 0.0
  %3535 = vmatpush2.msra.mxu0 0.0
  %3536 = vmatprep.subr.mxu0 0.0
  %3537 = vmatpush2.msra.mxu0 0.0
  %3538 = vmatprep.subr.mxu0 0.0
  %3539 = vmatpush2.msra.mxu0 0.0
  %3540 = vmatprep.subr.mxu0 0.0
  %3541 = vmatpush2.msra.mxu0 0.0
  %3542 = vmatprep.subr.mxu0 0.0
  %3543 = vmatpush2.msra.mxu0 0.0
  %3544 = vmatprep.subr.mxu0 0.0
  %3545 = vmatpush2.msra.mxu0 0.0
  %3546 = vmatprep.subr.mxu0 0.0
  %3547 = vmatpush2.msra.mxu0 0.0
  %3548 = vmatprep.subr.mxu0 0.0
  %3549 = vmatpush2.msra.mxu0 0.0
  %3550 = vmatprep.subr.mxu0 0.0
  %3551 = vmatpush2.msra.mxu0 0.0
  %3552 = vmatprep.mubr.f32.mxu0 0.0
  %3553 = vmatmul.mubr.f32.gmra.mxu0 %v3486
  %v3554 = vpop.f32.mrf.mxu0
  %v3555 = vadd.f32 %v3483, %v3554
  %v3556 = vpop.f32.mrf.mxu0
  %3557 = vdwg.mxu0
  %v3558 = vadd.f32 %v3555, %v2282
  %v3559 = vtanh.pop %v3558
  %v3561 = vsel %vm503, %v3559, 0
  %3563 = vmatprep.subr.mxu0 0.0
  %3564 = vmatpush1.msra.mxu0 0.0
  %3565 = vmatprep.subr.mxu0 0.0
  %3566 = vmatpush1.msra.mxu0 0.0
  %3567 = vmatprep.subr.mxu0 0.0
  %3568 = vmatpush1.msra.mxu0 0.0
  %3569 = vmatprep.subr.mxu0 0.0
  %3570 = vmatpush1.msra.mxu0 0.0
  %3571 = vmatprep.subr.mxu0 0.0
  %3572 = vmatpush1.msra.mxu0 0.0
  %3573 = vmatprep.subr.mxu0 0.0
  %3574 = vmatpush1.msra.mxu0 0.0
  %3575 = vmatprep.subr.mxu0 0.0
  %3576 = vmatpush1.msra.mxu0 0.0
  %3577 = vmatprep.subr.mxu0 0.0
  %3578 = vmatpush1.msra.mxu0 0.0
  %3579 = vmatprep.subr.mxu0 0.0
  %3580 = vmatpush1.msra.mxu0 0.0
  %3581 = vmatprep.subr.mxu0 0.0
  %3582 = vmatpush1.msra.mxu0 0.0
  %3583 = vmatprep.subr.mxu0 0.0
  %3584 = vmatpush1.msra.mxu0 0.0
  %3585 = vmatprep.subr.mxu0 0.0
  %3586 = vmatpush1.msra.mxu0 0.0
  %3587 = vmatprep.subr.mxu0 0.0
  %3588 = vmatpush1.msra.mxu0 0.0
  %3589 = vmatprep.subr.mxu0 0.0
  %3590 = vmatpush1.msra.mxu0 0.0
  %3591 = vmatprep.subr.mxu0 0.0
  %3592 = vmatpush1.msra.mxu0 %v113
  %3593 = vmatprep.subr.mxu0 0.0
  %3594 = vmatpush1.msra.mxu0 %v112
  %3595 = vmatprep.subr.mxu0 0.0
  %3596 = vmatpush2.msra.mxu0 0.0
  %3597 = vmatprep.subr.mxu0 0.0
  %3598 = vmatpush2.msra.mxu0 0.0
  %3599 = vmatprep.subr.mxu0 0.0
  %3600 = vmatpush2.msra.mxu0 0.0
  %3601 = vmatprep.subr.mxu0 0.0
  %3602 = vmatpush2.msra.mxu0 0.0
  %3603 = vmatprep.subr.mxu0 0.0
  %3604 = vmatpush2.msra.mxu0 0.0
  %3605 = vmatprep.subr.mxu0 0.0
  %3606 = vmatpush2.msra.mxu0 0.0
  %3607 = vmatprep.subr.mxu0 0.0
  %3608 = vmatpush2.msra.mxu0 0.0
  %3609 = vmatprep.subr.mxu0 0.0
  %3610 = vmatpush2.msra.mxu0 0.0
  %3611 = vmatprep.subr.mxu0 0.0
  %3612 = vmatpush2.msra.mxu0 0.0
  %3613 = vmatprep.subr.mxu0 0.0
  %3614 = vmatpush2.msra.mxu0 0.0
  %3615 = vmatprep.subr.mxu0 0.0
  %3616 = vmatpush2.msra.mxu0 0.0
  %3617 = vmatprep.subr.mxu0 0.0
  %3618 = vmatpush2.msra.mxu0 0.0
  %3619 = vmatprep.subr.mxu0 0.0
  %3620 = vmatpush2.msra.mxu0 0.0
  %3621 = vmatprep.subr.mxu0 0.0
  %3622 = vmatpush2.msra.mxu0 0.0
  %3623 = vmatprep.subr.mxu0 0.0
  %3624 = vmatpush2.msra.mxu0 0.0
  %3625 = vmatprep.subr.mxu0 0.0
  %3626 = vmatpush2.msra.mxu0 0.0
  %3627 = vmatprep.mubr.f32.mxu0 0.0
  %3628 = vmatmul.mubr.f32.gmra.mxu0 %v3561
  %v3629 = vpop.f32.mrf.mxu0
  %v3630 = vadd.f32 %v2290, %v3629
  %v3631 = vpop.f32.mrf.mxu0
  %3632 = vdwg.mxu0
  %v3633 = vsel %vm314, %v3630, -inf
  %3634 = vmax.xlane.f32.xlu0 %v3633
  %v3635 = vpop.xlane.xlu0 %3634
  %v3636 = vsub.f32 %v3630, %v3635
  %v3637 = vmul.f32 %v3636, 1.442695
  %v3638 = vpow.pop %v3637
  %v3639 = vsel %vm314, %v3638, 0.0
  %3640 = vadd.xlane.f32.xlu0 %v3639
  %v3641 = vpop.xlane.xlu0 %3640
  %v3642 = vrcp.pop %v3641
  %v3643 = vmul.f32 %v3638, %v3642
  %v3645 = vsel %vm314, %v3643, 0
  %3647 = vmatprep.subr.mxu0 0.0
  %3648 = vmatpush1.msra.mxu0 0.0
  %3649 = vmatprep.subr.mxu0 0.0
  %3650 = vmatpush1.msra.mxu0 0.0
  %3651 = vmatprep.subr.mxu0 0.0
  %3652 = vmatpush1.msra.mxu0 0.0
  %3653 = vmatprep.subr.mxu0 0.0
  %3654 = vmatpush1.msra.mxu0 0.0
  %3655 = vmatprep.subr.mxu0 0.0
  %3656 = vmatpush1.msra.mxu0 0.0
  %3657 = vmatprep.subr.mxu0 0.0
  %3658 = vmatpush1.msra.mxu0 0.0
  %3659 = vmatprep.subr.mxu0 0.0
  %3660 = vmatpush1.msra.mxu0 0.0
  %3661 = vmatprep.subr.mxu0 0.0
  %3662 = vmatpush1.msra.mxu0 0.0
  %3663 = vmatprep.subr.mxu0 0.0
  %3664 = vmatpush1.msra.mxu0 0.0
  %3665 = vmatprep.subr.mxu0 0.0
  %3666 = vmatpush1.msra.mxu0 0.0
  %3667 = vmatprep.subr.mxu0 0.0
  %3668 = vmatpush1.msra.mxu0 0.0
  %3669 = vmatprep.subr.mxu0 0.0
  %3670 = vmatpush1.msra.mxu0 0.0
  %3671 = vmatprep.subr.mxu0 0.0
  %3672 = vmatpush1.msra.mxu0 0.0
  %3673 = vmatprep.subr.mxu0 0.0
  %3674 = vmatpush1.msra.mxu0 0.0
  %3675 = vmatprep.subr.mxu0 0.0
  %3676 = vmatpush1.msra.mxu0 0.0
  %3677 = vmatprep.subr.mxu0 0.0
  %3678 = vmatpush1.msra.mxu0 %v2380
  %3679 = vmatprep.subr.mxu0 0.0
  %3680 = vmatpush2.msra.mxu0 0.0
  %3681 = vmatprep.subr.mxu0 0.0
  %3682 = vmatpush2.msra.mxu0 0.0
  %3683 = vmatprep.subr.mxu0 0.0
  %3684 = vmatpush2.msra.mxu0 0.0
  %3685 = vmatprep.subr.mxu0 0.0
  %3686 = vmatpush2.msra.mxu0 0.0
  %3687 = vmatprep.subr.mxu0 0.0
  %3688 = vmatpush2.msra.mxu0 0.0
  %3689 = vmatprep.subr.mxu0 0.0
  %3690 = vmatpush2.msra.mxu0 0.0
  %3691 = vmatprep.subr.mxu0 0.0
  %3692 = vmatpush2.msra.mxu0 0.0
  %3693 = vmatprep.subr.mxu0 0.0
  %3694 = vmatpush2.msra.mxu0 0.0
  %3695 = vmatprep.subr.mxu0 0.0
  %3696 = vmatpush2.msra.mxu0 0.0
  %3697 = vmatprep.subr.mxu0 0.0
  %3698 = vmatpush2.msra.mxu0 0.0
  %3699 = vmatprep.subr.mxu0 0.0
  %3700 = vmatpush2.msra.mxu0 0.0
  %3701 = vmatprep.subr.mxu0 0.0
  %3702 = vmatpush2.msra.mxu0 0.0
  %3703 = vmatprep.subr.mxu0 0.0
  %3704 = vmatpush2.msra.mxu0 0.0
  %3705 = vmatprep.subr.mxu0 0.0
  %3706 = vmatpush2.msra.mxu0 0.0
  %3707 = vmatprep.subr.mxu0 0.0
  %3708 = vmatpush2.msra.mxu0 0.0
  %3709 = vmatprep.subr.mxu0 0.0
  %3710 = vmatpush2.msra.mxu0 0.0
  %3711 = vmatprep.mubr.f32.mxu0 0.0
  %3712 = vmatmul.mubr.f32.gmra.mxu0 %v3645
  %v3713 = vpop.f32.mrf.mxu0
  %v3714 = vadd.f32 0.0, %v3713
  %v3715 = vpop.f32.mrf.mxu0
  %3716 = vdwg.mxu0
  %v3717 = vmul.f32 %v3714, %v2133
  %3718 = vset.pattern.permute.xlu0 3
  %3719 = vperm.xlu0 %3718, %v74
  %v3720 = vpop.permute.xlu0 %3719
  %v3722 = vmul.f32 %v3720, %v2462
  %v3724 = vsel %vm2134, %v3717, 0
  %3726 = vmatprep.subr.mxu0 0.0
  %3727 = vmatpush1.msra.mxu0 0.0
  %3728 = vmatprep.subr.mxu0 0.0
  %3729 = vmatpush1.msra.mxu0 0.0
  %3730 = vmatprep.subr.mxu0 0.0
  %3731 = vmatpush1.msra.mxu0 %v129
  %3732 = vmatprep.subr.mxu0 0.0
  %3733 = vmatpush1.msra.mxu0 %v128
  %3734 = vmatprep.subr.mxu0 0.0
  %3735 = vmatpush1.msra.mxu0 %v127
  %3736 = vmatprep.subr.mxu0 0.0
  %3737 = vmatpush1.msra.mxu0 %v126
  %3738 = vmatprep.subr.mxu0 0.0
  %3739 = vmatpush1.msra.mxu0 %v125
  %3740 = vmatprep.subr.mxu0 0.0
  %3741 = vmatpush1.msra.mxu0 %v124
  %3742 = vmatprep.subr.mxu0 0.0
  %3743 = vmatpush1.msra.mxu0 %v123
  %3744 = vmatprep.subr.mxu0 0.0
  %3745 = vmatpush1.msra.mxu0 %v122
  %3746 = vmatprep.subr.mxu0 0.0
  %3747 = vmatpush1.msra.mxu0 %v121
  %3748 = vmatprep.subr.mxu0 0.0
  %3749 = vmatpush1.msra.mxu0 %v120
  %3750 = vmatprep.subr.mxu0 0.0
  %3751 = vmatpush1.msra.mxu0 %v119
  %3752 = vmatprep.subr.mxu0 0.0
  %3753 = vmatpush1.msra.mxu0 %v118
  %3754 = vmatprep.subr.mxu0 0.0
  %3755 = vmatpush1.msra.mxu0 %v117
  %3756 = vmatprep.subr.mxu0 0.0
  %3757 = vmatpush1.msra.mxu0 %v116
  %3758 = vmatprep.subr.mxu0 0.0
  %3759 = vmatpush2.msra.mxu0 0.0
  %3760 = vmatprep.subr.mxu0 0.0
  %3761 = vmatpush2.msra.mxu0 0.0
  %3762 = vmatprep.subr.mxu0 0.0
  %3763 = vmatpush2.msra.mxu0 0.0
  %3764 = vmatprep.subr.mxu0 0.0
  %3765 = vmatpush2.msra.mxu0 0.0
  %3766 = vmatprep.subr.mxu0 0.0
  %3767 = vmatpush2.msra.mxu0 0.0
  %3768 = vmatprep.subr.mxu0 0.0
  %3769 = vmatpush2.msra.mxu0 0.0
  %3770 = vmatprep.subr.mxu0 0.0
  %3771 = vmatpush2.msra.mxu0 0.0
  %3772 = vmatprep.subr.mxu0 0.0
  %3773 = vmatpush2.msra.mxu0 0.0
  %3774 = vmatprep.subr.mxu0 0.0
  %3775 = vmatpush2.msra.mxu0 0.0
  %3776 = vmatprep.subr.mxu0 0.0
  %3777 = vmatpush2.msra.mxu0 0.0
  %3778 = vmatprep.subr.mxu0 0.0
  %3779 = vmatpush2.msra.mxu0 0.0
  %3780 = vmatprep.subr.mxu0 0.0
  %3781 = vmatpush2.msra.mxu0 0.0
  %3782 = vmatprep.subr.mxu0 0.0
  %3783 = vmatpush2.msra.mxu0 0.0
  %3784 = vmatprep.subr.mxu0 0.0
  %3785 = vmatpush2.msra.mxu0 0.0
  %3786 = vmatprep.subr.mxu0 0.0
  %3787 = vmatpush2.msra.mxu0 0.0
  %3788 = vmatprep.subr.mxu0 0.0
  %3789 = vmatpush2.msra.mxu0 0.0
  %3790 = vmatprep.mubr.f32.mxu0 0.0
  %3791 = vmatmul.mubr.f32.gmra.mxu0 %v3724
  %v3792 = vpop.f32.mrf.mxu0
  %v3793 = vadd.f32 %v3722, %v3792
  %v3794 = vpop.f32.mrf.mxu0
  %3795 = vdwg.mxu0
  %v3796 = vsel %vm503, %v3479, 0
  %3798 = vmatprep.subr.mxu0 0.0
  %3799 = vmatpush1.msra.mxu0 0.0
  %3800 = vmatprep.subr.mxu0 0.0
  %3801 = vmatpush1.msra.mxu0 0.0
  %3802 = vmatprep.subr.mxu0 0.0
  %3803 = vmatpush1.msra.mxu0 0.0
  %3804 = vmatprep.subr.mxu0 0.0
  %3805 = vmatpush1.msra.mxu0 0.0
  %3806 = vmatprep.subr.mxu0 0.0
  %3807 = vmatpush1.msra.mxu0 0.0
  %3808 = vmatprep.subr.mxu0 0.0
  %3809 = vmatpush1.msra.mxu0 0.0
  %3810 = vmatprep.subr.mxu0 0.0
  %3811 = vmatpush1.msra.mxu0 0.0
  %3812 = vmatprep.subr.mxu0 0.0
  %3813 = vmatpush1.msra.mxu0 0.0
  %3814 = vmatprep.subr.mxu0 0.0
  %3815 = vmatpush1.msra.mxu0 0.0
  %3816 = vmatprep.subr.mxu0 0.0
  %3817 = vmatpush1.msra.mxu0 0.0
  %3818 = vmatprep.subr.mxu0 0.0
  %3819 = vmatpush1.msra.mxu0 0.0
  %3820 = vmatprep.subr.mxu0 0.0
  %3821 = vmatpush1.msra.mxu0 0.0
  %3822 = vmatprep.subr.mxu0 0.0
  %3823 = vmatpush1.msra.mxu0 0.0
  %3824 = vmatprep.subr.mxu0 0.0
  %3825 = vmatpush1.msra.mxu0 0.0
  %3826 = vmatprep.subr.mxu0 0.0
  %3827 = vmatpush1.msra.mxu0 %v133
  %3828 = vmatprep.subr.mxu0 0.0
  %3829 = vmatpush1.msra.mxu0 %v132
  %3830 = vmatprep.subr.mxu0 0.0
  %3831 = vmatpush2.msra.mxu0 0.0
  %3832 = vmatprep.subr.mxu0 0.0
  %3833 = vmatpush2.msra.mxu0 0.0
  %3834 = vmatprep.subr.mxu0 0.0
  %3835 = vmatpush2.msra.mxu0 0.0
  %3836 = vmatprep.subr.mxu0 0.0
  %3837 = vmatpush2.msra.mxu0 0.0
  %3838 = vmatprep.subr.mxu0 0.0
  %3839 = vmatpush2.msra.mxu0 0.0
  %3840 = vmatprep.subr.mxu0 0.0
  %3841 = vmatpush2.msra.mxu0 0.0
  %3842 = vmatprep.subr.mxu0 0.0
  %3843 = vmatpush2.msra.mxu0 0.0
  %3844 = vmatprep.subr.mxu0 0.0
  %3845 = vmatpush2.msra.mxu0 0.0
  %3846 = vmatprep.subr.mxu0 0.0
  %3847 = vmatpush2.msra.mxu0 0.0
  %3848 = vmatprep.subr.mxu0 0.0
  %3849 = vmatpush2.msra.mxu0 0.0
  %3850 = vmatprep.subr.mxu0 0.0
  %3851 = vmatpush2.msra.mxu0 0.0
  %3852 = vmatprep.subr.mxu0 0.0
  %3853 = vmatpush2.msra.mxu0 0.0
  %3854 = vmatprep.subr.mxu0 0.0
  %3855 = vmatpush2.msra.mxu0 0.0
  %3856 = vmatprep.subr.mxu0 0.0
  %3857 = vmatpush2.msra.mxu0 0.0
  %3858 = vmatprep.subr.mxu0 0.0
  %3859 = vmatpush2.msra.mxu0 0.0
  %3860 = vmatprep.subr.mxu0 0.0
  %3861 = vmatpush2.msra.mxu0 0.0
  %3862 = vmatprep.mubr.f32.mxu0 0.0
  %3863 = vmatmul.mubr.f32.gmra.mxu0 %v3796
  %v3864 = vpop.f32.mrf.mxu0
  %v3865 = vadd.f32 0.0, %v3864
  %v3866 = vpop.f32.mrf.mxu0
  %3867 = vdwg.mxu0
  %v3868 = vadd.f32 %v3793, %v3865
  %v3869 = vadd.f32 %v3868, %v2615
  %v3870 = vxor.u32 %v3869, 2147483648
  %v3871 = vmul.f32 %v3870, 1.442695
  %v3872 = vpow.pop %v3871
  %v3873 = vadd.f32 %v3872, 1.0
  %v3874 = vrcp.pop %v3873
  %v3875 = vmul.f32 1.0, %v3874
  %v3876 = vtanh.pop %v3869
  %v3877 = vmul.f32 %v3875, %v3470
  %3879 = vrot.lane.b32.xlu0 %v3876, 96
  %v3880 = vpop.permute.xlu0 %3879
  %v3882 = vmul.f32 %v3875, %v3880
  %3884 = vrot.lane.b32.xlu0 %v3882, 16
  %v3885 = vpop.permute.xlu0 %3884
  %v3887 = vadd.f32 %v3877, %v3885
  %v3888 = vtanh.pop %v3887
  %3890 = vrot.lane.b32.xlu0 %v3888, 32
  %v3891 = vpop.permute.xlu0 %3890
  %v3893 = vmul.f32 %v3875, %v3891
  %3895 = vrot.lane.b32.xlu0 %v3893, 80
  %v3896 = vpop.permute.xlu0 %3895
  %v3898 = vsel %vm503, %v3896, %v3887
  %3899 = vrot.lane.b32.xlu0 %v2205, 64
  %v3900 = vpop.permute.xlu0 %3899
  %v3903 = vsel %vm225, %v3898, 0
  %3905 = vmatprep.subr.mxu0 0.0
  %3906 = vmatpush1.msra.mxu0 0.0
  %3907 = vmatprep.subr.mxu0 0.0
  %3908 = vmatpush1.msra.mxu0 0.0
  %3909 = vmatprep.subr.mxu0 0.0
  %3910 = vmatpush1.msra.mxu0 0.0
  %3911 = vmatprep.subr.mxu0 0.0
  %3912 = vmatpush1.msra.mxu0 0.0
  %3913 = vmatprep.subr.mxu0 0.0
  %3914 = vmatpush1.msra.mxu0 0.0
  %3915 = vmatprep.subr.mxu0 0.0
  %3916 = vmatpush1.msra.mxu0 0.0
  %3917 = vmatprep.subr.mxu0 0.0
  %3918 = vmatpush1.msra.mxu0 0.0
  %3919 = vmatprep.subr.mxu0 0.0
  %3920 = vmatpush1.msra.mxu0 0.0
  %3921 = vmatprep.subr.mxu0 0.0
  %3922 = vmatpush1.msra.mxu0 0.0
  %3923 = vmatprep.subr.mxu0 0.0
  %3924 = vmatpush1.msra.mxu0 0.0
  %3925 = vmatprep.subr.mxu0 0.0
  %3926 = vmatpush1.msra.mxu0 0.0
  %3927 = vmatprep.subr.mxu0 0.0
  %3928 = vmatpush1.msra.mxu0 0.0
  %3929 = vmatprep.subr.mxu0 0.0
  %3930 = vmatpush1.msra.mxu0 %v96
  %3931 = vmatprep.subr.mxu0 0.0
  %3932 = vmatpush1.msra.mxu0 %v95
  %3933 = vmatprep.subr.mxu0 0.0
  %3934 = vmatpush1.msra.mxu0 %v94
  %3935 = vmatprep.subr.mxu0 0.0
  %3936 = vmatpush1.msra.mxu0 %v93
  %3937 = vmatprep.subr.mxu0 0.0
  %3938 = vmatpush2.msra.mxu0 0.0
  %3939 = vmatprep.subr.mxu0 0.0
  %3940 = vmatpush2.msra.mxu0 0.0
  %3941 = vmatprep.subr.mxu0 0.0
  %3942 = vmatpush2.msra.mxu0 0.0
  %3943 = vmatprep.subr.mxu0 0.0
  %3944 = vmatpush2.msra.mxu0 0.0
  %3945 = vmatprep.subr.mxu0 0.0
  %3946 = vmatpush2.msra.mxu0 0.0
  %3947 = vmatprep.subr.mxu0 0.0
  %3948 = vmatpush2.msra.mxu0 0.0
  %3949 = vmatprep.subr.mxu0 0.0
  %3950 = vmatpush2.msra.mxu0 0.0
  %3951 = vmatprep.subr.mxu0 0.0
  %3952 = vmatpush2.msra.mxu0 0.0
  %3953 = vmatprep.subr.mxu0 0.0
  %3954 = vmatpush2.msra.mxu0 0.0
  %3955 = vmatprep.subr.mxu0 0.0
  %3956 = vmatpush2.msra.mxu0 0.0
  %3957 = vmatprep.subr.mxu0 0.0
  %3958 = vmatpush2.msra.mxu0 0.0
  %3959 = vmatprep.subr.mxu0 0.0
  %3960 = vmatpush2.msra.mxu0 0.0
  %3961 = vmatprep.subr.mxu0 0.0
  %3962 = vmatpush2.msra.mxu0 0.0
  %3963 = vmatprep.subr.mxu0 0.0
  %3964 = vmatpush2.msra.mxu0 0.0
  %3965 = vmatprep.subr.mxu0 0.0
  %3966 = vmatpush2.msra.mxu0 0.0
  %3967 = vmatprep.subr.mxu0 0.0
  %3968 = vmatpush2.msra.mxu0 0.0
  %3969 = vmatprep.mubr.f32.mxu0 0.0
  %3970 = vmatmul.mubr.f32.gmra.mxu0 %v3903
  %v3971 = vpop.f32.mrf.mxu0
  %v3972 = vadd.f32 %v3900, %v3971
  %v3973 = vpop.f32.mrf.mxu0
  %3974 = vdwg.mxu0
  %v3975 = vadd.f32 %v3972, %v2282
  %v3976 = vtanh.pop %v3975
  %v3978 = vsel %vm503, %v3976, 0
  %3980 = vmatprep.subr.mxu0 0.0
  %3981 = vmatpush1.msra.mxu0 0.0
  %3982 = vmatprep.subr.mxu0 0.0
  %3983 = vmatpush1.msra.mxu0 0.0
  %3984 = vmatprep.subr.mxu0 0.0
  %3985 = vmatpush1.msra.mxu0 0.0
  %3986 = vmatprep.subr.mxu0 0.0
  %3987 = vmatpush1.msra.mxu0 0.0
  %3988 = vmatprep.subr.mxu0 0.0
  %3989 = vmatpush1.msra.mxu0 0.0
  %3990 = vmatprep.subr.mxu0 0.0
  %3991 = vmatpush1.msra.mxu0 0.0
  %3992 = vmatprep.subr.mxu0 0.0
  %3993 = vmatpush1.msra.mxu0 0.0
  %3994 = vmatprep.subr.mxu0 0.0
  %3995 = vmatpush1.msra.mxu0 0.0
  %3996 = vmatprep.subr.mxu0 0.0
  %3997 = vmatpush1.msra.mxu0 0.0
  %3998 = vmatprep.subr.mxu0 0.0
  %3999 = vmatpush1.msra.mxu0 0.0
  %4000 = vmatprep.subr.mxu0 0.0
  %4001 = vmatpush1.msra.mxu0 0.0
  %4002 = vmatprep.subr.mxu0 0.0
  %4003 = vmatpush1.msra.mxu0 0.0
  %4004 = vmatprep.subr.mxu0 0.0
  %4005 = vmatpush1.msra.mxu0 0.0
  %4006 = vmatprep.subr.mxu0 0.0
  %4007 = vmatpush1.msra.mxu0 0.0
  %4008 = vmatprep.subr.mxu0 0.0
  %4009 = vmatpush1.msra.mxu0 %v113
  %4010 = vmatprep.subr.mxu0 0.0
  %4011 = vmatpush1.msra.mxu0 %v112
  %4012 = vmatprep.subr.mxu0 0.0
  %4013 = vmatpush2.msra.mxu0 0.0
  %4014 = vmatprep.subr.mxu0 0.0
  %4015 = vmatpush2.msra.mxu0 0.0
  %4016 = vmatprep.subr.mxu0 0.0
  %4017 = vmatpush2.msra.mxu0 0.0
  %4018 = vmatprep.subr.mxu0 0.0
  %4019 = vmatpush2.msra.mxu0 0.0
  %4020 = vmatprep.subr.mxu0 0.0
  %4021 = vmatpush2.msra.mxu0 0.0
  %4022 = vmatprep.subr.mxu0 0.0
  %4023 = vmatpush2.msra.mxu0 0.0
  %4024 = vmatprep.subr.mxu0 0.0
  %4025 = vmatpush2.msra.mxu0 0.0
  %4026 = vmatprep.subr.mxu0 0.0
  %4027 = vmatpush2.msra.mxu0 0.0
  %4028 = vmatprep.subr.mxu0 0.0
  %4029 = vmatpush2.msra.mxu0 0.0
  %4030 = vmatprep.subr.mxu0 0.0
  %4031 = vmatpush2.msra.mxu0 0.0
  %4032 = vmatprep.subr.mxu0 0.0
  %4033 = vmatpush2.msra.mxu0 0.0
  %4034 = vmatprep.subr.mxu0 0.0
  %4035 = vmatpush2.msra.mxu0 0.0
  %4036 = vmatprep.subr.mxu0 0.0
  %4037 = vmatpush2.msra.mxu0 0.0
  %4038 = vmatprep.subr.mxu0 0.0
  %4039 = vmatpush2.msra.mxu0 0.0
  %4040 = vmatprep.subr.mxu0 0.0
  %4041 = vmatpush2.msra.mxu0 0.0
  %4042 = vmatprep.subr.mxu0 0.0
  %4043 = vmatpush2.msra.mxu0 0.0
  %4044 = vmatprep.mubr.f32.mxu0 0.0
  %4045 = vmatmul.mubr.f32.gmra.mxu0 %v3978
  %v4046 = vpop.f32.mrf.mxu0
  %v4047 = vadd.f32 %v2290, %v4046
  %v4048 = vpop.f32.mrf.mxu0
  %4049 = vdwg.mxu0
  %v4050 = vsel %vm314, %v4047, -inf
  %4051 = vmax.xlane.f32.xlu0 %v4050
  %v4052 = vpop.xlane.xlu0 %4051
  %v4053 = vsub.f32 %v4047, %v4052
  %v4054 = vmul.f32 %v4053, 1.442695
  %v4055 = vpow.pop %v4054
  %v4056 = vsel %vm314, %v4055, 0.0
  %4057 = vadd.xlane.f32.xlu0 %v4056
  %v4058 = vpop.xlane.xlu0 %4057
  %v4059 = vrcp.pop %v4058
  %v4060 = vmul.f32 %v4055, %v4059
  %v4062 = vsel %vm314, %v4060, 0
  %4064 = vmatprep.subr.mxu0 0.0
  %4065 = vmatpush1.msra.mxu0 0.0
  %4066 = vmatprep.subr.mxu0 0.0
  %4067 = vmatpush1.msra.mxu0 0.0
  %4068 = vmatprep.subr.mxu0 0.0
  %4069 = vmatpush1.msra.mxu0 0.0
  %4070 = vmatprep.subr.mxu0 0.0
  %4071 = vmatpush1.msra.mxu0 0.0
  %4072 = vmatprep.subr.mxu0 0.0
  %4073 = vmatpush1.msra.mxu0 0.0
  %4074 = vmatprep.subr.mxu0 0.0
  %4075 = vmatpush1.msra.mxu0 0.0
  %4076 = vmatprep.subr.mxu0 0.0
  %4077 = vmatpush1.msra.mxu0 0.0
  %4078 = vmatprep.subr.mxu0 0.0
  %4079 = vmatpush1.msra.mxu0 0.0
  %4080 = vmatprep.subr.mxu0 0.0
  %4081 = vmatpush1.msra.mxu0 0.0
  %4082 = vmatprep.subr.mxu0 0.0
  %4083 = vmatpush1.msra.mxu0 0.0
  %4084 = vmatprep.subr.mxu0 0.0
  %4085 = vmatpush1.msra.mxu0 0.0
  %4086 = vmatprep.subr.mxu0 0.0
  %4087 = vmatpush1.msra.mxu0 0.0
  %4088 = vmatprep.subr.mxu0 0.0
  %4089 = vmatpush1.msra.mxu0 0.0
  %4090 = vmatprep.subr.mxu0 0.0
  %4091 = vmatpush1.msra.mxu0 0.0
  %4092 = vmatprep.subr.mxu0 0.0
  %4093 = vmatpush1.msra.mxu0 0.0
  %4094 = vmatprep.subr.mxu0 0.0
  %4095 = vmatpush1.msra.mxu0 %v2380
  %4096 = vmatprep.subr.mxu0 0.0
  %4097 = vmatpush2.msra.mxu0 0.0
  %4098 = vmatprep.subr.mxu0 0.0
  %4099 = vmatpush2.msra.mxu0 0.0
  %4100 = vmatprep.subr.mxu0 0.0
  %4101 = vmatpush2.msra.mxu0 0.0
  %4102 = vmatprep.subr.mxu0 0.0
  %4103 = vmatpush2.msra.mxu0 0.0
  %4104 = vmatprep.subr.mxu0 0.0
  %4105 = vmatpush2.msra.mxu0 0.0
  %4106 = vmatprep.subr.mxu0 0.0
  %4107 = vmatpush2.msra.mxu0 0.0
  %4108 = vmatprep.subr.mxu0 0.0
  %4109 = vmatpush2.msra.mxu0 0.0
  %4110 = vmatprep.subr.mxu0 0.0
  %4111 = vmatpush2.msra.mxu0 0.0
  %4112 = vmatprep.subr.mxu0 0.0
  %4113 = vmatpush2.msra.mxu0 0.0
  %4114 = vmatprep.subr.mxu0 0.0
  %4115 = vmatpush2.msra.mxu0 0.0
  %4116 = vmatprep.subr.mxu0 0.0
  %4117 = vmatpush2.msra.mxu0 0.0
  %4118 = vmatprep.subr.mxu0 0.0
  %4119 = vmatpush2.msra.mxu0 0.0
  %4120 = vmatprep.subr.mxu0 0.0
  %4121 = vmatpush2.msra.mxu0 0.0
  %4122 = vmatprep.subr.mxu0 0.0
  %4123 = vmatpush2.msra.mxu0 0.0
  %4124 = vmatprep.subr.mxu0 0.0
  %4125 = vmatpush2.msra.mxu0 0.0
  %4126 = vmatprep.subr.mxu0 0.0
  %4127 = vmatpush2.msra.mxu0 0.0
  %4128 = vmatprep.mubr.f32.mxu0 0.0
  %4129 = vmatmul.mubr.f32.gmra.mxu0 %v4062
  %v4130 = vpop.f32.mrf.mxu0
  %v4131 = vadd.f32 0.0, %v4130
  %v4132 = vpop.f32.mrf.mxu0
  %4133 = vdwg.mxu0
  %v4134 = vmul.f32 %v4131, %v2133
  %4135 = vset.pattern.permute.xlu0 4
  %4136 = vperm.xlu0 %4135, %v74
  %v4137 = vpop.permute.xlu0 %4136
  %v4139 = vmul.f32 %v4137, %v2462
  %v4141 = vsel %vm2134, %v4134, 0
  %4143 = vmatprep.subr.mxu0 0.0
  %4144 = vmatpush1.msra.mxu0 0.0
  %4145 = vmatprep.subr.mxu0 0.0
  %4146 = vmatpush1.msra.mxu0 0.0
  %4147 = vmatprep.subr.mxu0 0.0
  %4148 = vmatpush1.msra.mxu0 %v129
  %4149 = vmatprep.subr.mxu0 0.0
  %4150 = vmatpush1.msra.mxu0 %v128
  %4151 = vmatprep.subr.mxu0 0.0
  %4152 = vmatpush1.msra.mxu0 %v127
  %4153 = vmatprep.subr.mxu0 0.0
  %4154 = vmatpush1.msra.mxu0 %v126
  %4155 = vmatprep.subr.mxu0 0.0
  %4156 = vmatpush1.msra.mxu0 %v125
  %4157 = vmatprep.subr.mxu0 0.0
  %4158 = vmatpush1.msra.mxu0 %v124
  %4159 = vmatprep.subr.mxu0 0.0
  %4160 = vmatpush1.msra.mxu0 %v123
  %4161 = vmatprep.subr.mxu0 0.0
  %4162 = vmatpush1.msra.mxu0 %v122
  %4163 = vmatprep.subr.mxu0 0.0
  %4164 = vmatpush1.msra.mxu0 %v121
  %4165 = vmatprep.subr.mxu0 0.0
  %4166 = vmatpush1.msra.mxu0 %v120
  %4167 = vmatprep.subr.mxu0 0.0
  %4168 = vmatpush1.msra.mxu0 %v119
  %4169 = vmatprep.subr.mxu0 0.0
  %4170 = vmatpush1.msra.mxu0 %v118
  %4171 = vmatprep.subr.mxu0 0.0
  %4172 = vmatpush1.msra.mxu0 %v117
  %4173 = vmatprep.subr.mxu0 0.0
  %4174 = vmatpush1.msra.mxu0 %v116
  %4175 = vmatprep.subr.mxu0 0.0
  %4176 = vmatpush2.msra.mxu0 0.0
  %4177 = vmatprep.subr.mxu0 0.0
  %4178 = vmatpush2.msra.mxu0 0.0
  %4179 = vmatprep.subr.mxu0 0.0
  %4180 = vmatpush2.msra.mxu0 0.0
  %4181 = vmatprep.subr.mxu0 0.0
  %4182 = vmatpush2.msra.mxu0 0.0
  %4183 = vmatprep.subr.mxu0 0.0
  %4184 = vmatpush2.msra.mxu0 0.0
  %4185 = vmatprep.subr.mxu0 0.0
  %4186 = vmatpush2.msra.mxu0 0.0
  %4187 = vmatprep.subr.mxu0 0.0
  %4188 = vmatpush2.msra.mxu0 0.0
  %4189 = vmatprep.subr.mxu0 0.0
  %4190 = vmatpush2.msra.mxu0 0.0
  %4191 = vmatprep.subr.mxu0 0.0
  %4192 = vmatpush2.msra.mxu0 0.0
  %4193 = vmatprep.subr.mxu0 0.0
  %4194 = vmatpush2.msra.mxu0 0.0
  %4195 = vmatprep.subr.mxu0 0.0
  %4196 = vmatpush2.msra.mxu0 0.0
  %4197 = vmatprep.subr.mxu0 0.0
  %4198 = vmatpush2.msra.mxu0 0.0
  %4199 = vmatprep.subr.mxu0 0.0
  %4200 = vmatpush2.msra.mxu0 0.0
  %4201 = vmatprep.subr.mxu0 0.0
  %4202 = vmatpush2.msra.mxu0 0.0
  %4203 = vmatprep.subr.mxu0 0.0
  %4204 = vmatpush2.msra.mxu0 0.0
  %4205 = vmatprep.subr.mxu0 0.0
  %4206 = vmatpush2.msra.mxu0 0.0
  %4207 = vmatprep.mubr.f32.mxu0 0.0
  %4208 = vmatmul.mubr.f32.gmra.mxu0 %v4141
  %v4209 = vpop.f32.mrf.mxu0
  %v4210 = vadd.f32 %v4139, %v4209
  %v4211 = vpop.f32.mrf.mxu0
  %4212 = vdwg.mxu0
  %v4213 = vsel %vm503, %v3896, 0
  %4215 = vmatprep.subr.mxu0 0.0
  %4216 = vmatpush1.msra.mxu0 0.0
  %4217 = vmatprep.subr.mxu0 0.0
  %4218 = vmatpush1.msra.mxu0 0.0
  %4219 = vmatprep.subr.mxu0 0.0
  %4220 = vmatpush1.msra.mxu0 0.0
  %4221 = vmatprep.subr.mxu0 0.0
  %4222 = vmatpush1.msra.mxu0 0.0
  %4223 = vmatprep.subr.mxu0 0.0
  %4224 = vmatpush1.msra.mxu0 0.0
  %4225 = vmatprep.subr.mxu0 0.0
  %4226 = vmatpush1.msra.mxu0 0.0
  %4227 = vmatprep.subr.mxu0 0.0
  %4228 = vmatpush1.msra.mxu0 0.0
  %4229 = vmatprep.subr.mxu0 0.0
  %4230 = vmatpush1.msra.mxu0 0.0
  %4231 = vmatprep.subr.mxu0 0.0
  %4232 = vmatpush1.msra.mxu0 0.0
  %4233 = vmatprep.subr.mxu0 0.0
  %4234 = vmatpush1.msra.mxu0 0.0
  %4235 = vmatprep.subr.mxu0 0.0
  %4236 = vmatpush1.msra.mxu0 0.0
  %4237 = vmatprep.subr.mxu0 0.0
  %4238 = vmatpush1.msra.mxu0 0.0
  %4239 = vmatprep.subr.mxu0 0.0
  %4240 = vmatpush1.msra.mxu0 0.0
  %4241 = vmatprep.subr.mxu0 0.0
  %4242 = vmatpush1.msra.mxu0 0.0
  %4243 = vmatprep.subr.mxu0 0.0
  %4244 = vmatpush1.msra.mxu0 %v133
  %4245 = vmatprep.subr.mxu0 0.0
  %4246 = vmatpush1.msra.mxu0 %v132
  %4247 = vmatprep.subr.mxu0 0.0
  %4248 = vmatpush2.msra.mxu0 0.0
  %4249 = vmatprep.subr.mxu0 0.0
  %4250 = vmatpush2.msra.mxu0 0.0
  %4251 = vmatprep.subr.mxu0 0.0
  %4252 = vmatpush2.msra.mxu0 0.0
  %4253 = vmatprep.subr.mxu0 0.0
  %4254 = vmatpush2.msra.mxu0 0.0
  %4255 = vmatprep.subr.mxu0 0.0
  %4256 = vmatpush2.msra.mxu0 0.0
  %4257 = vmatprep.subr.mxu0 0.0
  %4258 = vmatpush2.msra.mxu0 0.0
  %4259 = vmatprep.subr.mxu0 0.0
  %4260 = vmatpush2.msra.mxu0 0.0
  %4261 = vmatprep.subr.mxu0 0.0
  %4262 = vmatpush2.msra.mxu0 0.0
  %4263 = vmatprep.subr.mxu0 0.0
  %4264 = vmatpush2.msra.mxu0 0.0
  %4265 = vmatprep.subr.mxu0 0.0
  %4266 = vmatpush2.msra.mxu0 0.0
  %4267 = vmatprep.subr.mxu0 0.0
  %4268 = vmatpush2.msra.mxu0 0.0
  %4269 = vmatprep.subr.mxu0 0.0
  %4270 = vmatpush2.msra.mxu0 0.0
  %4271 = vmatprep.subr.mxu0 0.0
  %4272 = vmatpush2.msra.mxu0 0.0
  %4273 = vmatprep.subr.mxu0 0.0
  %4274 = vmatpush2.msra.mxu0 0.0
  %4275 = vmatprep.subr.mxu0 0.0
  %4276 = vmatpush2.msra.mxu0 0.0
  %4277 = vmatprep.subr.mxu0 0.0
  %4278 = vmatpush2.msra.mxu0 0.0
  %4279 = vmatprep.mubr.f32.mxu0 0.0
  %4280 = vmatmul.mubr.f32.gmra.mxu0 %v4213
  %v4281 = vpop.f32.mrf.mxu0
  %v4282 = vadd.f32 0.0, %v4281
  %v4283 = vpop.f32.mrf.mxu0
  %4284 = vdwg.mxu0
  %v4285 = vadd.f32 %v4210, %v4282
  %v4286 = vadd.f32 %v4285, %v2615
  %v4287 = vxor.u32 %v4286, 2147483648
  %v4288 = vmul.f32 %v4287, 1.442695
  %v4289 = vpow.pop %v4288
  %v4290 = vadd.f32 %v4289, 1.0
  %v4291 = vrcp.pop %v4290
  %v4292 = vmul.f32 1.0, %v4291
  %v4293 = vtanh.pop %v4286
  %v4294 = vmul.f32 %v4292, %v3887
  %4296 = vrot.lane.b32.xlu0 %v4293, 96
  %v4297 = vpop.permute.xlu0 %4296
  %v4299 = vmul.f32 %v4292, %v4297
  %4301 = vrot.lane.b32.xlu0 %v4299, 16
  %v4302 = vpop.permute.xlu0 %4301
  %v4304 = vadd.f32 %v4294, %v4302
  %v4305 = vtanh.pop %v4304
  %4307 = vrot.lane.b32.xlu0 %v4305, 32
  %v4308 = vpop.permute.xlu0 %4307
  %v4310 = vmul.f32 %v4292, %v4308
  %4312 = vrot.lane.b32.xlu0 %v4310, 80
  %v4313 = vpop.permute.xlu0 %4312
  %v4315 = vsel %vm503, %v4313, %v4304
  %4316 = vrot.lane.b32.xlu0 %v2205, 48
  %v4317 = vpop.permute.xlu0 %4316
  %v4320 = vsel %vm225, %v4315, 0
  %4322 = vmatprep.subr.mxu0 0.0
  %4323 = vmatpush1.msra.mxu0 0.0
  %4324 = vmatprep.subr.mxu0 0.0
  %4325 = vmatpush1.msra.mxu0 0.0
  %4326 = vmatprep.subr.mxu0 0.0
  %4327 = vmatpush1.msra.mxu0 0.0
  %4328 = vmatprep.subr.mxu0 0.0
  %4329 = vmatpush1.msra.mxu0 0.0
  %4330 = vmatprep.subr.mxu0 0.0
  %4331 = vmatpush1.msra.mxu0 0.0
  %4332 = vmatprep.subr.mxu0 0.0
  %4333 = vmatpush1.msra.mxu0 0.0
  %4334 = vmatprep.subr.mxu0 0.0
  %4335 = vmatpush1.msra.mxu0 0.0
  %4336 = vmatprep.subr.mxu0 0.0
  %4337 = vmatpush1.msra.mxu0 0.0
  %4338 = vmatprep.subr.mxu0 0.0
  %4339 = vmatpush1.msra.mxu0 0.0
  %4340 = vmatprep.subr.mxu0 0.0
  %4341 = vmatpush1.msra.mxu0 0.0
  %4342 = vmatprep.subr.mxu0 0.0
  %4343 = vmatpush1.msra.mxu0 0.0
  %4344 = vmatprep.subr.mxu0 0.0
  %4345 = vmatpush1.msra.mxu0 0.0
  %4346 = vmatprep.subr.mxu0 0.0
  %4347 = vmatpush1.msra.mxu0 %v96
  %4348 = vmatprep.subr.mxu0 0.0
  %4349 = vmatpush1.msra.mxu0 %v95
  %4350 = vmatprep.subr.mxu0 0.0
  %4351 = vmatpush1.msra.mxu0 %v94
  %4352 = vmatprep.subr.mxu0 0.0
  %4353 = vmatpush1.msra.mxu0 %v93
  %4354 = vmatprep.subr.mxu0 0.0
  %4355 = vmatpush2.msra.mxu0 0.0
  %4356 = vmatprep.subr.mxu0 0.0
  %4357 = vmatpush2.msra.mxu0 0.0
  %4358 = vmatprep.subr.mxu0 0.0
  %4359 = vmatpush2.msra.mxu0 0.0
  %4360 = vmatprep.subr.mxu0 0.0
  %4361 = vmatpush2.msra.mxu0 0.0
  %4362 = vmatprep.subr.mxu0 0.0
  %4363 = vmatpush2.msra.mxu0 0.0
  %4364 = vmatprep.subr.mxu0 0.0
  %4365 = vmatpush2.msra.mxu0 0.0
  %4366 = vmatprep.subr.mxu0 0.0
  %4367 = vmatpush2.msra.mxu0 0.0
  %4368 = vmatprep.subr.mxu0 0.0
  %4369 = vmatpush2.msra.mxu0 0.0
  %4370 = vmatprep.subr.mxu0 0.0
  %4371 = vmatpush2.msra.mxu0 0.0
  %4372 = vmatprep.subr.mxu0 0.0
  %4373 = vmatpush2.msra.mxu0 0.0
  %4374 = vmatprep.subr.mxu0 0.0
  %4375 = vmatpush2.msra.mxu0 0.0
  %4376 = vmatprep.subr.mxu0 0.0
  %4377 = vmatpush2.msra.mxu0 0.0
  %4378 = vmatprep.subr.mxu0 0.0
  %4379 = vmatpush2.msra.mxu0 0.0
  %4380 = vmatprep.subr.mxu0 0.0
  %4381 = vmatpush2.msra.mxu0 0.0
  %4382 = vmatprep.subr.mxu0 0.0
  %4383 = vmatpush2.msra.mxu0 0.0
  %4384 = vmatprep.subr.mxu0 0.0
  %4385 = vmatpush2.msra.mxu0 0.0
  %4386 = vmatprep.mubr.f32.mxu0 0.0
  %4387 = vmatmul.mubr.f32.gmra.mxu0 %v4320
  %v4388 = vpop.f32.mrf.mxu0
  %v4389 = vadd.f32 %v4317, %v4388
  %v4390 = vpop.f32.mrf.mxu0
  %4391 = vdwg.mxu0
  %v4392 = vadd.f32 %v4389, %v2282
  %v4393 = vtanh.pop %v4392
  %v4395 = vsel %vm503, %v4393, 0
  %4397 = vmatprep.subr.mxu0 0.0
  %4398 = vmatpush1.msra.mxu0 0.0
  %4399 = vmatprep.subr.mxu0 0.0
  %4400 = vmatpush1.msra.mxu0 0.0
  %4401 = vmatprep.subr.mxu0 0.0
  %4402 = vmatpush1.msra.mxu0 0.0
  %4403 = vmatprep.subr.mxu0 0.0
  %4404 = vmatpush1.msra.mxu0 0.0
  %4405 = vmatprep.subr.mxu0 0.0
  %4406 = vmatpush1.msra.mxu0 0.0
  %4407 = vmatprep.subr.mxu0 0.0
  %4408 = vmatpush1.msra.mxu0 0.0
  %4409 = vmatprep.subr.mxu0 0.0
  %4410 = vmatpush1.msra.mxu0 0.0
  %4411 = vmatprep.subr.mxu0 0.0
  %4412 = vmatpush1.msra.mxu0 0.0
  %4413 = vmatprep.subr.mxu0 0.0
  %4414 = vmatpush1.msra.mxu0 0.0
  %4415 = vmatprep.subr.mxu0 0.0
  %4416 = vmatpush1.msra.mxu0 0.0
  %4417 = vmatprep.subr.mxu0 0.0
  %4418 = vmatpush1.msra.mxu0 0.0
  %4419 = vmatprep.subr.mxu0 0.0
  %4420 = vmatpush1.msra.mxu0 0.0
  %4421 = vmatprep.subr.mxu0 0.0
  %4422 = vmatpush1.msra.mxu0 0.0
  %4423 = vmatprep.subr.mxu0 0.0
  %4424 = vmatpush1.msra.mxu0 0.0
  %4425 = vmatprep.subr.mxu0 0.0
  %4426 = vmatpush1.msra.mxu0 %v113
  %4427 = vmatprep.subr.mxu0 0.0
  %4428 = vmatpush1.msra.mxu0 %v112
  %4429 = vmatprep.subr.mxu0 0.0
  %4430 = vmatpush2.msra.mxu0 0.0
  %4431 = vmatprep.subr.mxu0 0.0
  %4432 = vmatpush2.msra.mxu0 0.0
  %4433 = vmatprep.subr.mxu0 0.0
  %4434 = vmatpush2.msra.mxu0 0.0
  %4435 = vmatprep.subr.mxu0 0.0
  %4436 = vmatpush2.msra.mxu0 0.0
  %4437 = vmatprep.subr.mxu0 0.0
  %4438 = vmatpush2.msra.mxu0 0.0
  %4439 = vmatprep.subr.mxu0 0.0
  %4440 = vmatpush2.msra.mxu0 0.0
  %4441 = vmatprep.subr.mxu0 0.0
  %4442 = vmatpush2.msra.mxu0 0.0
  %4443 = vmatprep.subr.mxu0 0.0
  %4444 = vmatpush2.msra.mxu0 0.0
  %4445 = vmatprep.subr.mxu0 0.0
  %4446 = vmatpush2.msra.mxu0 0.0
  %4447 = vmatprep.subr.mxu0 0.0
  %4448 = vmatpush2.msra.mxu0 0.0
  %4449 = vmatprep.subr.mxu0 0.0
  %4450 = vmatpush2.msra.mxu0 0.0
  %4451 = vmatprep.subr.mxu0 0.0
  %4452 = vmatpush2.msra.mxu0 0.0
  %4453 = vmatprep.subr.mxu0 0.0
  %4454 = vmatpush2.msra.mxu0 0.0
  %4455 = vmatprep.subr.mxu0 0.0
  %4456 = vmatpush2.msra.mxu0 0.0
  %4457 = vmatprep.subr.mxu0 0.0
  %4458 = vmatpush2.msra.mxu0 0.0
  %4459 = vmatprep.subr.mxu0 0.0
  %4460 = vmatpush2.msra.mxu0 0.0
  %4461 = vmatprep.mubr.f32.mxu0 0.0
  %4462 = vmatmul.mubr.f32.gmra.mxu0 %v4395
  %v4463 = vpop.f32.mrf.mxu0
  %v4464 = vadd.f32 %v2290, %v4463
  %v4465 = vpop.f32.mrf.mxu0
  %4466 = vdwg.mxu0
  %v4467 = vsel %vm314, %v4464, -inf
  %4468 = vmax.xlane.f32.xlu0 %v4467
  %v4469 = vpop.xlane.xlu0 %4468
  %v4470 = vsub.f32 %v4464, %v4469
  %v4471 = vmul.f32 %v4470, 1.442695
  %v4472 = vpow.pop %v4471
  %v4473 = vsel %vm314, %v4472, 0.0
  %4474 = vadd.xlane.f32.xlu0 %v4473
  %v4475 = vpop.xlane.xlu0 %4474
  %v4476 = vrcp.pop %v4475
  %v4477 = vmul.f32 %v4472, %v4476
  %v4479 = vsel %vm314, %v4477, 0
  %4481 = vmatprep.subr.mxu0 0.0
  %4482 = vmatpush1.msra.mxu0 0.0
  %4483 = vmatprep.subr.mxu0 0.0
  %4484 = vmatpush1.msra.mxu0 0.0
  %4485 = vmatprep.subr.mxu0 0.0
  %4486 = vmatpush1.msra.mxu0 0.0
  %4487 = vmatprep.subr.mxu0 0.0
  %4488 = vmatpush1.msra.mxu0 0.0
  %4489 = vmatprep.subr.mxu0 0.0
  %4490 = vmatpush1.msra.mxu0 0.0
  %4491 = vmatprep.subr.mxu0 0.0
  %4492 = vmatpush1.msra.mxu0 0.0
  %4493 = vmatprep.subr.mxu0 0.0
  %4494 = vmatpush1.msra.mxu0 0.0
  %4495 = vmatprep.subr.mxu0 0.0
  %4496 = vmatpush1.msra.mxu0 0.0
  %4497 = vmatprep.subr.mxu0 0.0
  %4498 = vmatpush1.msra.mxu0 0.0
  %4499 = vmatprep.subr.mxu0 0.0
  %4500 = vmatpush1.msra.mxu0 0.0
  %4501 = vmatprep.subr.mxu0 0.0
  %4502 = vmatpush1.msra.mxu0 0.0
  %4503 = vmatprep.subr.mxu0 0.0
  %4504 = vmatpush1.msra.mxu0 0.0
  %4505 = vmatprep.subr.mxu0 0.0
  %4506 = vmatpush1.msra.mxu0 0.0
  %4507 = vmatprep.subr.mxu0 0.0
  %4508 = vmatpush1.msra.mxu0 0.0
  %4509 = vmatprep.subr.mxu0 0.0
  %4510 = vmatpush1.msra.mxu0 0.0
  %4511 = vmatprep.subr.mxu0 0.0
  %4512 = vmatpush1.msra.mxu0 %v2380
  %4513 = vmatprep.subr.mxu0 0.0
  %4514 = vmatpush2.msra.mxu0 0.0
  %4515 = vmatprep.subr.mxu0 0.0
  %4516 = vmatpush2.msra.mxu0 0.0
  %4517 = vmatprep.subr.mxu0 0.0
  %4518 = vmatpush2.msra.mxu0 0.0
  %4519 = vmatprep.subr.mxu0 0.0
  %4520 = vmatpush2.msra.mxu0 0.0
  %4521 = vmatprep.subr.mxu0 0.0
  %4522 = vmatpush2.msra.mxu0 0.0
  %4523 = vmatprep.subr.mxu0 0.0
  %4524 = vmatpush2.msra.mxu0 0.0
  %4525 = vmatprep.subr.mxu0 0.0
  %4526 = vmatpush2.msra.mxu0 0.0
  %4527 = vmatprep.subr.mxu0 0.0
  %4528 = vmatpush2.msra.mxu0 0.0
  %4529 = vmatprep.subr.mxu0 0.0
  %4530 = vmatpush2.msra.mxu0 0.0
  %4531 = vmatprep.subr.mxu0 0.0
  %4532 = vmatpush2.msra.mxu0 0.0
  %4533 = vmatprep.subr.mxu0 0.0
  %4534 = vmatpush2.msra.mxu0 0.0
  %4535 = vmatprep.subr.mxu0 0.0
  %4536 = vmatpush2.msra.mxu0 0.0
  %4537 = vmatprep.subr.mxu0 0.0
  %4538 = vmatpush2.msra.mxu0 0.0
  %4539 = vmatprep.subr.mxu0 0.0
  %4540 = vmatpush2.msra.mxu0 0.0
  %4541 = vmatprep.subr.mxu0 0.0
  %4542 = vmatpush2.msra.mxu0 0.0
  %4543 = vmatprep.subr.mxu0 0.0
  %4544 = vmatpush2.msra.mxu0 0.0
  %4545 = vmatprep.mubr.f32.mxu0 0.0
  %4546 = vmatmul.mubr.f32.gmra.mxu0 %v4479
  %v4547 = vpop.f32.mrf.mxu0
  %v4548 = vadd.f32 0.0, %v4547
  %v4549 = vpop.f32.mrf.mxu0
  %4550 = vdwg.mxu0
  %v4551 = vmul.f32 %v4548, %v2133
  %4552 = vset.pattern.permute.xlu0 5
  %4553 = vperm.xlu0 %4552, %v74
  %v4554 = vpop.permute.xlu0 %4553
  %v4556 = vmul.f32 %v4554, %v2462
  %v4558 = vsel %vm2134, %v4551, 0
  %4560 = vmatprep.subr.mxu0 0.0
  %4561 = vmatpush1.msra.mxu0 0.0
  %4562 = vmatprep.subr.mxu0 0.0
  %4563 = vmatpush1.msra.mxu0 0.0
  %4564 = vmatprep.subr.mxu0 0.0
  %4565 = vmatpush1.msra.mxu0 %v129
  %4566 = vmatprep.subr.mxu0 0.0
  %4567 = vmatpush1.msra.mxu0 %v128
  %4568 = vmatprep.subr.mxu0 0.0
  %4569 = vmatpush1.msra.mxu0 %v127
  %4570 = vmatprep.subr.mxu0 0.0
  %4571 = vmatpush1.msra.mxu0 %v126
  %4572 = vmatprep.subr.mxu0 0.0
  %4573 = vmatpush1.msra.mxu0 %v125
  %4574 = vmatprep.subr.mxu0 0.0
  %4575 = vmatpush1.msra.mxu0 %v124
  %4576 = vmatprep.subr.mxu0 0.0
  %4577 = vmatpush1.msra.mxu0 %v123
  %4578 = vmatprep.subr.mxu0 0.0
  %4579 = vmatpush1.msra.mxu0 %v122
  %4580 = vmatprep.subr.mxu0 0.0
  %4581 = vmatpush1.msra.mxu0 %v121
  %4582 = vmatprep.subr.mxu0 0.0
  %4583 = vmatpush1.msra.mxu0 %v120
  %4584 = vmatprep.subr.mxu0 0.0
  %4585 = vmatpush1.msra.mxu0 %v119
  %4586 = vmatprep.subr.mxu0 0.0
  %4587 = vmatpush1.msra.mxu0 %v118
  %4588 = vmatprep.subr.mxu0 0.0
  %4589 = vmatpush1.msra.mxu0 %v117
  %4590 = vmatprep.subr.mxu0 0.0
  %4591 = vmatpush1.msra.mxu0 %v116
  %4592 = vmatprep.subr.mxu0 0.0
  %4593 = vmatpush2.msra.mxu0 0.0
  %4594 = vmatprep.subr.mxu0 0.0
  %4595 = vmatpush2.msra.mxu0 0.0
  %4596 = vmatprep.subr.mxu0 0.0
  %4597 = vmatpush2.msra.mxu0 0.0
  %4598 = vmatprep.subr.mxu0 0.0
  %4599 = vmatpush2.msra.mxu0 0.0
  %4600 = vmatprep.subr.mxu0 0.0
  %4601 = vmatpush2.msra.mxu0 0.0
  %4602 = vmatprep.subr.mxu0 0.0
  %4603 = vmatpush2.msra.mxu0 0.0
  %4604 = vmatprep.subr.mxu0 0.0
  %4605 = vmatpush2.msra.mxu0 0.0
  %4606 = vmatprep.subr.mxu0 0.0
  %4607 = vmatpush2.msra.mxu0 0.0
  %4608 = vmatprep.subr.mxu0 0.0
  %4609 = vmatpush2.msra.mxu0 0.0
  %4610 = vmatprep.subr.mxu0 0.0
  %4611 = vmatpush2.msra.mxu0 0.0
  %4612 = vmatprep.subr.mxu0 0.0
  %4613 = vmatpush2.msra.mxu0 0.0
  %4614 = vmatprep.subr.mxu0 0.0
  %4615 = vmatpush2.msra.mxu0 0.0
  %4616 = vmatprep.subr.mxu0 0.0
  %4617 = vmatpush2.msra.mxu0 0.0
  %4618 = vmatprep.subr.mxu0 0.0
  %4619 = vmatpush2.msra.mxu0 0.0
  %4620 = vmatprep.subr.mxu0 0.0
  %4621 = vmatpush2.msra.mxu0 0.0
  %4622 = vmatprep.subr.mxu0 0.0
  %4623 = vmatpush2.msra.mxu0 0.0
  %4624 = vmatprep.mubr.f32.mxu0 0.0
  %4625 = vmatmul.mubr.f32.gmra.mxu0 %v4558
  %v4626 = vpop.f32.mrf.mxu0
  %v4627 = vadd.f32 %v4556, %v4626
  %v4628 = vpop.f32.mrf.mxu0
  %4629 = vdwg.mxu0
  %v4630 = vsel %vm503, %v4313, 0
  %4632 = vmatprep.subr.mxu0 0.0
  %4633 = vmatpush1.msra.mxu0 0.0
  %4634 = vmatprep.subr.mxu0 0.0
  %4635 = vmatpush1.msra.mxu0 0.0
  %4636 = vmatprep.subr.mxu0 0.0
  %4637 = vmatpush1.msra.mxu0 0.0
  %4638 = vmatprep.subr.mxu0 0.0
  %4639 = vmatpush1.msra.mxu0 0.0
  %4640 = vmatprep.subr.mxu0 0.0
  %4641 = vmatpush1.msra.mxu0 0.0
  %4642 = vmatprep.subr.mxu0 0.0
  %4643 = vmatpush1.msra.mxu0 0.0
  %4644 = vmatprep.subr.mxu0 0.0
  %4645 = vmatpush1.msra.mxu0 0.0
  %4646 = vmatprep.subr.mxu0 0.0
  %4647 = vmatpush1.msra.mxu0 0.0
  %4648 = vmatprep.subr.mxu0 0.0
  %4649 = vmatpush1.msra.mxu0 0.0
  %4650 = vmatprep.subr.mxu0 0.0
  %4651 = vmatpush1.msra.mxu0 0.0
  %4652 = vmatprep.subr.mxu0 0.0
  %4653 = vmatpush1.msra.mxu0 0.0
  %4654 = vmatprep.subr.mxu0 0.0
  %4655 = vmatpush1.msra.mxu0 0.0
  %4656 = vmatprep.subr.mxu0 0.0
  %4657 = vmatpush1.msra.mxu0 0.0
  %4658 = vmatprep.subr.mxu0 0.0
  %4659 = vmatpush1.msra.mxu0 0.0
  %4660 = vmatprep.subr.mxu0 0.0
  %4661 = vmatpush1.msra.mxu0 %v133
  %4662 = vmatprep.subr.mxu0 0.0
  %4663 = vmatpush1.msra.mxu0 %v132
  %4664 = vmatprep.subr.mxu0 0.0
  %4665 = vmatpush2.msra.mxu0 0.0
  %4666 = vmatprep.subr.mxu0 0.0
  %4667 = vmatpush2.msra.mxu0 0.0
  %4668 = vmatprep.subr.mxu0 0.0
  %4669 = vmatpush2.msra.mxu0 0.0
  %4670 = vmatprep.subr.mxu0 0.0
  %4671 = vmatpush2.msra.mxu0 0.0
  %4672 = vmatprep.subr.mxu0 0.0
  %4673 = vmatpush2.msra.mxu0 0.0
  %4674 = vmatprep.subr.mxu0 0.0
  %4675 = vmatpush2.msra.mxu0 0.0
  %4676 = vmatprep.subr.mxu0 0.0
  %4677 = vmatpush2.msra.mxu0 0.0
  %4678 = vmatprep.subr.mxu0 0.0
  %4679 = vmatpush2.msra.mxu0 0.0
  %4680 = vmatprep.subr.mxu0 0.0
  %4681 = vmatpush2.msra.mxu0 0.0
  %4682 = vmatprep.subr.mxu0 0.0
  %4683 = vmatpush2.msra.mxu0 0.0
  %4684 = vmatprep.subr.mxu0 0.0
  %4685 = vmatpush2.msra.mxu0 0.0
  %4686 = vmatprep.subr.mxu0 0.0
  %4687 = vmatpush2.msra.mxu0 0.0
  %4688 = vmatprep.subr.mxu0 0.0
  %4689 = vmatpush2.msra.mxu0 0.0
  %4690 = vmatprep.subr.mxu0 0.0
  %4691 = vmatpush2.msra.mxu0 0.0
  %4692 = vmatprep.subr.mxu0 0.0
  %4693 = vmatpush2.msra.mxu0 0.0
  %4694 = vmatprep.subr.mxu0 0.0
  %4695 = vmatpush2.msra.mxu0 0.0
  %4696 = vmatprep.mubr.f32.mxu0 0.0
  %4697 = vmatmul.mubr.f32.gmra.mxu0 %v4630
  %v4698 = vpop.f32.mrf.mxu0
  %v4699 = vadd.f32 0.0, %v4698
  %v4700 = vpop.f32.mrf.mxu0
  %4701 = vdwg.mxu0
  %v4702 = vadd.f32 %v4627, %v4699
  %v4703 = vadd.f32 %v4702, %v2615
  %v4704 = vxor.u32 %v4703, 2147483648
  %v4705 = vmul.f32 %v4704, 1.442695
  %v4706 = vpow.pop %v4705
  %v4707 = vadd.f32 %v4706, 1.0
  %v4708 = vrcp.pop %v4707
  %v4709 = vmul.f32 1.0, %v4708
  %v4710 = vtanh.pop %v4703
  %v4711 = vmul.f32 %v4709, %v4304
  %4713 = vrot.lane.b32.xlu0 %v4710, 96
  %v4714 = vpop.permute.xlu0 %4713
  %v4716 = vmul.f32 %v4709, %v4714
  %4718 = vrot.lane.b32.xlu0 %v4716, 16
  %v4719 = vpop.permute.xlu0 %4718
  %v4721 = vadd.f32 %v4711, %v4719
  %v4722 = vtanh.pop %v4721
  %4724 = vrot.lane.b32.xlu0 %v4722, 32
  %v4725 = vpop.permute.xlu0 %4724
  %v4727 = vmul.f32 %v4709, %v4725
  %4728 = vmatprep.subr.mxu0 0.0
  %4729 = vmatpush1.msra.mxu0 0.0
  %4730 = vmatprep.subr.mxu0 0.0
  %4731 = vmatpush1.msra.mxu0 0.0
  %4732 = vmatprep.subr.mxu0 0.0
  %4733 = vmatpush1.msra.mxu0 %v149
  %4734 = vmatprep.subr.mxu0 0.0
  %4735 = vmatpush1.msra.mxu0 %v148
  %4736 = vmatprep.subr.mxu0 0.0
  %4737 = vmatpush1.msra.mxu0 %v147
  %4738 = vmatprep.subr.mxu0 0.0
  %4739 = vmatpush1.msra.mxu0 %v146
  %4740 = vmatprep.subr.mxu0 0.0
  %4741 = vmatpush1.msra.mxu0 %v145
  %4742 = vmatprep.subr.mxu0 0.0
  %4743 = vmatpush1.msra.mxu0 %v144
  %4744 = vmatprep.subr.mxu0 0.0
  %4745 = vmatpush1.msra.mxu0 %v143
  %4746 = vmatprep.subr.mxu0 0.0
  %4747 = vmatpush1.msra.mxu0 %v142
  %4748 = vmatprep.subr.mxu0 0.0
  %4749 = vmatpush1.msra.mxu0 %v141
  %4750 = vmatprep.subr.mxu0 0.0
  %4751 = vmatpush1.msra.mxu0 %v140
  %4752 = vmatprep.subr.mxu0 0.0
  %4753 = vmatpush1.msra.mxu0 %v139
  %4754 = vmatprep.subr.mxu0 0.0
  %4755 = vmatpush1.msra.mxu0 %v138
  %4756 = vmatprep.subr.mxu0 0.0
  %4757 = vmatpush1.msra.mxu0 %v137
  %4758 = vmatprep.subr.mxu0 0.0
  %4759 = vmatpush1.msra.mxu0 %v136
  %4760 = vmatprep.subr.mxu0 0.0
  %4761 = vmatpush2.msra.mxu0 0.0
  %4762 = vmatprep.subr.mxu0 0.0
  %4763 = vmatpush2.msra.mxu0 0.0
  %4764 = vmatprep.subr.mxu0 0.0
  %4765 = vmatpush2.msra.mxu0 0.0
  %4766 = vmatprep.subr.mxu0 0.0
  %4767 = vmatpush2.msra.mxu0 0.0
  %4768 = vmatprep.subr.mxu0 0.0
  %4769 = vmatpush2.msra.mxu0 0.0
  %4770 = vmatprep.subr.mxu0 0.0
  %4771 = vmatpush2.msra.mxu0 0.0
  %4772 = vmatprep.subr.mxu0 0.0
  %4773 = vmatpush2.msra.mxu0 0.0
  %4774 = vmatprep.subr.mxu0 0.0
  %4775 = vmatpush2.msra.mxu0 0.0
  %4776 = vmatprep.subr.mxu0 0.0
  %4777 = vmatpush2.msra.mxu0 0.0
  %4778 = vmatprep.subr.mxu0 0.0
  %4779 = vmatpush2.msra.mxu0 0.0
  %4780 = vmatprep.subr.mxu0 0.0
  %4781 = vmatpush2.msra.mxu0 0.0
  %4782 = vmatprep.subr.mxu0 0.0
  %4783 = vmatpush2.msra.mxu0 0.0
  %4784 = vmatprep.subr.mxu0 0.0
  %4785 = vmatpush2.msra.mxu0 0.0
  %4786 = vmatprep.subr.mxu0 0.0
  %4787 = vmatpush2.msra.mxu0 0.0
  %4788 = vmatprep.subr.mxu0 0.0
  %4789 = vmatpush2.msra.mxu0 0.0
  %4790 = vmatprep.subr.mxu0 0.0
  %4791 = vmatpush2.msra.mxu0 0.0
  %4792 = vmatprep.mubr.f32.mxu0 0.0
  %4793 = vmatmul.mubr.f32.gmra.mxu0 %v4558
  %v4794 = vpop.f32.mrf.mxu0
  %v4795 = vadd.f32 0.0, %v4794
  %v4796 = vpop.f32.mrf.mxu0
  %4797 = vdwg.mxu0
  %4799 = vrot.lane.b32.xlu0 %v4727, 80
  %v4800 = vpop.permute.xlu0 %4799
  %v4801 = vsel %vm503, %v4800, 0
  %4803 = vmatprep.subr.mxu0 0.0
  %4804 = vmatpush1.msra.mxu0 0.0
  %4805 = vmatprep.subr.mxu0 0.0
  %4806 = vmatpush1.msra.mxu0 0.0
  %4807 = vmatprep.subr.mxu0 0.0
  %4808 = vmatpush1.msra.mxu0 0.0
  %4809 = vmatprep.subr.mxu0 0.0
  %4810 = vmatpush1.msra.mxu0 0.0
  %4811 = vmatprep.subr.mxu0 0.0
  %4812 = vmatpush1.msra.mxu0 0.0
  %4813 = vmatprep.subr.mxu0 0.0
  %4814 = vmatpush1.msra.mxu0 0.0
  %4815 = vmatprep.subr.mxu0 0.0
  %4816 = vmatpush1.msra.mxu0 0.0
  %4817 = vmatprep.subr.mxu0 0.0
  %4818 = vmatpush1.msra.mxu0 0.0
  %4819 = vmatprep.subr.mxu0 0.0
  %4820 = vmatpush1.msra.mxu0 0.0
  %4821 = vmatprep.subr.mxu0 0.0
  %4822 = vmatpush1.msra.mxu0 0.0
  %4823 = vmatprep.subr.mxu0 0.0
  %4824 = vmatpush1.msra.mxu0 0.0
  %4825 = vmatprep.subr.mxu0 0.0
  %4826 = vmatpush1.msra.mxu0 0.0
  %4827 = vmatprep.subr.mxu0 0.0
  %4828 = vmatpush1.msra.mxu0 0.0
  %4829 = vmatprep.subr.mxu0 0.0
  %4830 = vmatpush1.msra.mxu0 0.0
  %4831 = vmatprep.subr.mxu0 0.0
  %4832 = vmatpush1.msra.mxu0 %v135
  %4833 = vmatprep.subr.mxu0 0.0
  %4834 = vmatpush1.msra.mxu0 %v134
  %4835 = vmatprep.subr.mxu0 0.0
  %4836 = vmatpush2.msra.mxu0 0.0
  %4837 = vmatprep.subr.mxu0 0.0
  %4838 = vmatpush2.msra.mxu0 0.0
  %4839 = vmatprep.subr.mxu0 0.0
  %4840 = vmatpush2.msra.mxu0 0.0
  %4841 = vmatprep.subr.mxu0 0.0
  %4842 = vmatpush2.msra.mxu0 0.0
  %4843 = vmatprep.subr.mxu0 0.0
  %4844 = vmatpush2.msra.mxu0 0.0
  %4845 = vmatprep.subr.mxu0 0.0
  %4846 = vmatpush2.msra.mxu0 0.0
  %4847 = vmatprep.subr.mxu0 0.0
  %4848 = vmatpush2.msra.mxu0 0.0
  %4849 = vmatprep.subr.mxu0 0.0
  %4850 = vmatpush2.msra.mxu0 0.0
  %4851 = vmatprep.subr.mxu0 0.0
  %4852 = vmatpush2.msra.mxu0 0.0
  %4853 = vmatprep.subr.mxu0 0.0
  %4854 = vmatpush2.msra.mxu0 0.0
  %4855 = vmatprep.subr.mxu0 0.0
  %4856 = vmatpush2.msra.mxu0 0.0
  %4857 = vmatprep.subr.mxu0 0.0
  %4858 = vmatpush2.msra.mxu0 0.0
  %4859 = vmatprep.subr.mxu0 0.0
  %4860 = vmatpush2.msra.mxu0 0.0
  %4861 = vmatprep.subr.mxu0 0.0
  %4862 = vmatpush2.msra.mxu0 0.0
  %4863 = vmatprep.subr.mxu0 0.0
  %4864 = vmatpush2.msra.mxu0 0.0
  %4865 = vmatprep.subr.mxu0 0.0
  %4866 = vmatpush2.msra.mxu0 0.0
  %4867 = vmatprep.mubr.f32.mxu0 0.0
  %4868 = vmatmul.mubr.f32.gmra.mxu0 %v4801
  %v4869 = vpop.f32.mrf.mxu0
  %v4870 = vadd.f32 %v4795, %v4869
  %v4871 = vpop.f32.mrf.mxu0
  %4872 = vdwg.mxu0
  %v4874 = vlaneseq
  %v4875 = vshrl.u32 %v4874, 7
  %v4876 = vsub.s32 0, %v4875
  %v4877 = vrot.slane %v150, %v4876
  %v4879 = vadd.f32 %v4870, %v4877
  %vm4880 = vcmask 7168
  %4881 = vst.msk [vmem:[%s22] sm:$0xff] %vm4880, %v4879
  // Predicated region
  $region90: #{tpu_custom_call.1} parent=0 // pred_check
    _
  $region91: #{tpu_custom_call.1} parent=0 // pred_check_branch
    %4883 = sbr.rel (0) target = $region93
  $region92: #{tpu_custom_call.1} parent=0 // pred_region
    _
  $region93: #{tpu_custom_call.1} parent=0 // pred_fallthru
    _
  // Predicated region
  $region94: #{tpu_custom_call.1} parent=0 // pred_check
    _
  $region95: #{tpu_custom_call.1} parent=0 // pred_check_branch
    %4885 = sbr.rel (0) target = $region97
  $region96: #{tpu_custom_call.1} parent=0 // pred_region
    _
  $region97: #{tpu_custom_call.1} parent=0 // pred_fallthru
    _

</llo_original>
